<compile_context>
chip_gen: v7x
topology: tpu7x:2x2x1
jax: 0.10.0
libtpu: 0.0.40
codegen_flags: <defaults>
</compile_context>

<pallas_src>
import functools

import jax
import jax.numpy as jnp
from jax.experimental import pallas as pl
from jax.experimental.pallas import tpu as pltpu


def _round_up(x, m):
    return ((x + m - 1) // m) * m


def _vmem_limit_bytes(tt, d, k, use_bf16):
    """Rough VMEM budget: double-buffered I/O windows + codebook copies + temporaries."""
    f32 = 4
    lanes_k = max(128, _round_up(k, 128))
    tt8 = _round_up(tt, 8)
    ttl = _round_up(tt, 128)
    io = 2 * (tt8 * d + d * ttl + ttl + 128) * f32                 # x, q^T, idx, sse windows
    consts = d * lanes_k * ((2 if use_bf16 else 4) + 4) + 8 * lanes_k * f32
    work = 4 * tt8 * lanes_k * f32 + 4 * tt8 * max(d, 8) * f32     # [tt,K] + [tt,D]/[D,tt] temps
    est = int((io + consts + work) * 1.5) + (4 << 20)
    return max(16 << 20, min(est, 48 << 20))


def _vq_kernel(x_ref, emm_ref, ef32_ref, esqh_ref, q_ref, idx_ref, sse_ref, *, t_valid):
    # x_ref:    [1, tt, D]  one batch element's block of time steps (f32)
    # emm_ref:  [D, K]      codebook^T for the distance matmul (bf16 or f32)
    # ef32_ref: [D, K]      exact f32 codebook^T for the gather / SSE
    # esqh_ref: [1, K]      0.5 * ||e||^2 (f32)
    x = x_ref[0]                                   # [tt, D] f32
    e_mm = emm_ref[...]                            # [D, K]
    e_f32 = ef32_ref[...]                          # [D, K] f32
    e_sq_half = esqh_ref[...]                      # [1, K] f32
    tt, d = x.shape
    k = e_mm.shape[1]

    # score = 0.5*||e||^2 - x·e  ==>  argmin_k score == argmin_k ||x - e_k||^2
    xe = jnp.dot(x.astype(e_mm.dtype), e_mm,
                 preferred_element_type=jnp.float32)               # [tt, K]  (MXU)
    score = e_sq_half - xe                                         # [tt, K]

    # argmin over the codebook axis with first-occurrence tie-break
    iota_k = jax.lax.broadcasted_iota(jnp.int32, (tt, k), 1)
    min_score = jnp.min(score, axis=1, keepdims=True)              # [tt, 1]
    idx_col = jnp.min(jnp.where(score <= min_score, iota_k, k),
                      axis=1, keepdims=True).astype(jnp.int32)     # [tt, 1]
    idx_ref[...] = idx_col.reshape(1, 1, tt)                       # lane-dense index row

    # codebook gather as one-hot matmul against the *f32* codebook, emitted
    # directly in the transposed [D, tt] output layout (no wrapper transpose).
    onehot = (iota_k == idx_col).astype(jnp.float32)               # [tt, K]
    q_t = jax.lax.dot_general(e_f32, onehot,
                              dimension_numbers=(((1,), (1,)), ((), ())),
                              preferred_element_type=jnp.float32)  # [D, tt]
    q_ref[...] = q_t.reshape(1, d, tt).astype(q_ref.dtype)

    # exact per-tile SSE: transpose x (XLU) and mask boundary columns with where
    # (multiply-masking would propagate NaNs from stale boundary data).
    col = pl.program_id(1) * tt + jax.lax.broadcasted_iota(jnp.int32, (1, tt), 1)
    diff = q_t - x.T                                               # [D, tt]
    dsq = jnp.where(col < t_valid, diff * diff, 0.0)
    sse_ref[...] = jnp.sum(dsq).reshape(1, 1, 1, 1)


@functools.partial(
    jax.jit,
    static_argnames=("commitment_cost", "block_rows", "use_bf16_matmul"))
def vector_quantizer_forward(x, embeddings, commitment_cost=0.25,
                             block_rows=512, use_bf16_matmul=True):
    """Pallas VectorQuantizer forward.

    x: [B, T_lat, D] or [B, D, T_lat] float32
    embeddings: [K, D] float32 codebook
    Returns (quantized [B, D, T_lat], loss scalar, indices [B, T_lat]) — same
    forward-value semantics as the PyTorch module.
    """
    num_embeddings, embedding_dim = embeddings.shape

    # Mirror the PyTorch permute: if the channel axis (dim 1) == D, go to [B, T, D].
    if x.ndim == 3 and x.shape[1] == embedding_dim:
        x = jnp.transpose(x, (0, 2, 1))
    assert x.ndim == 3
    B, T_lat, D = x.shape
    assert D == embedding_dim
    x = x.astype(jnp.float32)

    # T tile: full T_lat if it fits (always layout-legal), else 128-aligned and
    # capped so ~4 live [tt, K] f32 temporaries stay under ~20 MiB (v7x stopgap).
    lanes_k = max(128, _round_up(num_embeddings, 128))
    tt_cap = max(128, ((20 << 20) // (16 * lanes_k)) // 128 * 128)
    tt_cap = min(tt_cap, _round_up(block_rows, 128))
    tt = T_lat if T_lat <= tt_cap else tt_cap
    nt = pl.cdiv(T_lat, tt)

    # Hoisted codebook prep (constant across the grid): transposed codebook
    # (bf16 copy for the distance matmul, f32 copy for the exact gather) and
    # 0.5*||e||^2 (the 2x distance factor is folded in here).
    e_f32 = embeddings.astype(jnp.float32)
    e_t_f32 = e_f32.T                                              # [D, K]
    e_t_mm = e_t_f32.astype(jnp.bfloat16) if use_bf16_matmul else e_t_f32
    e_sq_half = (0.5 * jnp.sum(e_f32 * e_f32, axis=1))[None, :]    # [1, K]

    kernel = functools.partial(_vq_kernel, t_valid=T_lat)

    quantized, idx, sse = pl.pallas_call(
        kernel,
        out_shape=(
            jax.ShapeDtypeStruct((B, D, T_lat), jnp.float32),      # q already [B, D, T]
            jax.ShapeDtypeStruct((B, 1, T_lat), jnp.int32),        # lane-dense indices
            jax.ShapeDtypeStruct((B, nt, 1, 1), jnp.float32),      # per-tile SSE partials
        ),
        grid_spec=pltpu.PrefetchScalarGridSpec(
            num_scalar_prefetch=0,
            grid=(B, nt),
            in_specs=[
                pl.BlockSpec((1, tt, D), lambda b, t: (b, t, 0)),
                pl.BlockSpec((D, num_embeddings), lambda b, t: (0, 0)),
                pl.BlockSpec((D, num_embeddings), lambda b, t: (0, 0)),
                pl.BlockSpec((1, num_embeddings), lambda b, t: (0, 0)),
            ],
            out_specs=[
                pl.BlockSpec((1, D, tt), lambda b, t: (b, 0, t)),
                pl.BlockSpec((1, 1, tt), lambda b, t: (b, 0, t)),
                pl.BlockSpec((1, 1, 1, 1), lambda b, t: (b, t, 0, 0)),
            ],
        ),
        compiler_params=pltpu.CompilerParams(
            dimension_semantics=("parallel", "parallel"),   # no cross-iteration carry
            vmem_limit_bytes=_vmem_limit_bytes(tt, D, num_embeddings, use_bf16_matmul),
        ),
    )(x, e_t_mm, e_t_f32, e_sq_half)

    mse = jnp.sum(sse) / jnp.float32(B * T_lat * D)
    # forward value of F.mse_loss(q.detach(), x) + c * F.mse_loss(q, x.detach())
    loss = (1.0 + commitment_cost) * mse
    # straight-through estimator: forward value equals quantized (already [B, D, T])
    indices = idx.reshape(B, T_lat)
    return quantized, loss, indices


def _reference_forward(x, embeddings, commitment_cost=0.25):
    """Pure-JAX reference mirroring the PyTorch module (forward values)."""
    K, D = embeddings.shape
    if x.ndim == 3 and x.shape[1] == D:
        x = jnp.transpose(x, (0, 2, 1))
    B, T, _ = x.shape
    xf = x.reshape(-1, D)
    dist = (jnp.sum(xf ** 2, axis=1, keepdims=True)
            + jnp.sum(embeddings ** 2, axis=1)
            - 2.0 * xf @ embeddings.T)
    idx = jnp.argmin(dist, axis=1)
    q = embeddings[idx].reshape(B, T, D)
    loss = (1.0 + commitment_cost) * jnp.mean((q - x) ** 2)
    return jnp.transpose(q, (0, 2, 1)), loss, idx.reshape(B, T)


if __name__ == "__main__":
    num_embeddings = 128
    embedding_dim = 32
    B, T_lat = 2, 200      # not 128-aligned -> exercises boundary blocks below

    key = jax.random.PRNGKey(0)
    kx, ke = jax.random.split(key)
    # deterministic "init": embeddings ~ U(-1/K, 1/K) as in the PyTorch module
    embeddings = jax.random.uniform(
        ke, (num_embeddings, embedding_dim), jnp.float32,
        minval=-1.0 / num_embeddings, maxval=1.0 / num_embeddings)
    x = jax.random.normal(kx, (B, T_lat, embedding_dim), jnp.float32) * 0.02

    q_ref, loss_ref, i_ref = _reference_forward(x, embeddings)

    # (1) exact f32 path, single tile per batch element
    q1, l1, i1 = vector_quantizer_forward(x, embeddings, use_bf16_matmul=False)
    # (2) exact f32 path, small tile -> 2 T-tiles per batch, last one partial
    q2, l2, i2 = vector_quantizer_forward(x, embeddings, block_rows=128,
                                          use_bf16_matmul=False)
    # (3) channel-first input layout [B, D, T] (module's permute branch)
    q3, l3, i3 = vector_quantizer_forward(jnp.transpose(x, (0, 2, 1)), embeddings,
                                          use_bf16_matmul=False)
    jax.block_until_ready((q1, l1, i1, q2, l2, i2, q3, l3, i3))

    for q, l, i in ((q1, l1, i1), (q2, l2, i2), (q3, l3, i3)):
        assert q.shape == (B, embedding_dim, T_lat)
        assert i.shape == (B, T_lat)
        assert jnp.allclose(q, q_ref, atol=1e-5), "quantized mismatch (f32 path)"
        assert jnp.allclose(l, loss_ref, rtol=1e-5, atol=1e-7), "loss mismatch (f32 path)"
        assert jnp.array_equal(i.astype(jnp.int32), i_ref.astype(jnp.int32)), \
            "indices mismatch (f32 path)"

    # (4) default bf16 distance-matmul path: quantized/loss stay consistent with the
    #     kernel's own (near-optimal) indices because the gather/SSE use f32.
    q4, l4, i4 = vector_quantizer_forward(x, embeddings)
    jax.block_until_ready((q4, l4, i4))
    assert q4.shape == (B, embedding_dim, T_lat) and i4.shape == (B, T_lat)
    q_from_idx = jnp.transpose(embeddings[i4], (0, 2, 1))
    loss_from_idx = 1.25 * jnp.mean((embeddings[i4] - x) ** 2)
    assert jnp.allclose(q4, q_from_idx, atol=1e-6), "bf16 path: q != codebook[idx]"
    assert jnp.allclose(l4, loss_from_idx, rtol=1e-5, atol=1e-7), "bf16 path loss mismatch"
    # near-optimality of the bf16 argmin vs exact f32 distances
    xf = x.reshape(-1, embedding_dim)
    dist = (jnp.sum(xf ** 2, axis=1, keepdims=True)
            + jnp.sum(embeddings ** 2, axis=1) - 2.0 * xf @ embeddings.T)
    chosen = jnp.take_along_axis(dist, i4.reshape(-1, 1), axis=1)[:, 0]
    assert float(jnp.max(chosen - dist.min(axis=1))) <= 1e-3, "bf16 argmin not near-optimal"

    print("KERNEL_OK")
</pallas_src>

<mosaic_0001>
module attributes {stable_mosaic.version = 11 : i64} {
  func.func @_vq_kernel(%arg0: i32, %arg1: i32, %arg2: memref<1x200x32xf32, #tpu.memory_space<vmem>>, %arg3: memref<32x128xf32, #tpu.memory_space<vmem>>, %arg4: memref<32x128xf32, #tpu.memory_space<vmem>>, %arg5: memref<1x128xf32, #tpu.memory_space<vmem>>, %arg6: memref<1x32x200xf32, #tpu.memory_space<vmem>>, %arg7: memref<1x1x200xi32, #tpu.memory_space<vmem>>, %arg8: memref<1x1x1x1xf32, #tpu.memory_space<vmem>>) attributes {dimension_semantics = [#tpu.dimension_semantics<parallel>, #tpu.dimension_semantics<parallel>], iteration_bounds = array<i64: 2, 1>, scalar_prefetch = 0 : i64, scratch_operands = 0 : i64, tpu.core_type = #tpu.core_type<tc>, window_params = [{transform_indices = @transform_0, window_bounds = array<i64: 1, 200, 32>}, {pipeline_mode = #tpu.pipeline_mode<synchronous>, transform_indices = @transform_1, window_bounds = array<i64: 32, 128>}, {pipeline_mode = #tpu.pipeline_mode<synchronous>, transform_indices = @transform_2, window_bounds = array<i64: 32, 128>}, {pipeline_mode = #tpu.pipeline_mode<synchronous>, transform_indices = @transform_3, window_bounds = array<i64: 1, 128>}, {transform_indices = @transform_4, window_bounds = array<i64: 1, 32, 200>}, {transform_indices = @transform_5, window_bounds = array<i64: 1, 1, 200>}, {transform_indices = @transform_6, window_bounds = array<i64: 1, 1, 1, 1>}]} {
    %c0 = arith.constant 0 : index
    %c0_0 = arith.constant 0 : index
    %c0_1 = arith.constant 0 : index
    %0 = vector.load %arg2[%c0, %c0_0, %c0_1] : memref<1x200x32xf32, #tpu.memory_space<vmem>>, vector<1x200x32xf32>
    %1 = vector.shape_cast %0 : vector<1x200x32xf32> to vector<200x32xf32>
    %c0_2 = arith.constant 0 : index
    %c0_3 = arith.constant 0 : index
    %2 = vector.load %arg3[%c0_2, %c0_3] : memref<32x128xf32, #tpu.memory_space<vmem>>, vector<32x128xf32>
    %c0_4 = arith.constant 0 : index
    %c0_5 = arith.constant 0 : index
    %3 = vector.load %arg4[%c0_4, %c0_5] : memref<32x128xf32, #tpu.memory_space<vmem>>, vector<32x128xf32>
    %c0_6 = arith.constant 0 : index
    %c0_7 = arith.constant 0 : index
    %4 = vector.load %arg5[%c0_6, %c0_7] : memref<1x128xf32, #tpu.memory_space<vmem>>, vector<1x128xf32>
    %cst = arith.constant dense<0.000000e+00> : vector<200x128xf32>
    %5 = tpu.matmul %1, %2, %cst {dimension_numbers = #tpu.dot_dimension_numbers<[1], [0], [0], [1], [0, 0, 1, 1], [], []>} : vector<200x32xf32>, vector<32x128xf32>, vector<200x128xf32> -> vector<200x128xf32>
    %6 = vector.broadcast %4 : vector<1x128xf32> to vector<200x128xf32>
    %7 = arith.subf %6, %5 : vector<200x128xf32>
    %8 = tpu.iota {dimensions = array<i32: 1>} : vector<200x128xi32>
    %cst_8 = arith.constant dense<0x7F800000> : vector<200xf32>
    %9 = vector.multi_reduction <minimumf>, %7, %cst_8 [1] : vector<200x128xf32> to vector<200xf32>
    %10 = vector.shape_cast %9 : vector<200xf32> to vector<200x1xf32>
    %11 = vector.broadcast %10 : vector<200x1xf32> to vector<200x128xf32>
    %12 = arith.cmpf ole, %7, %11 : vector<200x128xf32>
    %c128_i32 = arith.constant 128 : i32
    %13 = vector.broadcast %c128_i32 : i32 to vector<200x128xi32>
    %14 = arith.select %12, %8, %13 : vector<200x128xi1>, vector<200x128xi32>
    %cst_9 = arith.constant dense<2147483647> : vector<200xi32>
    %15 = vector.multi_reduction <minsi>, %14, %cst_9 [1] : vector<200x128xi32> to vector<200xi32>
    %16 = vector.shape_cast %15 : vector<200xi32> to vector<200x1xi32>
    %17 = vector.shape_cast %16 : vector<200x1xi32> to vector<1x1x200xi32>
    %c0_10 = arith.constant 0 : index
    %c0_11 = arith.constant 0 : index
    %c0_12 = arith.constant 0 : index
    %18 = vector.load %arg7[%c0_10, %c0_11, %c0_12] : memref<1x1x200xi32, #tpu.memory_space<vmem>>, vector<1x1x200xi32>
    tpu.vector_store %arg7[%c0_10, %c0_11, %c0_12], %17 {strides = array<i32>} : memref<1x1x200xi32, #tpu.memory_space<vmem>>, vector<1x1x200xi32>,
    %19 = vector.broadcast %16 : vector<200x1xi32> to vector<200x128xi32>
    %20 = arith.cmpi eq, %8, %19 : vector<200x128xi32>
    %21 = arith.extui %20 : vector<200x128xi1> to vector<200x128xi32>
    %22 = arith.sitofp %21 : vector<200x128xi32> to vector<200x128xf32>
    %cst_13 = arith.constant dense<0.000000e+00> : vector<32x200xf32>
    %23 = tpu.matmul %3, %22, %cst_13 {dimension_numbers = #tpu.dot_dimension_numbers<[1], [1], [0], [0], [0, 0, 1, 0], [], []>} : vector<32x128xf32>, vector<200x128xf32>, vector<32x200xf32> -> vector<32x200xf32>
    %24 = vector.shape_cast %23 : vector<32x200xf32> to vector<1x32x200xf32>
    %c0_14 = arith.constant 0 : index
    %c0_15 = arith.constant 0 : index
    %c0_16 = arith.constant 0 : index
    %25 = vector.load %arg6[%c0_14, %c0_15, %c0_16] : memref<1x32x200xf32, #tpu.memory_space<vmem>>, vector<1x32x200xf32>
    tpu.vector_store %arg6[%c0_14, %c0_15, %c0_16], %24 {strides = array<i32>} : memref<1x32x200xf32, #tpu.memory_space<vmem>>, vector<1x32x200xf32>,
    %c200_i32 = arith.constant 200 : i32
    %26 = arith.muli %arg1, %c200_i32 : i32
    %27 = tpu.iota {dimensions = array<i32: 1>} : vector<1x200xi32>
    %28 = vector.broadcast %26 : i32 to vector<1x200xi32>
    %29 = arith.addi %28, %27 : vector<1x200xi32>
    %30 = tpu.transpose %1, [1, 0] : vector<200x32xf32> -> vector<32x200xf32>
    %31 = arith.subf %23, %30 : vector<32x200xf32>
    %c200_i32_17 = arith.constant 200 : i32
    %32 = vector.broadcast %c200_i32_17 : i32 to vector<1x200xi32>
    %33 = arith.cmpi slt, %29, %32 : vector<1x200xi32>
    %34 = arith.mulf %31, %31 : vector<32x200xf32>
    %cst_18 = arith.constant 0.000000e+00 : f32
    %35 = vector.shape_cast %33 : vector<1x200xi1> to vector<1x200xi1>
    %36 = vector.broadcast %35 : vector<1x200xi1> to vector<32x200xi1>
    %37 = vector.broadcast %cst_18 : f32 to vector<32x200xf32>
    %38 = arith.select %36, %34, %37 : vector<32x200xi1>, vector<32x200xf32>
    %39 = vector.shape_cast %38 : vector<32x200xf32> to vector<1x32x200xf32>
    %cst_19 = arith.constant dense<0.000000e+00> : vector<1xf32>
    %40 = vector.multi_reduction <add>, %39, %cst_19 [1, 2] : vector<1x32x200xf32> to vector<1xf32>
    %41 = vector.shape_cast %40 : vector<1xf32> to vector<1x1x1xf32>
    %42 = vector.extract %41[0, 0, 0] : f32 from vector<1x1x1xf32>
    %43 = vector.broadcast %42 : f32 to vector<1x1x1x1xf32>
    %c0_20 = arith.constant 0 : index
    %c0_21 = arith.constant 0 : index
    %c0_22 = arith.constant 0 : index
    %c0_23 = arith.constant 0 : index
    %44 = vector.load %arg8[%c0_20, %c0_21, %c0_22, %c0_23] : memref<1x1x1x1xf32, #tpu.memory_space<vmem>>, vector<1x1x1x1xf32>
    tpu.vector_store %arg8[%c0_20, %c0_21, %c0_22, %c0_23], %43 {strides = array<i32>} : memref<1x1x1x1xf32, #tpu.memory_space<vmem>>, vector<1x1x1x1xf32>,
    return
  }
  func.func @transform_0(%arg0: i32, %arg1: i32) -> (i32, i32, i32) {
    %c0_i32 = arith.constant 0 : i32
    %c0_i32_0 = arith.constant 0 : i32
    return %arg0, %arg1, %c0_i32 : i32, i32, i32
  }
  func.func @transform_1(%arg0: i32, %arg1: i32) -> (i32, i32) {
    %c0_i32 = arith.constant 0 : i32
    %c0_i32_0 = arith.constant 0 : i32
    %c0_i32_1 = arith.constant 0 : i32
    return %c0_i32, %c0_i32_0 : i32, i32
  }
  func.func @transform_2(%arg0: i32, %arg1: i32) -> (i32, i32) {
    %c0_i32 = arith.constant 0 : i32
    %c0_i32_0 = arith.constant 0 : i32
    %c0_i32_1 = arith.constant 0 : i32
    return %c0_i32, %c0_i32_0 : i32, i32
  }
  func.func @transform_3(%arg0: i32, %arg1: i32) -> (i32, i32) {
    %c0_i32 = arith.constant 0 : i32
    %c0_i32_0 = arith.constant 0 : i32
    %c0_i32_1 = arith.constant 0 : i32
    return %c0_i32, %c0_i32_0 : i32, i32
  }
  func.func @transform_4(%arg0: i32, %arg1: i32) -> (i32, i32, i32) {
    %c0_i32 = arith.constant 0 : i32
    %c0_i32_0 = arith.constant 0 : i32
    return %arg0, %c0_i32, %arg1 : i32, i32, i32
  }
  func.func @transform_5(%arg0: i32, %arg1: i32) -> (i32, i32, i32) {
    %c0_i32 = arith.constant 0 : i32
    %c0_i32_0 = arith.constant 0 : i32
    return %arg0, %c0_i32, %arg1 : i32, i32, i32
  }
  func.func @transform_6(%arg0: i32, %arg1: i32) -> (i32, i32, i32, i32) {
    %c0_i32 = arith.constant 0 : i32
    %c0_i32_0 = arith.constant 0 : i32
    %c0_i32_1 = arith.constant 0 : i32
    return %arg0, %arg1, %c0_i32, %c0_i32_0 : i32, i32, i32, i32
  }
}

</mosaic_0001>

<llo_original>
// kernel: vector_quantizer_forward.1
$region0: #{vector_quantizer_forward.1}
  #allocation0 [shape = 'u32[]', space=smem, size = 0x4, offset = 0x4, fixed_abs, tag = 'smem constant byte address 0x4 - core index']
  #allocation1 [shape = 'u32[144,128]{1,0:T(1,128)}', space=vmem, size = 0x12000, scoped, tag = 'internal scratch']
  %s0 = inlined_call_operand.vmem [shape: f32[2,200,32], index: 0, kind: input, shape index: {}]
  %s1 = inlined_call_operand.vmem [shape: f32[32,128], index: 1, kind: input, shape index: {}, may-alias: {1,2}]
  %s2 = inlined_call_operand.vmem [shape: f32[32,128], index: 2, kind: input, shape index: {}, may-alias: {1,2}]
  %s3 = inlined_call_operand.vmem [shape: f32[1,128], index: 3, kind: input, shape index: {}]
  %s4 = inlined_call_operand.hbm [shape: f32[2,32,200], index: 4, kind: output, shape index: {0}]
  %s5 = inlined_call_operand.vmem [shape: s32[2,1,200], index: 5, kind: output, shape index: {1}]
  %s6 = inlined_call_operand.vmem [shape: f32[2,1,1,1], index: 6, kind: output, shape index: {2}]
  %7 = xla_tuple %s4, %s5, %s6
  %s8 = sld [smem:[#allocation0]]
  $region65: #{vector_quantizer_forward.1} parent=0
    _
  %s10 = ssub.s32 1, %s8
  %s11 = scalar_select 0, %s10, %s8
  $region1: #{vector_quantizer_forward.1} parent=0
    #allocation2 [shape = 'u8[65536]{0}', space=vmem, size = 0x10000, scoped, tag = 'output window, operand 0']
    #allocation3 [shape = 's32[2]{0}', space=sflag, size = 0x8, scoped, tag = 'scoped memory for vector_quantizer_forward.1']
    %12 = vsyncpa [#allocation3], 0
    %s13 = scalar_lea.sflag [#allocation3], 1
    %14 = vsyncpa %s13, 0
    loop: start=0, step=1, limit=4
    $region2: #{vector_quantizer_forward.1} parent=1 // loop_pre_header
      _
    $region3: #{vector_quantizer_forward.1} parent=1 // loop_header
      %s16 = sphi 0, %s20
      %p17 = scmp.ge.s32.totalorder %s16, 4
      %s23 = sphi 0, %s35
      %s24 = sphi 0, %s31
      %s25 = sphi 0, %s23
      %s26 = sphi 0, %s24
      %s27 = sphi 0, %s25
      %s28 = sphi 0, %s26
      %s40 = sphi 0, %s42
      %s43 = sphi 0, %s40
      %s44 = sphi 0, %s43
      %s60 = sphi 0, %s44
      %s64 = sphi 0, %s64
      %s66 = sphi 0, %s64
      %s67 = sphi 0, %s66
      %s81 = sphi 0, %s67
      %s85 = sphi 0, %s85
      %s87 = sphi 0, %s85
      %s88 = sphi 0, %s87
      %s102 = sphi 0, %s88
      %s106 = sphi 0, %s106
      %s108 = sphi 0, %s106
      %s109 = sphi 0, %s108
      %s123 = sphi 0, %s109
      %s131 = sphi 0, %s133
      %s134 = sphi 0, %s131
      %s135 = sphi 0, %s134
      %s151 = sphi 0, %s135
      %s159 = sphi 0, %s161
      %s162 = sphi 0, %s159
      %s163 = sphi 0, %s162
      %s179 = sphi 0, %s163
      %s187 = sphi 0, %s189
      %s190 = sphi 0, %s187
      %s191 = sphi 0, %s190
      %s207 = sphi 0, %s191
    $region4: #{vector_quantizer_forward.1} parent=1 // loop_header_branch
      %19 = sbr.rel (%p17) target = $region8
    $region5: #{vector_quantizer_forward.1} parent=1 // loop_body
      %s21 = ssub.s32 %s16, 1
      %s22 = ssub.s32 %s16, 2
      %s29 = sadd.s32 1, %s24
      %p30 = scmp.ge.s32.totalorder %s29, 1
      %s31 = scalar_select %p30, 0, %s29
      %s32 = sadd.s32 1, %s23
      %s33 = scalar_select %p30, %s32, %s23
      %p34 = scmp.ge.s32.totalorder %s33, 2
      %s35 = scalar_select %p34, 0, %s33
      %s36 = ssub.s32 %s23, %s35
      %s37 = ssub.s32 %s24, %s31
      %s38 = sor.u32 %s36, %s37
      %p39 = scmp.eq.s32.totalorder %s38, 0
      %s41 = sadd.s32 %s40, 1
      %s42 = scalar_select %p39, %s40, %s41
      %p45 = pneg %p39
      %p46 = scmp.eq.s32.totalorder %s16, 1
      %p47 = por %p45, %p46
      %p48 = scmp.ne.s32.totalorder %s40, %s43
      %p49 = scmp.eq.s32.totalorder %s16, 0
      %p50 = por %p48, %p49
      %p51 = scmp.ne.s32.totalorder %s40, %s43
      %p52 = scmp.eq.s32.totalorder %s21, 1
      %p53 = por %p51, %p52
      %p54 = scmp.ne.s32.totalorder %s43, %s44
      %p55 = scmp.eq.s32.totalorder %s21, 0
      %p56 = por %p54, %p55
      %p57 = scmp.ne.s32.totalorder %s43, %s44
      %p58 = scmp.eq.s32.totalorder %s22, 1
      %p59 = por %p57, %p58
      %p61 = scmp.ne.s32.totalorder %s44, %s60
      %p62 = scmp.eq.s32.totalorder %s22, 0
      %p63 = por %p61, %p62
      %s65 = sadd.s32 %s64, 1
      %p68 = scmp.eq.s32.totalorder %s16, 1
      %p69 = scmp.ne.s32.totalorder %s64, %s66
      %p70 = scmp.eq.s32.totalorder %s16, 0
      %p71 = por %p69, %p70
      %p72 = scmp.ne.s32.totalorder %s64, %s66
      %p73 = scmp.eq.s32.totalorder %s21, 1
      %p74 = por %p72, %p73
      %p75 = scmp.ne.s32.totalorder %s66, %s67
      %p76 = scmp.eq.s32.totalorder %s21, 0
      %p77 = por %p75, %p76
      %p78 = scmp.ne.s32.totalorder %s66, %s67
      %p79 = scmp.eq.s32.totalorder %s22, 1
      %p80 = por %p78, %p79
      %p82 = scmp.ne.s32.totalorder %s67, %s81
      %p83 = scmp.eq.s32.totalorder %s22, 0
      %p84 = por %p82, %p83
      %s86 = sadd.s32 %s85, 1
      %p89 = scmp.eq.s32.totalorder %s16, 1
      %p90 = scmp.ne.s32.totalorder %s85, %s87
      %p91 = scmp.eq.s32.totalorder %s16, 0
      %p92 = por %p90, %p91
      %p93 = scmp.ne.s32.totalorder %s85, %s87
      %p94 = scmp.eq.s32.totalorder %s21, 1
      %p95 = por %p93, %p94
      %p96 = scmp.ne.s32.totalorder %s87, %s88
      %p97 = scmp.eq.s32.totalorder %s21, 0
      %p98 = por %p96, %p97
      %p99 = scmp.ne.s32.totalorder %s87, %s88
      %p100 = scmp.eq.s32.totalorder %s22, 1
      %p101 = por %p99, %p100
      %p103 = scmp.ne.s32.totalorder %s88, %s102
      %p104 = scmp.eq.s32.totalorder %s22, 0
      %p105 = por %p103, %p104
      %s107 = sadd.s32 %s106, 1
      %p110 = scmp.eq.s32.totalorder %s16, 1
      %p111 = scmp.ne.s32.totalorder %s106, %s108
      %p112 = scmp.eq.s32.totalorder %s16, 0
      %p113 = por %p111, %p112
      %p114 = scmp.ne.s32.totalorder %s106, %s108
      %p115 = scmp.eq.s32.totalorder %s21, 1
      %p116 = por %p114, %p115
      %p117 = scmp.ne.s32.totalorder %s108, %s109
      %p118 = scmp.eq.s32.totalorder %s21, 0
      %p119 = por %p117, %p118
      %p120 = scmp.ne.s32.totalorder %s108, %s109
      %p121 = scmp.eq.s32.totalorder %s22, 1
      %p122 = por %p120, %p121
      %p124 = scmp.ne.s32.totalorder %s109, %s123
      %p125 = scmp.eq.s32.totalorder %s22, 0
      %p126 = por %p124, %p125
      %s127 = ssub.s32 %s23, %s35
      %s128 = ssub.s32 %s24, %s31
      %s129 = sor.u32 %s127, %s128
      %p130 = scmp.eq.s32.totalorder %s129, 0
      %s132 = sadd.s32 %s131, 1
      %s133 = scalar_select %p130, %s131, %s132
      %p136 = pneg %p130
      %p137 = scmp.eq.s32.totalorder %s16, 1
      %p138 = por %p136, %p137
      %p139 = scmp.ne.s32.totalorder %s131, %s134
      %p140 = scmp.eq.s32.totalorder %s16, 0
      %p141 = por %p139, %p140
      %p142 = scmp.ne.s32.totalorder %s131, %s134
      %p143 = scmp.eq.s32.totalorder %s21, 1
      %p144 = por %p142, %p143
      %p145 = scmp.ne.s32.totalorder %s134, %s135
      %p146 = scmp.eq.s32.totalorder %s21, 0
      %p147 = por %p145, %p146
      %p148 = scmp.ne.s32.totalorder %s134, %s135
      %p149 = scmp.eq.s32.totalorder %s22, 1
      %p150 = por %p148, %p149
      %p152 = scmp.ne.s32.totalorder %s135, %s151
      %p153 = scmp.eq.s32.totalorder %s22, 0
      %p154 = por %p152, %p153
      %s155 = ssub.s32 %s23, %s35
      %s156 = ssub.s32 %s24, %s31
      %s157 = sor.u32 %s155, %s156
      %p158 = scmp.eq.s32.totalorder %s157, 0
      %s160 = sadd.s32 %s159, 1
      %s161 = scalar_select %p158, %s159, %s160
      %p164 = pneg %p158
      %p165 = scmp.eq.s32.totalorder %s16, 1
      %p166 = por %p164, %p165
      %p167 = scmp.ne.s32.totalorder %s159, %s162
      %p168 = scmp.eq.s32.totalorder %s16, 0
      %p169 = por %p167, %p168
      %p170 = scmp.ne.s32.totalorder %s159, %s162
      %p171 = scmp.eq.s32.totalorder %s21, 1
      %p172 = por %p170, %p171
      %p173 = scmp.ne.s32.totalorder %s162, %s163
      %p174 = scmp.eq.s32.totalorder %s21, 0
      %p175 = por %p173, %p174
      %p176 = scmp.ne.s32.totalorder %s162, %s163
      %p177 = scmp.eq.s32.totalorder %s22, 1
      %p178 = por %p176, %p177
      %p180 = scmp.ne.s32.totalorder %s163, %s179
      %p181 = scmp.eq.s32.totalorder %s22, 0
      %p182 = por %p180, %p181
      %s183 = ssub.s32 %s23, %s35
      %s184 = ssub.s32 %s24, %s31
      %s185 = sor.u32 %s183, %s184
      %p186 = scmp.eq.s32.totalorder %s185, 0
      %s188 = sadd.s32 %s187, 1
      %s189 = scalar_select %p186, %s187, %s188
      %p192 = pneg %p186
      %p193 = scmp.eq.s32.totalorder %s16, 1
      %p194 = por %p192, %p193
      %p195 = scmp.ne.s32.totalorder %s187, %s190
      %p196 = scmp.eq.s32.totalorder %s16, 0
      %p197 = por %p195, %p196
      %p198 = scmp.ne.s32.totalorder %s187, %s190
      %p199 = scmp.eq.s32.totalorder %s21, 1
      %p200 = por %p198, %p199
      %p201 = scmp.ne.s32.totalorder %s190, %s191
      %p202 = scmp.eq.s32.totalorder %s21, 0
      %p203 = por %p201, %p202
      %p204 = scmp.ne.s32.totalorder %s190, %s191
      %p205 = scmp.eq.s32.totalorder %s22, 1
      %p206 = por %p204, %p205
      %p208 = scmp.ne.s32.totalorder %s191, %s207
      %p209 = scmp.eq.s32.totalorder %s22, 0
      %p210 = por %p208, %p209
      %p211 = scmp.le.s32.totalorder 1, %s16
      %p212 = scmp.lt.s32.totalorder %s16, 3
      %p213 = pnand %p211, %p212
      %p214 = pneg %p213
      // Predicated region
      $region9: #{vector_quantizer_forward.1} parent=5 // pred_check
        _
      $region10: #{vector_quantizer_forward.1} parent=5 // pred_check_branch
        %216 = sbr.rel (%p213) target = $region12
      $region11: #{vector_quantizer_forward.1} parent=5 // pred_region
        %s217 = ssub.s32 %s16, 1
        // Predicated region
        $region13: #{vector_quantizer_forward.1} parent=11 // pred_check
          %p218 = pneg %p77
        $region14: #{vector_quantizer_forward.1} parent=11 // pred_check_branch
          %220 = sbr.rel (%p218) target = $region16
        $region15: #{vector_quantizer_forward.1} parent=11 // pred_region
          _
        $region16: #{vector_quantizer_forward.1} parent=11 // pred_fallthru
          _
        // Predicated region
        $region17: #{vector_quantizer_forward.1} parent=11 // pred_check
          %p221 = pneg %p98
        $region18: #{vector_quantizer_forward.1} parent=11 // pred_check_branch
          %223 = sbr.rel (%p221) target = $region20
        $region19: #{vector_quantizer_forward.1} parent=11 // pred_region
          _
        $region20: #{vector_quantizer_forward.1} parent=11 // pred_fallthru
          _
        // Predicated region
        $region21: #{vector_quantizer_forward.1} parent=11 // pred_check
          %p224 = pneg %p119
        $region22: #{vector_quantizer_forward.1} parent=11 // pred_check_branch
          %226 = sbr.rel (%p224) target = $region24
        $region23: #{vector_quantizer_forward.1} parent=11 // pred_region
          _
        $region24: #{vector_quantizer_forward.1} parent=11 // pred_fallthru
          _
      $region12: #{vector_quantizer_forward.1} parent=5 // pred_fallthru
        _
      %p227 = scmp.lt.s32.totalorder %s16, 2
      // Predicated region
      $region25: #{vector_quantizer_forward.1} parent=5 // pred_check
        %p228 = pneg %p227
      $region26: #{vector_quantizer_forward.1} parent=5 // pred_check_branch
        %230 = sbr.rel (%p228) target = $region28
      $region27: #{vector_quantizer_forward.1} parent=5 // pred_region
        // Predicated region
        $region29: #{vector_quantizer_forward.1} parent=27 // pred_check
          %p231 = pneg %p50
        $region30: #{vector_quantizer_forward.1} parent=27 // pred_check_branch
          %233 = sbr.rel (%p231) target = $region32
        $region31: #{vector_quantizer_forward.1} parent=27 // pred_region
          %s234 = smul.u32 25, %s24
          %p235 = scmp.lt.s32.totalorder %s23, 1
          %s236 = scalar_select %p235, %s23, 1
          %p237 = scmp.lt.s32.totalorder %s234, 24
          %s238 = scalar_select %p237, %s234, 24
          %s239 = smul.addr %s236, 25
          %s240 = sadd.s32 %s238, %s239
          %s241 = smul.addr %s240, 8
          %s242 = scalar_lea.vmem %s0, %s241
          %s243 = smul.u32 25, %s24
        $region32: #{vector_quantizer_forward.1} parent=27 // pred_fallthru
          _
      $region28: #{vector_quantizer_forward.1} parent=5 // pred_fallthru
        _
      %p244 = scmp.le.s32.totalorder 1, %s16
      %p245 = scmp.lt.s32.totalorder %s16, 3
      %p246 = pnand %p244, %p245
      %p247 = pneg %p246
      // Predicated region
      $region33: #{vector_quantizer_forward.1} parent=5 // pred_check
        _
      $region34: #{vector_quantizer_forward.1} parent=5 // pred_check_branch
        %249 = sbr.rel (%p246) target = $region36
      $region35: #{vector_quantizer_forward.1} parent=5 // pred_region
        %s250 = ssub.s32 %s16, 1
        %s251 = smul.u32 25, %s26
        %p252 = scmp.lt.s32.totalorder %s25, 1
        %s253 = scalar_select %p252, %s25, 1
        %p254 = scmp.lt.s32.totalorder %s251, 24
        %s255 = scalar_select %p254, %s251, 24
        %s256 = smul.addr %s253, 25
        %s257 = sadd.s32 %s255, %s256
        %s258 = smul.addr %s257, 8
        %s259 = scalar_lea.vmem %s0, %s258
        %p260 = pneg %p56
        %p261 = pneg %p53
        %p262 = pneg %p77
        %p263 = pneg %p74
        %p264 = pneg %p98
        %p265 = pneg %p95
        %p266 = pneg %p119
        %p267 = pneg %p116
        %p268 = pneg %p147
        %p269 = pneg %p144
        %s270 = sand.u32 %s134, 1
        %s271 = scalar_lea.sflag [#allocation3], %s270
        %s272 = sand.u32 %s134, 1
        %s273 = smul.addr %s272, 64
        %s274 = scalar_lea.vmem [#allocation2], %s273
        %p275 = pneg %p175
        %p276 = pneg %p172
        %s277 = smul.u32 2, %s26
        %p278 = scmp.lt.s32.totalorder %s25, 1
        %s279 = scalar_select %p278, %s25, 1
        %p280 = scmp.lt.s32.totalorder %s277, 1
        %s281 = scalar_select %p280, %s277, 1
        %s282 = smul.addr %s279, 2
        %s283 = sadd.s32 %s281, %s282
        %s284 = scalar_lea.vmem %s5, %s283
        %p285 = pneg %p203
        %p286 = pneg %p200
        %p287 = scmp.lt.s32.totalorder %s25, 1
        %s288 = scalar_select %p287, %s25, 1
        %p289 = scmp.lt.s32.totalorder %s26, 0
        %s290 = scalar_select %p289, %s26, 0
        %s291 = sadd.s32 %s290, %s288
        %s292 = scalar_lea.vmem %s6, %s291
        %s293 = smul.u32 25, %s26
        %p294 = scmp.lt.s32.totalorder %s25, 1
        %s295 = scalar_select %p294, %s25, 1
        %p296 = scmp.lt.s32.totalorder %s293, 24
        %s297 = scalar_select %p296, %s293, 24
        %s298 = smul.addr %s295, 25
        %s299 = sadd.s32 %s297, %s298
        %s300 = smul.addr %s299, 8
        %s301 = scalar_lea.vmem %s0, %s300
        %s302 = smul.u32 25, %s26
        %s303 = smul.u32 2, %s26
        %s304 = smul.u32 2, %s26
        %p305 = scmp.lt.s32.totalorder %s25, 1
        %s306 = scalar_select %p305, %s25, 1
        %p307 = scmp.lt.s32.totalorder %s304, 1
        %s308 = scalar_select %p307, %s304, 1
        %s309 = smul.addr %s306, 2
        %s310 = sadd.s32 %s308, %s309
        %s311 = scalar_lea.vmem %s5, %s310
        %s312 = smul.u32 2, %s26
        %p313 = scmp.lt.s32.totalorder %s25, 1
        %s314 = scalar_select %p313, %s25, 1
        %p315 = scmp.lt.s32.totalorder %s26, 0
        %s316 = scalar_select %p315, %s26, 0
        %s317 = sadd.s32 %s316, %s314
        %s318 = scalar_lea.vmem %s6, %s317
        %v319 = vld [vmem:[%s301] sm:$0xff]
        %v320 = vld [vmem:[%s301 + $0x8] sm:$0xff]
        %v321 = vld [vmem:[%s301 + $0x10] sm:$0xff]
        %v322 = vld [vmem:[%s301 + $0x18] sm:$0xff]
        %v323 = vld [vmem:[%s301 + $0x20] sm:$0xff]
        %v324 = vld [vmem:[%s301 + $0x28] sm:$0xff]
        %v325 = vld [vmem:[%s301 + $0x30] sm:$0xff]
        %v326 = vld [vmem:[%s301 + $0x38] sm:$0xff]
        %v327 = vld [vmem:[%s301 + $0x40] sm:$0xff]
        %v328 = vld [vmem:[%s301 + $0x48] sm:$0xff]
        %v329 = vld [vmem:[%s301 + $0x50] sm:$0xff]
        %v330 = vld [vmem:[%s301 + $0x58] sm:$0xff]
        %v331 = vld [vmem:[%s301 + $0x60] sm:$0xff]
        %v332 = vld [vmem:[%s301 + $0x68] sm:$0xff]
        %v333 = vld [vmem:[%s301 + $0x70] sm:$0xff]
        %v334 = vld [vmem:[%s301 + $0x78] sm:$0xff]
        %v335 = vld [vmem:[%s301 + $0x80] sm:$0xff]
        %v336 = vld [vmem:[%s301 + $0x88] sm:$0xff]
        %v337 = vld [vmem:[%s301 + $0x90] sm:$0xff]
        %v338 = vld [vmem:[%s301 + $0x98] sm:$0xff]
        %v339 = vld [vmem:[%s301 + $0xa0] sm:$0xff]
        %v340 = vld [vmem:[%s301 + $0xa8] sm:$0xff]
        %v341 = vld [vmem:[%s301 + $0xb0] sm:$0xff]
        %v342 = vld [vmem:[%s301 + $0xb8] sm:$0xff]
        %v343 = vld [vmem:[%s301 + $0xc0] sm:$0xff]
        %v344 = vld [vmem:[%s1] sm:$0xff]
        %v345 = vld [vmem:[%s1 + $0x8] sm:$0xff]
        %v346 = vld [vmem:[%s1 + $0x10] sm:$0xff]
        %v347 = vld [vmem:[%s1 + $0x18] sm:$0xff]
        %v348 = vld [vmem:[%s2] sm:$0xff]
        %v349 = vld [vmem:[%s2 + $0x8] sm:$0xff]
        %v350 = vld [vmem:[%s2 + $0x10] sm:$0xff]
        %v351 = vld [vmem:[%s2 + $0x18] sm:$0xff]
        %v352 = vld [vmem:[%s3] sm:$0x1]
        %vm353 = vcmask 261120
        %v355 = vsel %vm353, %v319, 0
        %v358 = vsel %vm353, %v320, 0
        %v361 = vsel %vm353, %v321, 0
        %v364 = vsel %vm353, %v322, 0
        %v367 = vsel %vm353, %v323, 0
        %v370 = vsel %vm353, %v324, 0
        %v373 = vsel %vm353, %v325, 0
        %v376 = vsel %vm353, %v326, 0
        %v379 = vsel %vm353, %v327, 0
        %v382 = vsel %vm353, %v328, 0
        %v385 = vsel %vm353, %v329, 0
        %v388 = vsel %vm353, %v330, 0
        %v391 = vsel %vm353, %v331, 0
        %v394 = vsel %vm353, %v332, 0
        %v397 = vsel %vm353, %v333, 0
        %v400 = vsel %vm353, %v334, 0
        %v403 = vsel %vm353, %v335, 0
        %v406 = vsel %vm353, %v336, 0
        %v409 = vsel %vm353, %v337, 0
        %v412 = vsel %vm353, %v338, 0
        %v415 = vsel %vm353, %v339, 0
        %v418 = vsel %vm353, %v340, 0
        %v421 = vsel %vm353, %v341, 0
        %v424 = vsel %vm353, %v342, 0
        %v427 = vsel %vm353, %v343, 0
        %429 = vmatprep.subr.mxu0 0.0
        %430 = vmatpush1.msra.mxu0 %v344
        %431 = vmatprep.subr.mxu0 0.0
        %432 = vmatpush1.msra.mxu0 %v345
        %433 = vmatprep.subr.mxu0 0.0
        %434 = vmatpush1.msra.mxu0 %v346
        %435 = vmatprep.subr.mxu0 0.0
        %436 = vmatpush1.msra.mxu0 %v347
        %437 = vmatprep.subr.mxu0 0.0
        %438 = vmatpush1.msra.mxu0 0.0
        %439 = vmatprep.subr.mxu0 0.0
        %440 = vmatpush1.msra.mxu0 0.0
        %441 = vmatprep.subr.mxu0 0.0
        %442 = vmatpush1.msra.mxu0 0.0
        %443 = vmatprep.subr.mxu0 0.0
        %444 = vmatpush1.msra.mxu0 0.0
        %445 = vmatprep.subr.mxu0 0.0
        %446 = vmatpush1.msra.mxu0 0.0
        %447 = vmatprep.subr.mxu0 0.0
        %448 = vmatpush1.msra.mxu0 0.0
        %449 = vmatprep.subr.mxu0 0.0
        %450 = vmatpush1.msra.mxu0 0.0
        %451 = vmatprep.subr.mxu0 0.0
        %452 = vmatpush1.msra.mxu0 0.0
        %453 = vmatprep.subr.mxu0 0.0
        %454 = vmatpush1.msra.mxu0 0.0
        %455 = vmatprep.subr.mxu0 0.0
        %456 = vmatpush1.msra.mxu0 0.0
        %457 = vmatprep.subr.mxu0 0.0
        %458 = vmatpush1.msra.mxu0 0.0
        %459 = vmatprep.subr.mxu0 0.0
        %460 = vmatpush1.msra.mxu0 0.0
        %461 = vmatprep.subr.mxu0 0.0
        %462 = vmatpush1.msra.mxu0 0.0
        %463 = vmatprep.subr.mxu0 0.0
        %464 = vmatpush1.msra.mxu0 0.0
        %465 = vmatprep.subr.mxu0 0.0
        %466 = vmatpush1.msra.mxu0 0.0
        %467 = vmatprep.subr.mxu0 0.0
        %468 = vmatpush1.msra.mxu0 0.0
        %469 = vmatprep.subr.mxu0 0.0
        %470 = vmatpush1.msra.mxu0 0.0
        %471 = vmatprep.subr.mxu0 0.0
        %472 = vmatpush1.msra.mxu0 0.0
        %473 = vmatprep.subr.mxu0 0.0
        %474 = vmatpush1.msra.mxu0 0.0
        %475 = vmatprep.subr.mxu0 0.0
        %476 = vmatpush1.msra.mxu0 0.0
        %477 = vmatprep.subr.mxu0 0.0
        %478 = vmatpush1.msra.mxu0 0.0
        %479 = vmatprep.subr.mxu0 0.0
        %480 = vmatpush1.msra.mxu0 0.0
        %481 = vmatprep.subr.mxu0 0.0
        %482 = vmatpush1.msra.mxu0 0.0
        %483 = vmatprep.subr.mxu0 0.0
        %484 = vmatpush1.msra.mxu0 0.0
        %485 = vmatprep.subr.mxu0 0.0
        %486 = vmatpush1.msra.mxu0 0.0
        %487 = vmatprep.subr.mxu0 0.0
        %488 = vmatpush1.msra.mxu0 0.0
        %489 = vmatprep.subr.mxu0 0.0
        %490 = vmatpush1.msra.mxu0 0.0
        %491 = vmatprep.subr.mxu0 0.0
        %492 = vmatpush1.msra.mxu0 0.0
        %493 = vmatprep.mubr.f32.mxu0 0.0
        %494 = vmatmul.mubr.f32.gmra.mrb[0].mxu0 %v355
        %v495 = vpop.f32.mrb[0].mxu0
        %v496 = vadd.f32 0.0, %v495
        %v497 = vpop.f32.mrb[0].mxu0
        %498 = vmatprep.mubr.f32.mxu0 0.0
        %499 = vmatmul.mubr.f32.gmra.mrb[0].mxu0 %v358
        %v500 = vpop.f32.mrb[0].mxu0
        %v501 = vadd.f32 0.0, %v500
        %v502 = vpop.f32.mrb[0].mxu0
        %503 = vmatprep.mubr.f32.mxu0 0.0
        %504 = vmatmul.mubr.f32.gmra.mrb[0].mxu0 %v361
        %v505 = vpop.f32.mrb[0].mxu0
        %v506 = vadd.f32 0.0, %v505
        %v507 = vpop.f32.mrb[0].mxu0
        %508 = vmatprep.mubr.f32.mxu0 0.0
        %509 = vmatmul.mubr.f32.gmra.mrb[0].mxu0 %v364
        %v510 = vpop.f32.mrb[0].mxu0
        %v511 = vadd.f32 0.0, %v510
        %v512 = vpop.f32.mrb[0].mxu0
        %513 = vmatprep.mubr.f32.mxu0 0.0
        %514 = vmatmul.mubr.f32.gmra.mrb[0].mxu0 %v367
        %v515 = vpop.f32.mrb[0].mxu0
        %v516 = vadd.f32 0.0, %v515
        %v517 = vpop.f32.mrb[0].mxu0
        %518 = vmatprep.mubr.f32.mxu0 0.0
        %519 = vmatmul.mubr.f32.gmra.mrb[0].mxu0 %v370
        %v520 = vpop.f32.mrb[0].mxu0
        %v521 = vadd.f32 0.0, %v520
        %v522 = vpop.f32.mrb[0].mxu0
        %523 = vmatprep.mubr.f32.mxu0 0.0
        %524 = vmatmul.mubr.f32.gmra.mrb[0].mxu0 %v373
        %v525 = vpop.f32.mrb[0].mxu0
        %v526 = vadd.f32 0.0, %v525
        %v527 = vpop.f32.mrb[0].mxu0
        %528 = vmatprep.mubr.f32.mxu0 0.0
        %529 = vmatmul.mubr.f32.gmra.mrb[0].mxu0 %v376
        %v530 = vpop.f32.mrb[0].mxu0
        %v531 = vadd.f32 0.0, %v530
        %v532 = vpop.f32.mrb[0].mxu0
        %533 = vmatprep.mubr.f32.mxu0 0.0
        %534 = vmatmul.mubr.f32.gmra.mrb[0].mxu0 %v379
        %v535 = vpop.f32.mrb[0].mxu0
        %v536 = vadd.f32 0.0, %v535
        %v537 = vpop.f32.mrb[0].mxu0
        %538 = vmatprep.mubr.f32.mxu0 0.0
        %539 = vmatmul.mubr.f32.gmra.mrb[0].mxu0 %v382
        %v540 = vpop.f32.mrb[0].mxu0
        %v541 = vadd.f32 0.0, %v540
        %v542 = vpop.f32.mrb[0].mxu0
        %543 = vmatprep.mubr.f32.mxu0 0.0
        %544 = vmatmul.mubr.f32.gmra.mrb[0].mxu0 %v385
        %v545 = vpop.f32.mrb[0].mxu0
        %v546 = vadd.f32 0.0, %v545
        %v547 = vpop.f32.mrb[0].mxu0
        %548 = vmatprep.mubr.f32.mxu0 0.0
        %549 = vmatmul.mubr.f32.gmra.mrb[0].mxu0 %v388
        %v550 = vpop.f32.mrb[0].mxu0
        %v551 = vadd.f32 0.0, %v550
        %v552 = vpop.f32.mrb[0].mxu0
        %553 = vmatprep.mubr.f32.mxu0 0.0
        %554 = vmatmul.mubr.f32.gmra.mrb[0].mxu0 %v391
        %v555 = vpop.f32.mrb[0].mxu0
        %v556 = vadd.f32 0.0, %v555
        %v557 = vpop.f32.mrb[0].mxu0
        %558 = vmatprep.mubr.f32.mxu0 0.0
        %559 = vmatmul.mubr.f32.gmra.mrb[0].mxu0 %v394
        %v560 = vpop.f32.mrb[0].mxu0
        %v561 = vadd.f32 0.0, %v560
        %v562 = vpop.f32.mrb[0].mxu0
        %563 = vmatprep.mubr.f32.mxu0 0.0
        %564 = vmatmul.mubr.f32.gmra.mrb[0].mxu0 %v397
        %v565 = vpop.f32.mrb[0].mxu0
        %v566 = vadd.f32 0.0, %v565
        %v567 = vpop.f32.mrb[0].mxu0
        %568 = vmatprep.mubr.f32.mxu0 0.0
        %569 = vmatmul.mubr.f32.gmra.mrb[0].mxu0 %v400
        %v570 = vpop.f32.mrb[0].mxu0
        %v571 = vadd.f32 0.0, %v570
        %v572 = vpop.f32.mrb[0].mxu0
        %573 = vmatprep.mubr.f32.mxu0 0.0
        %574 = vmatmul.mubr.f32.gmra.mrb[0].mxu0 %v403
        %v575 = vpop.f32.mrb[0].mxu0
        %v576 = vadd.f32 0.0, %v575
        %v577 = vpop.f32.mrb[0].mxu0
        %578 = vmatprep.mubr.f32.mxu0 0.0
        %579 = vmatmul.mubr.f32.gmra.mrb[0].mxu0 %v406
        %v580 = vpop.f32.mrb[0].mxu0
        %v581 = vadd.f32 0.0, %v580
        %v582 = vpop.f32.mrb[0].mxu0
        %583 = vmatprep.mubr.f32.mxu0 0.0
        %584 = vmatmul.mubr.f32.gmra.mrb[0].mxu0 %v409
        %v585 = vpop.f32.mrb[0].mxu0
        %v586 = vadd.f32 0.0, %v585
        %v587 = vpop.f32.mrb[0].mxu0
        %588 = vmatprep.mubr.f32.mxu0 0.0
        %589 = vmatmul.mubr.f32.gmra.mrb[0].mxu0 %v412
        %v590 = vpop.f32.mrb[0].mxu0
        %v591 = vadd.f32 0.0, %v590
        %v592 = vpop.f32.mrb[0].mxu0
        %593 = vmatprep.mubr.f32.mxu0 0.0
        %594 = vmatmul.mubr.f32.gmra.mrb[0].mxu0 %v415
        %v595 = vpop.f32.mrb[0].mxu0
        %v596 = vadd.f32 0.0, %v595
        %v597 = vpop.f32.mrb[0].mxu0
        %598 = vmatprep.mubr.f32.mxu0 0.0
        %599 = vmatmul.mubr.f32.gmra.mrb[0].mxu0 %v418
        %v600 = vpop.f32.mrb[0].mxu0
        %v601 = vadd.f32 0.0, %v600
        %v602 = vpop.f32.mrb[0].mxu0
        %603 = vmatprep.mubr.f32.mxu0 0.0
        %604 = vmatmul.mubr.f32.gmra.mrb[0].mxu0 %v421
        %v605 = vpop.f32.mrb[0].mxu0
        %v606 = vadd.f32 0.0, %v605
        %v607 = vpop.f32.mrb[0].mxu0
        %608 = vmatprep.mubr.f32.mxu0 0.0
        %609 = vmatmul.mubr.f32.gmra.mrb[0].mxu0 %v424
        %v610 = vpop.f32.mrb[0].mxu0
        %v611 = vadd.f32 0.0, %v610
        %v612 = vpop.f32.mrb[0].mxu0
        %613 = vmatprep.mubr.f32.mxu0 0.0
        %614 = vmatmul.mubr.f32.gmra.mrb[0].mxu0 %v427
        %v615 = vpop.f32.mrb[0].mxu0
        %v616 = vadd.f32 0.0, %v615
        %v617 = vpop.f32.mrb[0].mxu0
        %618 = vdwg.mxu0
        %v620 = vlaneseq
        %v621 = vshrl.u32 %v620, 7
        %v622 = vsub.s32 0, %v621
        %v623 = vrot.slane %v352, %v622
        %v625 = vsub.f32 %v623, %v496
        %v626 = vsub.f32 %v623, %v501
        %v627 = vsub.f32 %v623, %v506
        %v628 = vsub.f32 %v623, %v511
        %v629 = vsub.f32 %v623, %v516
        %v630 = vsub.f32 %v623, %v521
        %v631 = vsub.f32 %v623, %v526
        %v632 = vsub.f32 %v623, %v531
        %v633 = vsub.f32 %v623, %v536
        %v634 = vsub.f32 %v623, %v541
        %v635 = vsub.f32 %v623, %v546
        %v636 = vsub.f32 %v623, %v551
        %v637 = vsub.f32 %v623, %v556
        %v638 = vsub.f32 %v623, %v561
        %v639 = vsub.f32 %v623, %v566
        %v640 = vsub.f32 %v623, %v571
        %v641 = vsub.f32 %v623, %v576
        %v642 = vsub.f32 %v623, %v581
        %v643 = vsub.f32 %v623, %v586
        %v644 = vsub.f32 %v623, %v591
        %v645 = vsub.f32 %v623, %v596
        %v646 = vsub.f32 %v623, %v601
        %v647 = vsub.f32 %v623, %v606
        %v648 = vsub.f32 %v623, %v611
        %v649 = vsub.f32 %v623, %v616
        %v650 = vlaneseq
        %v651 = vand.u32 %v650, 127
        %652 = vmin.xlane.f32.xlu0 %v625
        %v653 = vpop.xlane.xlu0 %652
        %654 = vmin.xlane.f32.xlu0 %v626
        %v655 = vpop.xlane.xlu0 %654
        %656 = vmin.xlane.f32.xlu0 %v627
        %v657 = vpop.xlane.xlu0 %656
        %658 = vmin.xlane.f32.xlu0 %v628
        %v659 = vpop.xlane.xlu0 %658
        %660 = vmin.xlane.f32.xlu0 %v629
        %v661 = vpop.xlane.xlu0 %660
        %662 = vmin.xlane.f32.xlu0 %v630
        %v663 = vpop.xlane.xlu0 %662
        %664 = vmin.xlane.f32.xlu0 %v631
        %v665 = vpop.xlane.xlu0 %664
        %666 = vmin.xlane.f32.xlu0 %v632
        %v667 = vpop.xlane.xlu0 %666
        %668 = vmin.xlane.f32.xlu0 %v633
        %v669 = vpop.xlane.xlu0 %668
        %670 = vmin.xlane.f32.xlu0 %v634
        %v671 = vpop.xlane.xlu0 %670
        %672 = vmin.xlane.f32.xlu0 %v635
        %v673 = vpop.xlane.xlu0 %672
        %674 = vmin.xlane.f32.xlu0 %v636
        %v675 = vpop.xlane.xlu0 %674
        %676 = vmin.xlane.f32.xlu0 %v637
        %v677 = vpop.xlane.xlu0 %676
        %678 = vmin.xlane.f32.xlu0 %v638
        %v679 = vpop.xlane.xlu0 %678
        %680 = vmin.xlane.f32.xlu0 %v639
        %v681 = vpop.xlane.xlu0 %680
        %682 = vmin.xlane.f32.xlu0 %v640
        %v683 = vpop.xlane.xlu0 %682
        %684 = vmin.xlane.f32.xlu0 %v641
        %v685 = vpop.xlane.xlu0 %684
        %686 = vmin.xlane.f32.xlu0 %v642
        %v687 = vpop.xlane.xlu0 %686
        %688 = vmin.xlane.f32.xlu0 %v643
        %v689 = vpop.xlane.xlu0 %688
        %690 = vmin.xlane.f32.xlu0 %v644
        %v691 = vpop.xlane.xlu0 %690
        %692 = vmin.xlane.f32.xlu0 %v645
        %v693 = vpop.xlane.xlu0 %692
        %694 = vmin.xlane.f32.xlu0 %v646
        %v695 = vpop.xlane.xlu0 %694
        %696 = vmin.xlane.f32.xlu0 %v647
        %v697 = vpop.xlane.xlu0 %696
        %698 = vmin.xlane.f32.xlu0 %v648
        %v699 = vpop.xlane.xlu0 %698
        %700 = vmin.xlane.f32.xlu0 %v649
        %v701 = vpop.xlane.xlu0 %700
        %vm702 = vcmp.le.f32.partialorder %v625, %v653
        %vm703 = vcmp.le.f32.partialorder %v626, %v655
        %vm704 = vcmp.le.f32.partialorder %v627, %v657
        %vm705 = vcmp.le.f32.partialorder %v628, %v659
        %vm706 = vcmp.le.f32.partialorder %v629, %v661
        %vm707 = vcmp.le.f32.partialorder %v630, %v663
        %vm708 = vcmp.le.f32.partialorder %v631, %v665
        %vm709 = vcmp.le.f32.partialorder %v632, %v667
        %vm710 = vcmp.le.f32.partialorder %v633, %v669
        %vm711 = vcmp.le.f32.partialorder %v634, %v671
        %vm712 = vcmp.le.f32.partialorder %v635, %v673
        %vm713 = vcmp.le.f32.partialorder %v636, %v675
        %vm714 = vcmp.le.f32.partialorder %v637, %v677
        %vm715 = vcmp.le.f32.partialorder %v638, %v679
        %vm716 = vcmp.le.f32.partialorder %v639, %v681
        %vm717 = vcmp.le.f32.partialorder %v640, %v683
        %vm718 = vcmp.le.f32.partialorder %v641, %v685
        %vm719 = vcmp.le.f32.partialorder %v642, %v687
        %vm720 = vcmp.le.f32.partialorder %v643, %v689
        %vm721 = vcmp.le.f32.partialorder %v644, %v691
        %vm722 = vcmp.le.f32.partialorder %v645, %v693
        %vm723 = vcmp.le.f32.partialorder %v646, %v695
        %vm724 = vcmp.le.f32.partialorder %v647, %v697
        %vm725 = vcmp.le.f32.partialorder %v648, %v699
        %vm726 = vcmp.le.f32.partialorder %v649, %v701
        %v727 = vsel %vm702, %v651, 128
        %v728 = vsel %vm703, %v651, 128
        %v729 = vsel %vm704, %v651, 128
        %v730 = vsel %vm705, %v651, 128
        %v731 = vsel %vm706, %v651, 128
        %v732 = vsel %vm707, %v651, 128
        %v733 = vsel %vm708, %v651, 128
        %v734 = vsel %vm709, %v651, 128
        %v735 = vsel %vm710, %v651, 128
        %v736 = vsel %vm711, %v651, 128
        %v737 = vsel %vm712, %v651, 128
        %v738 = vsel %vm713, %v651, 128
        %v739 = vsel %vm714, %v651, 128
        %v740 = vsel %vm715, %v651, 128
        %v741 = vsel %vm716, %v651, 128
        %v742 = vsel %vm717, %v651, 128
        %v743 = vsel %vm718, %v651, 128
        %v744 = vsel %vm719, %v651, 128
        %v745 = vsel %vm720, %v651, 128
        %v746 = vsel %vm721, %v651, 128
        %v747 = vsel %vm722, %v651, 128
        %v748 = vsel %vm723, %v651, 128
        %v749 = vsel %vm724, %v651, 128
        %v750 = vsel %vm725, %v651, 128
        %v751 = vsel %vm726, %v651, 128
        %v752 = vand.u32 %v727, 65535
        %v753 = vshra.s32 %v727, 16
        %v754 = vcvt.s32.f32 %v752
        %v755 = vcvt.s32.f32 %v753
        %756 = vmin.xlane.f32.xlu0 %v755
        %v757 = vpop.xlane.xlu0 %756
        %vm758 = vcmp.eq.f32.partialorder %v755, %v757
        %v759 = vsel %vm758, %v754, inf
        %760 = vmin.xlane.f32.xlu0 %v759
        %v761 = vpop.xlane.xlu0 %760
        %v762 = vcvt.f32.s32 %v761
        %v763 = vcvt.f32.s32 %v757
        %v764 = vshll.u32 %v763, 16
        %v765 = vadd.s32 %v764, %v762
        %v766 = vand.u32 %v728, 65535
        %v767 = vshra.s32 %v728, 16
        %v768 = vcvt.s32.f32 %v766
        %v769 = vcvt.s32.f32 %v767
        %770 = vmin.xlane.f32.xlu0 %v769
        %v771 = vpop.xlane.xlu0 %770
        %vm772 = vcmp.eq.f32.partialorder %v769, %v771
        %v773 = vsel %vm772, %v768, inf
        %774 = vmin.xlane.f32.xlu0 %v773
        %v775 = vpop.xlane.xlu0 %774
        %v776 = vcvt.f32.s32 %v775
        %v777 = vcvt.f32.s32 %v771
        %v778 = vshll.u32 %v777, 16
        %v779 = vadd.s32 %v778, %v776
        %v780 = vand.u32 %v729, 65535
        %v781 = vshra.s32 %v729, 16
        %v782 = vcvt.s32.f32 %v780
        %v783 = vcvt.s32.f32 %v781
        %784 = vmin.xlane.f32.xlu0 %v783
        %v785 = vpop.xlane.xlu0 %784
        %vm786 = vcmp.eq.f32.partialorder %v783, %v785
        %v787 = vsel %vm786, %v782, inf
        %788 = vmin.xlane.f32.xlu0 %v787
        %v789 = vpop.xlane.xlu0 %788
        %v790 = vcvt.f32.s32 %v789
        %v791 = vcvt.f32.s32 %v785
        %v792 = vshll.u32 %v791, 16
        %v793 = vadd.s32 %v792, %v790
        %v794 = vand.u32 %v730, 65535
        %v795 = vshra.s32 %v730, 16
        %v796 = vcvt.s32.f32 %v794
        %v797 = vcvt.s32.f32 %v795
        %798 = vmin.xlane.f32.xlu0 %v797
        %v799 = vpop.xlane.xlu0 %798
        %vm800 = vcmp.eq.f32.partialorder %v797, %v799
        %v801 = vsel %vm800, %v796, inf
        %802 = vmin.xlane.f32.xlu0 %v801
        %v803 = vpop.xlane.xlu0 %802
        %v804 = vcvt.f32.s32 %v803
        %v805 = vcvt.f32.s32 %v799
        %v806 = vshll.u32 %v805, 16
        %v807 = vadd.s32 %v806, %v804
        %v808 = vand.u32 %v731, 65535
        %v809 = vshra.s32 %v731, 16
        %v810 = vcvt.s32.f32 %v808
        %v811 = vcvt.s32.f32 %v809
        %812 = vmin.xlane.f32.xlu0 %v811
        %v813 = vpop.xlane.xlu0 %812
        %vm814 = vcmp.eq.f32.partialorder %v811, %v813
        %v815 = vsel %vm814, %v810, inf
        %816 = vmin.xlane.f32.xlu0 %v815
        %v817 = vpop.xlane.xlu0 %816
        %v818 = vcvt.f32.s32 %v817
        %v819 = vcvt.f32.s32 %v813
        %v820 = vshll.u32 %v819, 16
        %v821 = vadd.s32 %v820, %v818
        %v822 = vand.u32 %v732, 65535
        %v823 = vshra.s32 %v732, 16
        %v824 = vcvt.s32.f32 %v822
        %v825 = vcvt.s32.f32 %v823
        %826 = vmin.xlane.f32.xlu0 %v825
        %v827 = vpop.xlane.xlu0 %826
        %vm828 = vcmp.eq.f32.partialorder %v825, %v827
        %v829 = vsel %vm828, %v824, inf
        %830 = vmin.xlane.f32.xlu0 %v829
        %v831 = vpop.xlane.xlu0 %830
        %v832 = vcvt.f32.s32 %v831
        %v833 = vcvt.f32.s32 %v827
        %v834 = vshll.u32 %v833, 16
        %v835 = vadd.s32 %v834, %v832
        %v836 = vand.u32 %v733, 65535
        %v837 = vshra.s32 %v733, 16
        %v838 = vcvt.s32.f32 %v836
        %v839 = vcvt.s32.f32 %v837
        %840 = vmin.xlane.f32.xlu0 %v839
        %v841 = vpop.xlane.xlu0 %840
        %vm842 = vcmp.eq.f32.partialorder %v839, %v841
        %v843 = vsel %vm842, %v838, inf
        %844 = vmin.xlane.f32.xlu0 %v843
        %v845 = vpop.xlane.xlu0 %844
        %v846 = vcvt.f32.s32 %v845
        %v847 = vcvt.f32.s32 %v841
        %v848 = vshll.u32 %v847, 16
        %v849 = vadd.s32 %v848, %v846
        %v850 = vand.u32 %v734, 65535
        %v851 = vshra.s32 %v734, 16
        %v852 = vcvt.s32.f32 %v850
        %v853 = vcvt.s32.f32 %v851
        %854 = vmin.xlane.f32.xlu0 %v853
        %v855 = vpop.xlane.xlu0 %854
        %vm856 = vcmp.eq.f32.partialorder %v853, %v855
        %v857 = vsel %vm856, %v852, inf
        %858 = vmin.xlane.f32.xlu0 %v857
        %v859 = vpop.xlane.xlu0 %858
        %v860 = vcvt.f32.s32 %v859
        %v861 = vcvt.f32.s32 %v855
        %v862 = vshll.u32 %v861, 16
        %v863 = vadd.s32 %v862, %v860
        %v864 = vand.u32 %v735, 65535
        %v865 = vshra.s32 %v735, 16
        %v866 = vcvt.s32.f32 %v864
        %v867 = vcvt.s32.f32 %v865
        %868 = vmin.xlane.f32.xlu0 %v867
        %v869 = vpop.xlane.xlu0 %868
        %vm870 = vcmp.eq.f32.partialorder %v867, %v869
        %v871 = vsel %vm870, %v866, inf
        %872 = vmin.xlane.f32.xlu0 %v871
        %v873 = vpop.xlane.xlu0 %872
        %v874 = vcvt.f32.s32 %v873
        %v875 = vcvt.f32.s32 %v869
        %v876 = vshll.u32 %v875, 16
        %v877 = vadd.s32 %v876, %v874
        %v878 = vand.u32 %v736, 65535
        %v879 = vshra.s32 %v736, 16
        %v880 = vcvt.s32.f32 %v878
        %v881 = vcvt.s32.f32 %v879
        %882 = vmin.xlane.f32.xlu0 %v881
        %v883 = vpop.xlane.xlu0 %882
        %vm884 = vcmp.eq.f32.partialorder %v881, %v883
        %v885 = vsel %vm884, %v880, inf
        %886 = vmin.xlane.f32.xlu0 %v885
        %v887 = vpop.xlane.xlu0 %886
        %v888 = vcvt.f32.s32 %v887
        %v889 = vcvt.f32.s32 %v883
        %v890 = vshll.u32 %v889, 16
        %v891 = vadd.s32 %v890, %v888
        %v892 = vand.u32 %v737, 65535
        %v893 = vshra.s32 %v737, 16
        %v894 = vcvt.s32.f32 %v892
        %v895 = vcvt.s32.f32 %v893
        %896 = vmin.xlane.f32.xlu0 %v895
        %v897 = vpop.xlane.xlu0 %896
        %vm898 = vcmp.eq.f32.partialorder %v895, %v897
        %v899 = vsel %vm898, %v894, inf
        %900 = vmin.xlane.f32.xlu0 %v899
        %v901 = vpop.xlane.xlu0 %900
        %v902 = vcvt.f32.s32 %v901
        %v903 = vcvt.f32.s32 %v897
        %v904 = vshll.u32 %v903, 16
        %v905 = vadd.s32 %v904, %v902
        %v906 = vand.u32 %v738, 65535
        %v907 = vshra.s32 %v738, 16
        %v908 = vcvt.s32.f32 %v906
        %v909 = vcvt.s32.f32 %v907
        %910 = vmin.xlane.f32.xlu0 %v909
        %v911 = vpop.xlane.xlu0 %910
        %vm912 = vcmp.eq.f32.partialorder %v909, %v911
        %v913 = vsel %vm912, %v908, inf
        %914 = vmin.xlane.f32.xlu0 %v913
        %v915 = vpop.xlane.xlu0 %914
        %v916 = vcvt.f32.s32 %v915
        %v917 = vcvt.f32.s32 %v911
        %v918 = vshll.u32 %v917, 16
        %v919 = vadd.s32 %v918, %v916
        %v920 = vand.u32 %v739, 65535
        %v921 = vshra.s32 %v739, 16
        %v922 = vcvt.s32.f32 %v920
        %v923 = vcvt.s32.f32 %v921
        %924 = vmin.xlane.f32.xlu0 %v923
        %v925 = vpop.xlane.xlu0 %924
        %vm926 = vcmp.eq.f32.partialorder %v923, %v925
        %v927 = vsel %vm926, %v922, inf
        %928 = vmin.xlane.f32.xlu0 %v927
        %v929 = vpop.xlane.xlu0 %928
        %v930 = vcvt.f32.s32 %v929
        %v931 = vcvt.f32.s32 %v925
        %v932 = vshll.u32 %v931, 16
        %v933 = vadd.s32 %v932, %v930
        %v934 = vand.u32 %v740, 65535
        %v935 = vshra.s32 %v740, 16
        %v936 = vcvt.s32.f32 %v934
        %v937 = vcvt.s32.f32 %v935
        %938 = vmin.xlane.f32.xlu0 %v937
        %v939 = vpop.xlane.xlu0 %938
        %vm940 = vcmp.eq.f32.partialorder %v937, %v939
        %v941 = vsel %vm940, %v936, inf
        %942 = vmin.xlane.f32.xlu0 %v941
        %v943 = vpop.xlane.xlu0 %942
        %v944 = vcvt.f32.s32 %v943
        %v945 = vcvt.f32.s32 %v939
        %v946 = vshll.u32 %v945, 16
        %v947 = vadd.s32 %v946, %v944
        %v948 = vand.u32 %v741, 65535
        %v949 = vshra.s32 %v741, 16
        %v950 = vcvt.s32.f32 %v948
        %v951 = vcvt.s32.f32 %v949
        %952 = vmin.xlane.f32.xlu0 %v951
        %v953 = vpop.xlane.xlu0 %952
        %vm954 = vcmp.eq.f32.partialorder %v951, %v953
        %v955 = vsel %vm954, %v950, inf
        %956 = vmin.xlane.f32.xlu0 %v955
        %v957 = vpop.xlane.xlu0 %956
        %v958 = vcvt.f32.s32 %v957
        %v959 = vcvt.f32.s32 %v953
        %v960 = vshll.u32 %v959, 16
        %v961 = vadd.s32 %v960, %v958
        %v962 = vand.u32 %v742, 65535
        %v963 = vshra.s32 %v742, 16
        %v964 = vcvt.s32.f32 %v962
        %v965 = vcvt.s32.f32 %v963
        %966 = vmin.xlane.f32.xlu0 %v965
        %v967 = vpop.xlane.xlu0 %966
        %vm968 = vcmp.eq.f32.partialorder %v965, %v967
        %v969 = vsel %vm968, %v964, inf
        %970 = vmin.xlane.f32.xlu0 %v969
        %v971 = vpop.xlane.xlu0 %970
        %v972 = vcvt.f32.s32 %v971
        %v973 = vcvt.f32.s32 %v967
        %v974 = vshll.u32 %v973, 16
        %v975 = vadd.s32 %v974, %v972
        %v976 = vand.u32 %v743, 65535
        %v977 = vshra.s32 %v743, 16
        %v978 = vcvt.s32.f32 %v976
        %v979 = vcvt.s32.f32 %v977
        %980 = vmin.xlane.f32.xlu0 %v979
        %v981 = vpop.xlane.xlu0 %980
        %vm982 = vcmp.eq.f32.partialorder %v979, %v981
        %v983 = vsel %vm982, %v978, inf
        %984 = vmin.xlane.f32.xlu0 %v983
        %v985 = vpop.xlane.xlu0 %984
        %v986 = vcvt.f32.s32 %v985
        %v987 = vcvt.f32.s32 %v981
        %v988 = vshll.u32 %v987, 16
        %v989 = vadd.s32 %v988, %v986
        %v990 = vand.u32 %v744, 65535
        %v991 = vshra.s32 %v744, 16
        %v992 = vcvt.s32.f32 %v990
        %v993 = vcvt.s32.f32 %v991
        %994 = vmin.xlane.f32.xlu0 %v993
        %v995 = vpop.xlane.xlu0 %994
        %vm996 = vcmp.eq.f32.partialorder %v993, %v995
        %v997 = vsel %vm996, %v992, inf
        %998 = vmin.xlane.f32.xlu0 %v997
        %v999 = vpop.xlane.xlu0 %998
        %v1000 = vcvt.f32.s32 %v999
        %v1001 = vcvt.f32.s32 %v995
        %v1002 = vshll.u32 %v1001, 16
        %v1003 = vadd.s32 %v1002, %v1000
        %v1004 = vand.u32 %v745, 65535
        %v1005 = vshra.s32 %v745, 16
        %v1006 = vcvt.s32.f32 %v1004
        %v1007 = vcvt.s32.f32 %v1005
        %1008 = vmin.xlane.f32.xlu0 %v1007
        %v1009 = vpop.xlane.xlu0 %1008
        %vm1010 = vcmp.eq.f32.partialorder %v1007, %v1009
        %v1011 = vsel %vm1010, %v1006, inf
        %1012 = vmin.xlane.f32.xlu0 %v1011
        %v1013 = vpop.xlane.xlu0 %1012
        %v1014 = vcvt.f32.s32 %v1013
        %v1015 = vcvt.f32.s32 %v1009
        %v1016 = vshll.u32 %v1015, 16
        %v1017 = vadd.s32 %v1016, %v1014
        %v1018 = vand.u32 %v746, 65535
        %v1019 = vshra.s32 %v746, 16
        %v1020 = vcvt.s32.f32 %v1018
        %v1021 = vcvt.s32.f32 %v1019
        %1022 = vmin.xlane.f32.xlu0 %v1021
        %v1023 = vpop.xlane.xlu0 %1022
        %vm1024 = vcmp.eq.f32.partialorder %v1021, %v1023
        %v1025 = vsel %vm1024, %v1020, inf
        %1026 = vmin.xlane.f32.xlu0 %v1025
        %v1027 = vpop.xlane.xlu0 %1026
        %v1028 = vcvt.f32.s32 %v1027
        %v1029 = vcvt.f32.s32 %v1023
        %v1030 = vshll.u32 %v1029, 16
        %v1031 = vadd.s32 %v1030, %v1028
        %v1032 = vand.u32 %v747, 65535
        %v1033 = vshra.s32 %v747, 16
        %v1034 = vcvt.s32.f32 %v1032
        %v1035 = vcvt.s32.f32 %v1033
        %1036 = vmin.xlane.f32.xlu0 %v1035
        %v1037 = vpop.xlane.xlu0 %1036
        %vm1038 = vcmp.eq.f32.partialorder %v1035, %v1037
        %v1039 = vsel %vm1038, %v1034, inf
        %1040 = vmin.xlane.f32.xlu0 %v1039
        %v1041 = vpop.xlane.xlu0 %1040
        %v1042 = vcvt.f32.s32 %v1041
        %v1043 = vcvt.f32.s32 %v1037
        %v1044 = vshll.u32 %v1043, 16
        %v1045 = vadd.s32 %v1044, %v1042
        %v1046 = vand.u32 %v748, 65535
        %v1047 = vshra.s32 %v748, 16
        %v1048 = vcvt.s32.f32 %v1046
        %v1049 = vcvt.s32.f32 %v1047
        %1050 = vmin.xlane.f32.xlu0 %v1049
        %v1051 = vpop.xlane.xlu0 %1050
        %vm1052 = vcmp.eq.f32.partialorder %v1049, %v1051
        %v1053 = vsel %vm1052, %v1048, inf
        %1054 = vmin.xlane.f32.xlu0 %v1053
        %v1055 = vpop.xlane.xlu0 %1054
        %v1056 = vcvt.f32.s32 %v1055
        %v1057 = vcvt.f32.s32 %v1051
        %v1058 = vshll.u32 %v1057, 16
        %v1059 = vadd.s32 %v1058, %v1056
        %v1060 = vand.u32 %v749, 65535
        %v1061 = vshra.s32 %v749, 16
        %v1062 = vcvt.s32.f32 %v1060
        %v1063 = vcvt.s32.f32 %v1061
        %1064 = vmin.xlane.f32.xlu0 %v1063
        %v1065 = vpop.xlane.xlu0 %1064
        %vm1066 = vcmp.eq.f32.partialorder %v1063, %v1065
        %v1067 = vsel %vm1066, %v1062, inf
        %1068 = vmin.xlane.f32.xlu0 %v1067
        %v1069 = vpop.xlane.xlu0 %1068
        %v1070 = vcvt.f32.s32 %v1069
        %v1071 = vcvt.f32.s32 %v1065
        %v1072 = vshll.u32 %v1071, 16
        %v1073 = vadd.s32 %v1072, %v1070
        %v1074 = vand.u32 %v750, 65535
        %v1075 = vshra.s32 %v750, 16
        %v1076 = vcvt.s32.f32 %v1074
        %v1077 = vcvt.s32.f32 %v1075
        %1078 = vmin.xlane.f32.xlu0 %v1077
        %v1079 = vpop.xlane.xlu0 %1078
        %vm1080 = vcmp.eq.f32.partialorder %v1077, %v1079
        %v1081 = vsel %vm1080, %v1076, inf
        %1082 = vmin.xlane.f32.xlu0 %v1081
        %v1083 = vpop.xlane.xlu0 %1082
        %v1084 = vcvt.f32.s32 %v1083
        %v1085 = vcvt.f32.s32 %v1079
        %v1086 = vshll.u32 %v1085, 16
        %v1087 = vadd.s32 %v1086, %v1084
        %v1088 = vand.u32 %v751, 65535
        %v1089 = vshra.s32 %v751, 16
        %v1090 = vcvt.s32.f32 %v1088
        %v1091 = vcvt.s32.f32 %v1089
        %1092 = vmin.xlane.f32.xlu0 %v1091
        %v1093 = vpop.xlane.xlu0 %1092
        %vm1094 = vcmp.eq.f32.partialorder %v1091, %v1093
        %v1095 = vsel %vm1094, %v1090, inf
        %1096 = vmin.xlane.f32.xlu0 %v1095
        %v1097 = vpop.xlane.xlu0 %1096
        %v1098 = vcvt.f32.s32 %v1097
        %v1099 = vcvt.f32.s32 %v1093
        %v1100 = vshll.u32 %v1099, 16
        %v1101 = vadd.s32 %v1100, %v1098
        %v1102 = vlaneseq
        %v1103 = vshrl.u32 %v1102, 7
        %v1104 = vsub.s32 0, %v1103
        %v1105 = vrot.slane %v765, %v1104
        %v1106 = vlaneseq
        %v1107 = vshrl.u32 %v1106, 7
        %v1108 = vsub.s32 1, %v1107
        %v1109 = vrot.slane %v765, %v1108
        %v1110 = vlaneseq
        %v1111 = vshrl.u32 %v1110, 7
        %v1112 = vsub.s32 2, %v1111
        %v1113 = vrot.slane %v765, %v1112
        %v1114 = vlaneseq
        %v1115 = vshrl.u32 %v1114, 7
        %v1116 = vsub.s32 3, %v1115
        %v1117 = vrot.slane %v765, %v1116
        %v1118 = vlaneseq
        %v1119 = vshrl.u32 %v1118, 7
        %v1120 = vsub.s32 4, %v1119
        %v1121 = vrot.slane %v765, %v1120
        %v1122 = vlaneseq
        %v1123 = vshrl.u32 %v1122, 7
        %v1124 = vsub.s32 5, %v1123
        %v1125 = vrot.slane %v765, %v1124
        %v1126 = vlaneseq
        %v1127 = vshrl.u32 %v1126, 7
        %v1128 = vsub.s32 6, %v1127
        %v1129 = vrot.slane %v765, %v1128
        %v1130 = vlaneseq
        %v1131 = vshrl.u32 %v1130, 7
        %v1132 = vsub.s32 7, %v1131
        %v1133 = vrot.slane %v765, %v1132
        %v1134 = vlaneseq
        %v1135 = vshrl.u32 %v1134, 7
        %v1136 = vsub.s32 0, %v1135
        %v1137 = vrot.slane %v779, %v1136
        %v1138 = vlaneseq
        %v1139 = vshrl.u32 %v1138, 7
        %v1140 = vsub.s32 1, %v1139
        %v1141 = vrot.slane %v779, %v1140
        %v1142 = vlaneseq
        %v1143 = vshrl.u32 %v1142, 7
        %v1144 = vsub.s32 2, %v1143
        %v1145 = vrot.slane %v779, %v1144
        %v1146 = vlaneseq
        %v1147 = vshrl.u32 %v1146, 7
        %v1148 = vsub.s32 3, %v1147
        %v1149 = vrot.slane %v779, %v1148
        %v1150 = vlaneseq
        %v1151 = vshrl.u32 %v1150, 7
        %v1152 = vsub.s32 4, %v1151
        %v1153 = vrot.slane %v779, %v1152
        %v1154 = vlaneseq
        %v1155 = vshrl.u32 %v1154, 7
        %v1156 = vsub.s32 5, %v1155
        %v1157 = vrot.slane %v779, %v1156
        %v1158 = vlaneseq
        %v1159 = vshrl.u32 %v1158, 7
        %v1160 = vsub.s32 6, %v1159
        %v1161 = vrot.slane %v779, %v1160
        %v1162 = vlaneseq
        %v1163 = vshrl.u32 %v1162, 7
        %v1164 = vsub.s32 7, %v1163
        %v1165 = vrot.slane %v779, %v1164
        %v1166 = vlaneseq
        %v1167 = vshrl.u32 %v1166, 7
        %v1168 = vsub.s32 0, %v1167
        %v1169 = vrot.slane %v793, %v1168
        %v1170 = vlaneseq
        %v1171 = vshrl.u32 %v1170, 7
        %v1172 = vsub.s32 1, %v1171
        %v1173 = vrot.slane %v793, %v1172
        %v1174 = vlaneseq
        %v1175 = vshrl.u32 %v1174, 7
        %v1176 = vsub.s32 2, %v1175
        %v1177 = vrot.slane %v793, %v1176
        %v1178 = vlaneseq
        %v1179 = vshrl.u32 %v1178, 7
        %v1180 = vsub.s32 3, %v1179
        %v1181 = vrot.slane %v793, %v1180
        %v1182 = vlaneseq
        %v1183 = vshrl.u32 %v1182, 7
        %v1184 = vsub.s32 4, %v1183
        %v1185 = vrot.slane %v793, %v1184
        %v1186 = vlaneseq
        %v1187 = vshrl.u32 %v1186, 7
        %v1188 = vsub.s32 5, %v1187
        %v1189 = vrot.slane %v793, %v1188
        %v1190 = vlaneseq
        %v1191 = vshrl.u32 %v1190, 7
        %v1192 = vsub.s32 6, %v1191
        %v1193 = vrot.slane %v793, %v1192
        %v1194 = vlaneseq
        %v1195 = vshrl.u32 %v1194, 7
        %v1196 = vsub.s32 7, %v1195
        %v1197 = vrot.slane %v793, %v1196
        %v1198 = vlaneseq
        %v1199 = vshrl.u32 %v1198, 7
        %v1200 = vsub.s32 0, %v1199
        %v1201 = vrot.slane %v807, %v1200
        %v1202 = vlaneseq
        %v1203 = vshrl.u32 %v1202, 7
        %v1204 = vsub.s32 1, %v1203
        %v1205 = vrot.slane %v807, %v1204
        %v1206 = vlaneseq
        %v1207 = vshrl.u32 %v1206, 7
        %v1208 = vsub.s32 2, %v1207
        %v1209 = vrot.slane %v807, %v1208
        %v1210 = vlaneseq
        %v1211 = vshrl.u32 %v1210, 7
        %v1212 = vsub.s32 3, %v1211
        %v1213 = vrot.slane %v807, %v1212
        %v1214 = vlaneseq
        %v1215 = vshrl.u32 %v1214, 7
        %v1216 = vsub.s32 4, %v1215
        %v1217 = vrot.slane %v807, %v1216
        %v1218 = vlaneseq
        %v1219 = vshrl.u32 %v1218, 7
        %v1220 = vsub.s32 5, %v1219
        %v1221 = vrot.slane %v807, %v1220
        %v1222 = vlaneseq
        %v1223 = vshrl.u32 %v1222, 7
        %v1224 = vsub.s32 6, %v1223
        %v1225 = vrot.slane %v807, %v1224
        %v1226 = vlaneseq
        %v1227 = vshrl.u32 %v1226, 7
        %v1228 = vsub.s32 7, %v1227
        %v1229 = vrot.slane %v807, %v1228
        %v1230 = vlaneseq
        %v1231 = vshrl.u32 %v1230, 7
        %v1232 = vsub.s32 0, %v1231
        %v1233 = vrot.slane %v821, %v1232
        %v1234 = vlaneseq
        %v1235 = vshrl.u32 %v1234, 7
        %v1236 = vsub.s32 1, %v1235
        %v1237 = vrot.slane %v821, %v1236
        %v1238 = vlaneseq
        %v1239 = vshrl.u32 %v1238, 7
        %v1240 = vsub.s32 2, %v1239
        %v1241 = vrot.slane %v821, %v1240
        %v1242 = vlaneseq
        %v1243 = vshrl.u32 %v1242, 7
        %v1244 = vsub.s32 3, %v1243
        %v1245 = vrot.slane %v821, %v1244
        %v1246 = vlaneseq
        %v1247 = vshrl.u32 %v1246, 7
        %v1248 = vsub.s32 4, %v1247
        %v1249 = vrot.slane %v821, %v1248
        %v1250 = vlaneseq
        %v1251 = vshrl.u32 %v1250, 7
        %v1252 = vsub.s32 5, %v1251
        %v1253 = vrot.slane %v821, %v1252
        %v1254 = vlaneseq
        %v1255 = vshrl.u32 %v1254, 7
        %v1256 = vsub.s32 6, %v1255
        %v1257 = vrot.slane %v821, %v1256
        %v1258 = vlaneseq
        %v1259 = vshrl.u32 %v1258, 7
        %v1260 = vsub.s32 7, %v1259
        %v1261 = vrot.slane %v821, %v1260
        %v1262 = vlaneseq
        %v1263 = vshrl.u32 %v1262, 7
        %v1264 = vsub.s32 0, %v1263
        %v1265 = vrot.slane %v835, %v1264
        %v1266 = vlaneseq
        %v1267 = vshrl.u32 %v1266, 7
        %v1268 = vsub.s32 1, %v1267
        %v1269 = vrot.slane %v835, %v1268
        %v1270 = vlaneseq
        %v1271 = vshrl.u32 %v1270, 7
        %v1272 = vsub.s32 2, %v1271
        %v1273 = vrot.slane %v835, %v1272
        %v1274 = vlaneseq
        %v1275 = vshrl.u32 %v1274, 7
        %v1276 = vsub.s32 3, %v1275
        %v1277 = vrot.slane %v835, %v1276
        %v1278 = vlaneseq
        %v1279 = vshrl.u32 %v1278, 7
        %v1280 = vsub.s32 4, %v1279
        %v1281 = vrot.slane %v835, %v1280
        %v1282 = vlaneseq
        %v1283 = vshrl.u32 %v1282, 7
        %v1284 = vsub.s32 5, %v1283
        %v1285 = vrot.slane %v835, %v1284
        %v1286 = vlaneseq
        %v1287 = vshrl.u32 %v1286, 7
        %v1288 = vsub.s32 6, %v1287
        %v1289 = vrot.slane %v835, %v1288
        %v1290 = vlaneseq
        %v1291 = vshrl.u32 %v1290, 7
        %v1292 = vsub.s32 7, %v1291
        %v1293 = vrot.slane %v835, %v1292
        %v1294 = vlaneseq
        %v1295 = vshrl.u32 %v1294, 7
        %v1296 = vsub.s32 0, %v1295
        %v1297 = vrot.slane %v849, %v1296
        %v1298 = vlaneseq
        %v1299 = vshrl.u32 %v1298, 7
        %v1300 = vsub.s32 1, %v1299
        %v1301 = vrot.slane %v849, %v1300
        %v1302 = vlaneseq
        %v1303 = vshrl.u32 %v1302, 7
        %v1304 = vsub.s32 2, %v1303
        %v1305 = vrot.slane %v849, %v1304
        %v1306 = vlaneseq
        %v1307 = vshrl.u32 %v1306, 7
        %v1308 = vsub.s32 3, %v1307
        %v1309 = vrot.slane %v849, %v1308
        %v1310 = vlaneseq
        %v1311 = vshrl.u32 %v1310, 7
        %v1312 = vsub.s32 4, %v1311
        %v1313 = vrot.slane %v849, %v1312
        %v1314 = vlaneseq
        %v1315 = vshrl.u32 %v1314, 7
        %v1316 = vsub.s32 5, %v1315
        %v1317 = vrot.slane %v849, %v1316
        %v1318 = vlaneseq
        %v1319 = vshrl.u32 %v1318, 7
        %v1320 = vsub.s32 6, %v1319
        %v1321 = vrot.slane %v849, %v1320
        %v1322 = vlaneseq
        %v1323 = vshrl.u32 %v1322, 7
        %v1324 = vsub.s32 7, %v1323
        %v1325 = vrot.slane %v849, %v1324
        %v1326 = vlaneseq
        %v1327 = vshrl.u32 %v1326, 7
        %v1328 = vsub.s32 0, %v1327
        %v1329 = vrot.slane %v863, %v1328
        %v1330 = vlaneseq
        %v1331 = vshrl.u32 %v1330, 7
        %v1332 = vsub.s32 1, %v1331
        %v1333 = vrot.slane %v863, %v1332
        %v1334 = vlaneseq
        %v1335 = vshrl.u32 %v1334, 7
        %v1336 = vsub.s32 2, %v1335
        %v1337 = vrot.slane %v863, %v1336
        %v1338 = vlaneseq
        %v1339 = vshrl.u32 %v1338, 7
        %v1340 = vsub.s32 3, %v1339
        %v1341 = vrot.slane %v863, %v1340
        %v1342 = vlaneseq
        %v1343 = vshrl.u32 %v1342, 7
        %v1344 = vsub.s32 4, %v1343
        %v1345 = vrot.slane %v863, %v1344
        %v1346 = vlaneseq
        %v1347 = vshrl.u32 %v1346, 7
        %v1348 = vsub.s32 5, %v1347
        %v1349 = vrot.slane %v863, %v1348
        %v1350 = vlaneseq
        %v1351 = vshrl.u32 %v1350, 7
        %v1352 = vsub.s32 6, %v1351
        %v1353 = vrot.slane %v863, %v1352
        %v1354 = vlaneseq
        %v1355 = vshrl.u32 %v1354, 7
        %v1356 = vsub.s32 7, %v1355
        %v1357 = vrot.slane %v863, %v1356
        %v1358 = vlaneseq
        %v1359 = vshrl.u32 %v1358, 7
        %v1360 = vsub.s32 0, %v1359
        %v1361 = vrot.slane %v877, %v1360
        %v1362 = vlaneseq
        %v1363 = vshrl.u32 %v1362, 7
        %v1364 = vsub.s32 1, %v1363
        %v1365 = vrot.slane %v877, %v1364
        %v1366 = vlaneseq
        %v1367 = vshrl.u32 %v1366, 7
        %v1368 = vsub.s32 2, %v1367
        %v1369 = vrot.slane %v877, %v1368
        %v1370 = vlaneseq
        %v1371 = vshrl.u32 %v1370, 7
        %v1372 = vsub.s32 3, %v1371
        %v1373 = vrot.slane %v877, %v1372
        %v1374 = vlaneseq
        %v1375 = vshrl.u32 %v1374, 7
        %v1376 = vsub.s32 4, %v1375
        %v1377 = vrot.slane %v877, %v1376
        %v1378 = vlaneseq
        %v1379 = vshrl.u32 %v1378, 7
        %v1380 = vsub.s32 5, %v1379
        %v1381 = vrot.slane %v877, %v1380
        %v1382 = vlaneseq
        %v1383 = vshrl.u32 %v1382, 7
        %v1384 = vsub.s32 6, %v1383
        %v1385 = vrot.slane %v877, %v1384
        %v1386 = vlaneseq
        %v1387 = vshrl.u32 %v1386, 7
        %v1388 = vsub.s32 7, %v1387
        %v1389 = vrot.slane %v877, %v1388
        %v1390 = vlaneseq
        %v1391 = vshrl.u32 %v1390, 7
        %v1392 = vsub.s32 0, %v1391
        %v1393 = vrot.slane %v891, %v1392
        %v1394 = vlaneseq
        %v1395 = vshrl.u32 %v1394, 7
        %v1396 = vsub.s32 1, %v1395
        %v1397 = vrot.slane %v891, %v1396
        %v1398 = vlaneseq
        %v1399 = vshrl.u32 %v1398, 7
        %v1400 = vsub.s32 2, %v1399
        %v1401 = vrot.slane %v891, %v1400
        %v1402 = vlaneseq
        %v1403 = vshrl.u32 %v1402, 7
        %v1404 = vsub.s32 3, %v1403
        %v1405 = vrot.slane %v891, %v1404
        %v1406 = vlaneseq
        %v1407 = vshrl.u32 %v1406, 7
        %v1408 = vsub.s32 4, %v1407
        %v1409 = vrot.slane %v891, %v1408
        %v1410 = vlaneseq
        %v1411 = vshrl.u32 %v1410, 7
        %v1412 = vsub.s32 5, %v1411
        %v1413 = vrot.slane %v891, %v1412
        %v1414 = vlaneseq
        %v1415 = vshrl.u32 %v1414, 7
        %v1416 = vsub.s32 6, %v1415
        %v1417 = vrot.slane %v891, %v1416
        %v1418 = vlaneseq
        %v1419 = vshrl.u32 %v1418, 7
        %v1420 = vsub.s32 7, %v1419
        %v1421 = vrot.slane %v891, %v1420
        %v1422 = vlaneseq
        %v1423 = vshrl.u32 %v1422, 7
        %v1424 = vsub.s32 0, %v1423
        %v1425 = vrot.slane %v905, %v1424
        %v1426 = vlaneseq
        %v1427 = vshrl.u32 %v1426, 7
        %v1428 = vsub.s32 1, %v1427
        %v1429 = vrot.slane %v905, %v1428
        %v1430 = vlaneseq
        %v1431 = vshrl.u32 %v1430, 7
        %v1432 = vsub.s32 2, %v1431
        %v1433 = vrot.slane %v905, %v1432
        %v1434 = vlaneseq
        %v1435 = vshrl.u32 %v1434, 7
        %v1436 = vsub.s32 3, %v1435
        %v1437 = vrot.slane %v905, %v1436
        %v1438 = vlaneseq
        %v1439 = vshrl.u32 %v1438, 7
        %v1440 = vsub.s32 4, %v1439
        %v1441 = vrot.slane %v905, %v1440
        %v1442 = vlaneseq
        %v1443 = vshrl.u32 %v1442, 7
        %v1444 = vsub.s32 5, %v1443
        %v1445 = vrot.slane %v905, %v1444
        %v1446 = vlaneseq
        %v1447 = vshrl.u32 %v1446, 7
        %v1448 = vsub.s32 6, %v1447
        %v1449 = vrot.slane %v905, %v1448
        %v1450 = vlaneseq
        %v1451 = vshrl.u32 %v1450, 7
        %v1452 = vsub.s32 7, %v1451
        %v1453 = vrot.slane %v905, %v1452
        %v1454 = vlaneseq
        %v1455 = vshrl.u32 %v1454, 7
        %v1456 = vsub.s32 0, %v1455
        %v1457 = vrot.slane %v919, %v1456
        %v1458 = vlaneseq
        %v1459 = vshrl.u32 %v1458, 7
        %v1460 = vsub.s32 1, %v1459
        %v1461 = vrot.slane %v919, %v1460
        %v1462 = vlaneseq
        %v1463 = vshrl.u32 %v1462, 7
        %v1464 = vsub.s32 2, %v1463
        %v1465 = vrot.slane %v919, %v1464
        %v1466 = vlaneseq
        %v1467 = vshrl.u32 %v1466, 7
        %v1468 = vsub.s32 3, %v1467
        %v1469 = vrot.slane %v919, %v1468
        %v1470 = vlaneseq
        %v1471 = vshrl.u32 %v1470, 7
        %v1472 = vsub.s32 4, %v1471
        %v1473 = vrot.slane %v919, %v1472
        %v1474 = vlaneseq
        %v1475 = vshrl.u32 %v1474, 7
        %v1476 = vsub.s32 5, %v1475
        %v1477 = vrot.slane %v919, %v1476
        %v1478 = vlaneseq
        %v1479 = vshrl.u32 %v1478, 7
        %v1480 = vsub.s32 6, %v1479
        %v1481 = vrot.slane %v919, %v1480
        %v1482 = vlaneseq
        %v1483 = vshrl.u32 %v1482, 7
        %v1484 = vsub.s32 7, %v1483
        %v1485 = vrot.slane %v919, %v1484
        %v1486 = vlaneseq
        %v1487 = vshrl.u32 %v1486, 7
        %v1488 = vsub.s32 0, %v1487
        %v1489 = vrot.slane %v933, %v1488
        %v1490 = vlaneseq
        %v1491 = vshrl.u32 %v1490, 7
        %v1492 = vsub.s32 1, %v1491
        %v1493 = vrot.slane %v933, %v1492
        %v1494 = vlaneseq
        %v1495 = vshrl.u32 %v1494, 7
        %v1496 = vsub.s32 2, %v1495
        %v1497 = vrot.slane %v933, %v1496
        %v1498 = vlaneseq
        %v1499 = vshrl.u32 %v1498, 7
        %v1500 = vsub.s32 3, %v1499
        %v1501 = vrot.slane %v933, %v1500
        %v1502 = vlaneseq
        %v1503 = vshrl.u32 %v1502, 7
        %v1504 = vsub.s32 4, %v1503
        %v1505 = vrot.slane %v933, %v1504
        %v1506 = vlaneseq
        %v1507 = vshrl.u32 %v1506, 7
        %v1508 = vsub.s32 5, %v1507
        %v1509 = vrot.slane %v933, %v1508
        %v1510 = vlaneseq
        %v1511 = vshrl.u32 %v1510, 7
        %v1512 = vsub.s32 6, %v1511
        %v1513 = vrot.slane %v933, %v1512
        %v1514 = vlaneseq
        %v1515 = vshrl.u32 %v1514, 7
        %v1516 = vsub.s32 7, %v1515
        %v1517 = vrot.slane %v933, %v1516
        %v1518 = vlaneseq
        %v1519 = vshrl.u32 %v1518, 7
        %v1520 = vsub.s32 0, %v1519
        %v1521 = vrot.slane %v947, %v1520
        %v1522 = vlaneseq
        %v1523 = vshrl.u32 %v1522, 7
        %v1524 = vsub.s32 1, %v1523
        %v1525 = vrot.slane %v947, %v1524
        %v1526 = vlaneseq
        %v1527 = vshrl.u32 %v1526, 7
        %v1528 = vsub.s32 2, %v1527
        %v1529 = vrot.slane %v947, %v1528
        %v1530 = vlaneseq
        %v1531 = vshrl.u32 %v1530, 7
        %v1532 = vsub.s32 3, %v1531
        %v1533 = vrot.slane %v947, %v1532
        %v1534 = vlaneseq
        %v1535 = vshrl.u32 %v1534, 7
        %v1536 = vsub.s32 4, %v1535
        %v1537 = vrot.slane %v947, %v1536
        %v1538 = vlaneseq
        %v1539 = vshrl.u32 %v1538, 7
        %v1540 = vsub.s32 5, %v1539
        %v1541 = vrot.slane %v947, %v1540
        %v1542 = vlaneseq
        %v1543 = vshrl.u32 %v1542, 7
        %v1544 = vsub.s32 6, %v1543
        %v1545 = vrot.slane %v947, %v1544
        %v1546 = vlaneseq
        %v1547 = vshrl.u32 %v1546, 7
        %v1548 = vsub.s32 7, %v1547
        %v1549 = vrot.slane %v947, %v1548
        %v1550 = vlaneseq
        %v1551 = vshrl.u32 %v1550, 7
        %v1552 = vsub.s32 0, %v1551
        %v1553 = vrot.slane %v961, %v1552
        %v1554 = vlaneseq
        %v1555 = vshrl.u32 %v1554, 7
        %v1556 = vsub.s32 1, %v1555
        %v1557 = vrot.slane %v961, %v1556
        %v1558 = vlaneseq
        %v1559 = vshrl.u32 %v1558, 7
        %v1560 = vsub.s32 2, %v1559
        %v1561 = vrot.slane %v961, %v1560
        %v1562 = vlaneseq
        %v1563 = vshrl.u32 %v1562, 7
        %v1564 = vsub.s32 3, %v1563
        %v1565 = vrot.slane %v961, %v1564
        %v1566 = vlaneseq
        %v1567 = vshrl.u32 %v1566, 7
        %v1568 = vsub.s32 4, %v1567
        %v1569 = vrot.slane %v961, %v1568
        %v1570 = vlaneseq
        %v1571 = vshrl.u32 %v1570, 7
        %v1572 = vsub.s32 5, %v1571
        %v1573 = vrot.slane %v961, %v1572
        %v1574 = vlaneseq
        %v1575 = vshrl.u32 %v1574, 7
        %v1576 = vsub.s32 6, %v1575
        %v1577 = vrot.slane %v961, %v1576
        %v1578 = vlaneseq
        %v1579 = vshrl.u32 %v1578, 7
        %v1580 = vsub.s32 7, %v1579
        %v1581 = vrot.slane %v961, %v1580
        %v1582 = vlaneseq
        %v1583 = vshrl.u32 %v1582, 7
        %v1584 = vsub.s32 0, %v1583
        %v1585 = vrot.slane %v975, %v1584
        %v1586 = vlaneseq
        %v1587 = vshrl.u32 %v1586, 7
        %v1588 = vsub.s32 1, %v1587
        %v1589 = vrot.slane %v975, %v1588
        %v1590 = vlaneseq
        %v1591 = vshrl.u32 %v1590, 7
        %v1592 = vsub.s32 2, %v1591
        %v1593 = vrot.slane %v975, %v1592
        %v1594 = vlaneseq
        %v1595 = vshrl.u32 %v1594, 7
        %v1596 = vsub.s32 3, %v1595
        %v1597 = vrot.slane %v975, %v1596
        %v1598 = vlaneseq
        %v1599 = vshrl.u32 %v1598, 7
        %v1600 = vsub.s32 4, %v1599
        %v1601 = vrot.slane %v975, %v1600
        %v1602 = vlaneseq
        %v1603 = vshrl.u32 %v1602, 7
        %v1604 = vsub.s32 5, %v1603
        %v1605 = vrot.slane %v975, %v1604
        %v1606 = vlaneseq
        %v1607 = vshrl.u32 %v1606, 7
        %v1608 = vsub.s32 6, %v1607
        %v1609 = vrot.slane %v975, %v1608
        %v1610 = vlaneseq
        %v1611 = vshrl.u32 %v1610, 7
        %v1612 = vsub.s32 7, %v1611
        %v1613 = vrot.slane %v975, %v1612
        %v1614 = vlaneseq
        %v1615 = vshrl.u32 %v1614, 7
        %v1616 = vsub.s32 0, %v1615
        %v1617 = vrot.slane %v989, %v1616
        %v1618 = vlaneseq
        %v1619 = vshrl.u32 %v1618, 7
        %v1620 = vsub.s32 1, %v1619
        %v1621 = vrot.slane %v989, %v1620
        %v1622 = vlaneseq
        %v1623 = vshrl.u32 %v1622, 7
        %v1624 = vsub.s32 2, %v1623
        %v1625 = vrot.slane %v989, %v1624
        %v1626 = vlaneseq
        %v1627 = vshrl.u32 %v1626, 7
        %v1628 = vsub.s32 3, %v1627
        %v1629 = vrot.slane %v989, %v1628
        %v1630 = vlaneseq
        %v1631 = vshrl.u32 %v1630, 7
        %v1632 = vsub.s32 4, %v1631
        %v1633 = vrot.slane %v989, %v1632
        %v1634 = vlaneseq
        %v1635 = vshrl.u32 %v1634, 7
        %v1636 = vsub.s32 5, %v1635
        %v1637 = vrot.slane %v989, %v1636
        %v1638 = vlaneseq
        %v1639 = vshrl.u32 %v1638, 7
        %v1640 = vsub.s32 6, %v1639
        %v1641 = vrot.slane %v989, %v1640
        %v1642 = vlaneseq
        %v1643 = vshrl.u32 %v1642, 7
        %v1644 = vsub.s32 7, %v1643
        %v1645 = vrot.slane %v989, %v1644
        %v1646 = vlaneseq
        %v1647 = vshrl.u32 %v1646, 7
        %v1648 = vsub.s32 0, %v1647
        %v1649 = vrot.slane %v1003, %v1648
        %v1650 = vlaneseq
        %v1651 = vshrl.u32 %v1650, 7
        %v1652 = vsub.s32 1, %v1651
        %v1653 = vrot.slane %v1003, %v1652
        %v1654 = vlaneseq
        %v1655 = vshrl.u32 %v1654, 7
        %v1656 = vsub.s32 2, %v1655
        %v1657 = vrot.slane %v1003, %v1656
        %v1658 = vlaneseq
        %v1659 = vshrl.u32 %v1658, 7
        %v1660 = vsub.s32 3, %v1659
        %v1661 = vrot.slane %v1003, %v1660
        %v1662 = vlaneseq
        %v1663 = vshrl.u32 %v1662, 7
        %v1664 = vsub.s32 4, %v1663
        %v1665 = vrot.slane %v1003, %v1664
        %v1666 = vlaneseq
        %v1667 = vshrl.u32 %v1666, 7
        %v1668 = vsub.s32 5, %v1667
        %v1669 = vrot.slane %v1003, %v1668
        %v1670 = vlaneseq
        %v1671 = vshrl.u32 %v1670, 7
        %v1672 = vsub.s32 6, %v1671
        %v1673 = vrot.slane %v1003, %v1672
        %v1674 = vlaneseq
        %v1675 = vshrl.u32 %v1674, 7
        %v1676 = vsub.s32 7, %v1675
        %v1677 = vrot.slane %v1003, %v1676
        %v1678 = vlaneseq
        %v1679 = vshrl.u32 %v1678, 7
        %v1680 = vsub.s32 0, %v1679
        %v1681 = vrot.slane %v1017, %v1680
        %v1682 = vlaneseq
        %v1683 = vshrl.u32 %v1682, 7
        %v1684 = vsub.s32 1, %v1683
        %v1685 = vrot.slane %v1017, %v1684
        %v1686 = vlaneseq
        %v1687 = vshrl.u32 %v1686, 7
        %v1688 = vsub.s32 2, %v1687
        %v1689 = vrot.slane %v1017, %v1688
        %v1690 = vlaneseq
        %v1691 = vshrl.u32 %v1690, 7
        %v1692 = vsub.s32 3, %v1691
        %v1693 = vrot.slane %v1017, %v1692
        %v1694 = vlaneseq
        %v1695 = vshrl.u32 %v1694, 7
        %v1696 = vsub.s32 4, %v1695
        %v1697 = vrot.slane %v1017, %v1696
        %v1698 = vlaneseq
        %v1699 = vshrl.u32 %v1698, 7
        %v1700 = vsub.s32 5, %v1699
        %v1701 = vrot.slane %v1017, %v1700
        %v1702 = vlaneseq
        %v1703 = vshrl.u32 %v1702, 7
        %v1704 = vsub.s32 6, %v1703
        %v1705 = vrot.slane %v1017, %v1704
        %v1706 = vlaneseq
        %v1707 = vshrl.u32 %v1706, 7
        %v1708 = vsub.s32 7, %v1707
        %v1709 = vrot.slane %v1017, %v1708
        %v1710 = vlaneseq
        %v1711 = vshrl.u32 %v1710, 7
        %v1712 = vsub.s32 0, %v1711
        %v1713 = vrot.slane %v1031, %v1712
        %v1714 = vlaneseq
        %v1715 = vshrl.u32 %v1714, 7
        %v1716 = vsub.s32 1, %v1715
        %v1717 = vrot.slane %v1031, %v1716
        %v1718 = vlaneseq
        %v1719 = vshrl.u32 %v1718, 7
        %v1720 = vsub.s32 2, %v1719
        %v1721 = vrot.slane %v1031, %v1720
        %v1722 = vlaneseq
        %v1723 = vshrl.u32 %v1722, 7
        %v1724 = vsub.s32 3, %v1723
        %v1725 = vrot.slane %v1031, %v1724
        %v1726 = vlaneseq
        %v1727 = vshrl.u32 %v1726, 7
        %v1728 = vsub.s32 4, %v1727
        %v1729 = vrot.slane %v1031, %v1728
        %v1730 = vlaneseq
        %v1731 = vshrl.u32 %v1730, 7
        %v1732 = vsub.s32 5, %v1731
        %v1733 = vrot.slane %v1031, %v1732
        %v1734 = vlaneseq
        %v1735 = vshrl.u32 %v1734, 7
        %v1736 = vsub.s32 6, %v1735
        %v1737 = vrot.slane %v1031, %v1736
        %v1738 = vlaneseq
        %v1739 = vshrl.u32 %v1738, 7
        %v1740 = vsub.s32 7, %v1739
        %v1741 = vrot.slane %v1031, %v1740
        %v1742 = vlaneseq
        %v1743 = vshrl.u32 %v1742, 7
        %v1744 = vsub.s32 0, %v1743
        %v1745 = vrot.slane %v1045, %v1744
        %v1746 = vlaneseq
        %v1747 = vshrl.u32 %v1746, 7
        %v1748 = vsub.s32 1, %v1747
        %v1749 = vrot.slane %v1045, %v1748
        %v1750 = vlaneseq
        %v1751 = vshrl.u32 %v1750, 7
        %v1752 = vsub.s32 2, %v1751
        %v1753 = vrot.slane %v1045, %v1752
        %v1754 = vlaneseq
        %v1755 = vshrl.u32 %v1754, 7
        %v1756 = vsub.s32 3, %v1755
        %v1757 = vrot.slane %v1045, %v1756
        %v1758 = vlaneseq
        %v1759 = vshrl.u32 %v1758, 7
        %v1760 = vsub.s32 4, %v1759
        %v1761 = vrot.slane %v1045, %v1760
        %v1762 = vlaneseq
        %v1763 = vshrl.u32 %v1762, 7
        %v1764 = vsub.s32 5, %v1763
        %v1765 = vrot.slane %v1045, %v1764
        %v1766 = vlaneseq
        %v1767 = vshrl.u32 %v1766, 7
        %v1768 = vsub.s32 6, %v1767
        %v1769 = vrot.slane %v1045, %v1768
        %v1770 = vlaneseq
        %v1771 = vshrl.u32 %v1770, 7
        %v1772 = vsub.s32 7, %v1771
        %v1773 = vrot.slane %v1045, %v1772
        %v1774 = vlaneseq
        %v1775 = vshrl.u32 %v1774, 7
        %v1776 = vsub.s32 0, %v1775
        %v1777 = vrot.slane %v1059, %v1776
        %v1778 = vlaneseq
        %v1779 = vshrl.u32 %v1778, 7
        %v1780 = vsub.s32 1, %v1779
        %v1781 = vrot.slane %v1059, %v1780
        %v1782 = vlaneseq
        %v1783 = vshrl.u32 %v1782, 7
        %v1784 = vsub.s32 2, %v1783
        %v1785 = vrot.slane %v1059, %v1784
        %v1786 = vlaneseq
        %v1787 = vshrl.u32 %v1786, 7
        %v1788 = vsub.s32 3, %v1787
        %v1789 = vrot.slane %v1059, %v1788
        %v1790 = vlaneseq
        %v1791 = vshrl.u32 %v1790, 7
        %v1792 = vsub.s32 4, %v1791
        %v1793 = vrot.slane %v1059, %v1792
        %v1794 = vlaneseq
        %v1795 = vshrl.u32 %v1794, 7
        %v1796 = vsub.s32 5, %v1795
        %v1797 = vrot.slane %v1059, %v1796
        %v1798 = vlaneseq
        %v1799 = vshrl.u32 %v1798, 7
        %v1800 = vsub.s32 6, %v1799
        %v1801 = vrot.slane %v1059, %v1800
        %v1802 = vlaneseq
        %v1803 = vshrl.u32 %v1802, 7
        %v1804 = vsub.s32 7, %v1803
        %v1805 = vrot.slane %v1059, %v1804
        %v1806 = vlaneseq
        %v1807 = vshrl.u32 %v1806, 7
        %v1808 = vsub.s32 0, %v1807
        %v1809 = vrot.slane %v1073, %v1808
        %v1810 = vlaneseq
        %v1811 = vshrl.u32 %v1810, 7
        %v1812 = vsub.s32 1, %v1811
        %v1813 = vrot.slane %v1073, %v1812
        %v1814 = vlaneseq
        %v1815 = vshrl.u32 %v1814, 7
        %v1816 = vsub.s32 2, %v1815
        %v1817 = vrot.slane %v1073, %v1816
        %v1818 = vlaneseq
        %v1819 = vshrl.u32 %v1818, 7
        %v1820 = vsub.s32 3, %v1819
        %v1821 = vrot.slane %v1073, %v1820
        %v1822 = vlaneseq
        %v1823 = vshrl.u32 %v1822, 7
        %v1824 = vsub.s32 4, %v1823
        %v1825 = vrot.slane %v1073, %v1824
        %v1826 = vlaneseq
        %v1827 = vshrl.u32 %v1826, 7
        %v1828 = vsub.s32 5, %v1827
        %v1829 = vrot.slane %v1073, %v1828
        %v1830 = vlaneseq
        %v1831 = vshrl.u32 %v1830, 7
        %v1832 = vsub.s32 6, %v1831
        %v1833 = vrot.slane %v1073, %v1832
        %v1834 = vlaneseq
        %v1835 = vshrl.u32 %v1834, 7
        %v1836 = vsub.s32 7, %v1835
        %v1837 = vrot.slane %v1073, %v1836
        %v1838 = vlaneseq
        %v1839 = vshrl.u32 %v1838, 7
        %v1840 = vsub.s32 0, %v1839
        %v1841 = vrot.slane %v1087, %v1840
        %v1842 = vlaneseq
        %v1843 = vshrl.u32 %v1842, 7
        %v1844 = vsub.s32 1, %v1843
        %v1845 = vrot.slane %v1087, %v1844
        %v1846 = vlaneseq
        %v1847 = vshrl.u32 %v1846, 7
        %v1848 = vsub.s32 2, %v1847
        %v1849 = vrot.slane %v1087, %v1848
        %v1850 = vlaneseq
        %v1851 = vshrl.u32 %v1850, 7
        %v1852 = vsub.s32 3, %v1851
        %v1853 = vrot.slane %v1087, %v1852
        %v1854 = vlaneseq
        %v1855 = vshrl.u32 %v1854, 7
        %v1856 = vsub.s32 4, %v1855
        %v1857 = vrot.slane %v1087, %v1856
        %v1858 = vlaneseq
        %v1859 = vshrl.u32 %v1858, 7
        %v1860 = vsub.s32 5, %v1859
        %v1861 = vrot.slane %v1087, %v1860
        %v1862 = vlaneseq
        %v1863 = vshrl.u32 %v1862, 7
        %v1864 = vsub.s32 6, %v1863
        %v1865 = vrot.slane %v1087, %v1864
        %v1866 = vlaneseq
        %v1867 = vshrl.u32 %v1866, 7
        %v1868 = vsub.s32 7, %v1867
        %v1869 = vrot.slane %v1087, %v1868
        %v1870 = vlaneseq
        %v1871 = vshrl.u32 %v1870, 7
        %v1872 = vsub.s32 0, %v1871
        %v1873 = vrot.slane %v1101, %v1872
        %v1874 = vlaneseq
        %v1875 = vshrl.u32 %v1874, 7
        %v1876 = vsub.s32 1, %v1875
        %v1877 = vrot.slane %v1101, %v1876
        %v1878 = vlaneseq
        %v1879 = vshrl.u32 %v1878, 7
        %v1880 = vsub.s32 2, %v1879
        %v1881 = vrot.slane %v1101, %v1880
        %v1882 = vlaneseq
        %v1883 = vshrl.u32 %v1882, 7
        %v1884 = vsub.s32 3, %v1883
        %v1885 = vrot.slane %v1101, %v1884
        %v1886 = vlaneseq
        %v1887 = vshrl.u32 %v1886, 7
        %v1888 = vsub.s32 4, %v1887
        %v1889 = vrot.slane %v1101, %v1888
        %v1890 = vlaneseq
        %v1891 = vshrl.u32 %v1890, 7
        %v1892 = vsub.s32 5, %v1891
        %v1893 = vrot.slane %v1101, %v1892
        %v1894 = vlaneseq
        %v1895 = vshrl.u32 %v1894, 7
        %v1896 = vsub.s32 6, %v1895
        %v1897 = vrot.slane %v1101, %v1896
        %v1898 = vlaneseq
        %v1899 = vshrl.u32 %v1898, 7
        %v1900 = vsub.s32 7, %v1899
        %v1901 = vrot.slane %v1101, %v1900
        %v1902 = vcombine.low %v1105, %v1109
        %v1903 = vcombine.low %v1113, %v1117
        %v1904 = vcombine.low %v1121, %v1125
        %v1905 = vcombine.low %v1129, %v1133
        %v1907 = vunpack.c.l.s4 1966171168
        %v1908 = vunpack.c.0.s8 %v1907
        %v1909 = vlaneseq
        %v1910 = vshrl.u32 %v1909, 7
        %v1911 = vsub.s32 %v1908, %v1910
        %v1912 = vrot.slane %v1902, %v1911
        %v1914 = vunpack.c.l.s4 1966171168
        %v1915 = vunpack.c.0.s8 %v1914
        %v1916 = vlaneseq
        %v1917 = vshrl.u32 %v1916, 7
        %v1918 = vsub.s32 %v1915, %v1917
        %v1919 = vrot.slane %v1903, %v1918
        %v1921 = vunpack.c.l.s4 1966171168
        %v1922 = vunpack.c.0.s8 %v1921
        %v1923 = vlaneseq
        %v1924 = vshrl.u32 %v1923, 7
        %v1925 = vsub.s32 %v1922, %v1924
        %v1926 = vrot.slane %v1904, %v1925
        %v1928 = vunpack.c.l.s4 1966171168
        %v1929 = vunpack.c.0.s8 %v1928
        %v1930 = vlaneseq
        %v1931 = vshrl.u32 %v1930, 7
        %v1932 = vsub.s32 %v1929, %v1931
        %v1933 = vrot.slane %v1905, %v1932
        %v1934 = vcombine.low %v1912, %v1919
        %v1935 = vcombine.low %v1926, %v1933
        %v1937 = vunpack.c.l.s4 1966171168
        %v1938 = vunpack.c.0.s8 %v1937
        %v1939 = vlaneseq
        %v1940 = vshrl.u32 %v1939, 7
        %v1941 = vsub.s32 %v1938, %v1940
        %v1942 = vrot.slane %v1934, %v1941
        %v1944 = vunpack.c.l.s4 1966171168
        %v1945 = vunpack.c.0.s8 %v1944
        %v1946 = vlaneseq
        %v1947 = vshrl.u32 %v1946, 7
        %v1948 = vsub.s32 %v1945, %v1947
        %v1949 = vrot.slane %v1935, %v1948
        %v1950 = vcombine.low %v1942, %v1949
        %v1951 = vcombine.low %v1137, %v1141
        %v1952 = vcombine.low %v1145, %v1149
        %v1953 = vcombine.low %v1153, %v1157
        %v1954 = vcombine.low %v1161, %v1165
        %v1956 = vunpack.c.l.s4 1966171168
        %v1957 = vunpack.c.0.s8 %v1956
        %v1958 = vlaneseq
        %v1959 = vshrl.u32 %v1958, 7
        %v1960 = vsub.s32 %v1957, %v1959
        %v1961 = vrot.slane %v1951, %v1960
        %v1963 = vunpack.c.l.s4 1966171168
        %v1964 = vunpack.c.0.s8 %v1963
        %v1965 = vlaneseq
        %v1966 = vshrl.u32 %v1965, 7
        %v1967 = vsub.s32 %v1964, %v1966
        %v1968 = vrot.slane %v1952, %v1967
        %v1970 = vunpack.c.l.s4 1966171168
        %v1971 = vunpack.c.0.s8 %v1970
        %v1972 = vlaneseq
        %v1973 = vshrl.u32 %v1972, 7
        %v1974 = vsub.s32 %v1971, %v1973
        %v1975 = vrot.slane %v1953, %v1974
        %v1977 = vunpack.c.l.s4 1966171168
        %v1978 = vunpack.c.0.s8 %v1977
        %v1979 = vlaneseq
        %v1980 = vshrl.u32 %v1979, 7
        %v1981 = vsub.s32 %v1978, %v1980
        %v1982 = vrot.slane %v1954, %v1981
        %v1983 = vcombine.low %v1961, %v1968
        %v1984 = vcombine.low %v1975, %v1982
        %v1986 = vunpack.c.l.s4 1966171168
        %v1987 = vunpack.c.0.s8 %v1986
        %v1988 = vlaneseq
        %v1989 = vshrl.u32 %v1988, 7
        %v1990 = vsub.s32 %v1987, %v1989
        %v1991 = vrot.slane %v1983, %v1990
        %v1993 = vunpack.c.l.s4 1966171168
        %v1994 = vunpack.c.0.s8 %v1993
        %v1995 = vlaneseq
        %v1996 = vshrl.u32 %v1995, 7
        %v1997 = vsub.s32 %v1994, %v1996
        %v1998 = vrot.slane %v1984, %v1997
        %v1999 = vcombine.low %v1991, %v1998
        %v2000 = vcombine.low %v1169, %v1173
        %v2001 = vcombine.low %v1177, %v1181
        %v2002 = vcombine.low %v1185, %v1189
        %v2003 = vcombine.low %v1193, %v1197
        %v2005 = vunpack.c.l.s4 1966171168
        %v2006 = vunpack.c.0.s8 %v2005
        %v2007 = vlaneseq
        %v2008 = vshrl.u32 %v2007, 7
        %v2009 = vsub.s32 %v2006, %v2008
        %v2010 = vrot.slane %v2000, %v2009
        %v2012 = vunpack.c.l.s4 1966171168
        %v2013 = vunpack.c.0.s8 %v2012
        %v2014 = vlaneseq
        %v2015 = vshrl.u32 %v2014, 7
        %v2016 = vsub.s32 %v2013, %v2015
        %v2017 = vrot.slane %v2001, %v2016
        %v2019 = vunpack.c.l.s4 1966171168
        %v2020 = vunpack.c.0.s8 %v2019
        %v2021 = vlaneseq
        %v2022 = vshrl.u32 %v2021, 7
        %v2023 = vsub.s32 %v2020, %v2022
        %v2024 = vrot.slane %v2002, %v2023
        %v2026 = vunpack.c.l.s4 1966171168
        %v2027 = vunpack.c.0.s8 %v2026
        %v2028 = vlaneseq
        %v2029 = vshrl.u32 %v2028, 7
        %v2030 = vsub.s32 %v2027, %v2029
        %v2031 = vrot.slane %v2003, %v2030
        %v2032 = vcombine.low %v2010, %v2017
        %v2033 = vcombine.low %v2024, %v2031
        %v2035 = vunpack.c.l.s4 1966171168
        %v2036 = vunpack.c.0.s8 %v2035
        %v2037 = vlaneseq
        %v2038 = vshrl.u32 %v2037, 7
        %v2039 = vsub.s32 %v2036, %v2038
        %v2040 = vrot.slane %v2032, %v2039
        %v2042 = vunpack.c.l.s4 1966171168
        %v2043 = vunpack.c.0.s8 %v2042
        %v2044 = vlaneseq
        %v2045 = vshrl.u32 %v2044, 7
        %v2046 = vsub.s32 %v2043, %v2045
        %v2047 = vrot.slane %v2033, %v2046
        %v2048 = vcombine.low %v2040, %v2047
        %v2049 = vcombine.low %v1201, %v1205
        %v2050 = vcombine.low %v1209, %v1213
        %v2051 = vcombine.low %v1217, %v1221
        %v2052 = vcombine.low %v1225, %v1229
        %v2054 = vunpack.c.l.s4 1966171168
        %v2055 = vunpack.c.0.s8 %v2054
        %v2056 = vlaneseq
        %v2057 = vshrl.u32 %v2056, 7
        %v2058 = vsub.s32 %v2055, %v2057
        %v2059 = vrot.slane %v2049, %v2058
        %v2061 = vunpack.c.l.s4 1966171168
        %v2062 = vunpack.c.0.s8 %v2061
        %v2063 = vlaneseq
        %v2064 = vshrl.u32 %v2063, 7
        %v2065 = vsub.s32 %v2062, %v2064
        %v2066 = vrot.slane %v2050, %v2065
        %v2068 = vunpack.c.l.s4 1966171168
        %v2069 = vunpack.c.0.s8 %v2068
        %v2070 = vlaneseq
        %v2071 = vshrl.u32 %v2070, 7
        %v2072 = vsub.s32 %v2069, %v2071
        %v2073 = vrot.slane %v2051, %v2072
        %v2075 = vunpack.c.l.s4 1966171168
        %v2076 = vunpack.c.0.s8 %v2075
        %v2077 = vlaneseq
        %v2078 = vshrl.u32 %v2077, 7
        %v2079 = vsub.s32 %v2076, %v2078
        %v2080 = vrot.slane %v2052, %v2079
        %v2081 = vcombine.low %v2059, %v2066
        %v2082 = vcombine.low %v2073, %v2080
        %v2084 = vunpack.c.l.s4 1966171168
        %v2085 = vunpack.c.0.s8 %v2084
        %v2086 = vlaneseq
        %v2087 = vshrl.u32 %v2086, 7
        %v2088 = vsub.s32 %v2085, %v2087
        %v2089 = vrot.slane %v2081, %v2088
        %v2091 = vunpack.c.l.s4 1966171168
        %v2092 = vunpack.c.0.s8 %v2091
        %v2093 = vlaneseq
        %v2094 = vshrl.u32 %v2093, 7
        %v2095 = vsub.s32 %v2092, %v2094
        %v2096 = vrot.slane %v2082, %v2095
        %v2097 = vcombine.low %v2089, %v2096
        %v2098 = vcombine.low %v1233, %v1237
        %v2099 = vcombine.low %v1241, %v1245
        %v2100 = vcombine.low %v1249, %v1253
        %v2101 = vcombine.low %v1257, %v1261
        %v2103 = vunpack.c.l.s4 1966171168
        %v2104 = vunpack.c.0.s8 %v2103
        %v2105 = vlaneseq
        %v2106 = vshrl.u32 %v2105, 7
        %v2107 = vsub.s32 %v2104, %v2106
        %v2108 = vrot.slane %v2098, %v2107
        %v2110 = vunpack.c.l.s4 1966171168
        %v2111 = vunpack.c.0.s8 %v2110
        %v2112 = vlaneseq
        %v2113 = vshrl.u32 %v2112, 7
        %v2114 = vsub.s32 %v2111, %v2113
        %v2115 = vrot.slane %v2099, %v2114
        %v2117 = vunpack.c.l.s4 1966171168
        %v2118 = vunpack.c.0.s8 %v2117
        %v2119 = vlaneseq
        %v2120 = vshrl.u32 %v2119, 7
        %v2121 = vsub.s32 %v2118, %v2120
        %v2122 = vrot.slane %v2100, %v2121
        %v2124 = vunpack.c.l.s4 1966171168
        %v2125 = vunpack.c.0.s8 %v2124
        %v2126 = vlaneseq
        %v2127 = vshrl.u32 %v2126, 7
        %v2128 = vsub.s32 %v2125, %v2127
        %v2129 = vrot.slane %v2101, %v2128
        %v2130 = vcombine.low %v2108, %v2115
        %v2131 = vcombine.low %v2122, %v2129
        %v2133 = vunpack.c.l.s4 1966171168
        %v2134 = vunpack.c.0.s8 %v2133
        %v2135 = vlaneseq
        %v2136 = vshrl.u32 %v2135, 7
        %v2137 = vsub.s32 %v2134, %v2136
        %v2138 = vrot.slane %v2130, %v2137
        %v2140 = vunpack.c.l.s4 1966171168
        %v2141 = vunpack.c.0.s8 %v2140
        %v2142 = vlaneseq
        %v2143 = vshrl.u32 %v2142, 7
        %v2144 = vsub.s32 %v2141, %v2143
        %v2145 = vrot.slane %v2131, %v2144
        %v2146 = vcombine.low %v2138, %v2145
        %v2147 = vcombine.low %v1265, %v1269
        %v2148 = vcombine.low %v1273, %v1277
        %v2149 = vcombine.low %v1281, %v1285
        %v2150 = vcombine.low %v1289, %v1293
        %v2152 = vunpack.c.l.s4 1966171168
        %v2153 = vunpack.c.0.s8 %v2152
        %v2154 = vlaneseq
        %v2155 = vshrl.u32 %v2154, 7
        %v2156 = vsub.s32 %v2153, %v2155
        %v2157 = vrot.slane %v2147, %v2156
        %v2159 = vunpack.c.l.s4 1966171168
        %v2160 = vunpack.c.0.s8 %v2159
        %v2161 = vlaneseq
        %v2162 = vshrl.u32 %v2161, 7
        %v2163 = vsub.s32 %v2160, %v2162
        %v2164 = vrot.slane %v2148, %v2163
        %v2166 = vunpack.c.l.s4 1966171168
        %v2167 = vunpack.c.0.s8 %v2166
        %v2168 = vlaneseq
        %v2169 = vshrl.u32 %v2168, 7
        %v2170 = vsub.s32 %v2167, %v2169
        %v2171 = vrot.slane %v2149, %v2170
        %v2173 = vunpack.c.l.s4 1966171168
        %v2174 = vunpack.c.0.s8 %v2173
        %v2175 = vlaneseq
        %v2176 = vshrl.u32 %v2175, 7
        %v2177 = vsub.s32 %v2174, %v2176
        %v2178 = vrot.slane %v2150, %v2177
        %v2179 = vcombine.low %v2157, %v2164
        %v2180 = vcombine.low %v2171, %v2178
        %v2182 = vunpack.c.l.s4 1966171168
        %v2183 = vunpack.c.0.s8 %v2182
        %v2184 = vlaneseq
        %v2185 = vshrl.u32 %v2184, 7
        %v2186 = vsub.s32 %v2183, %v2185
        %v2187 = vrot.slane %v2179, %v2186
        %v2189 = vunpack.c.l.s4 1966171168
        %v2190 = vunpack.c.0.s8 %v2189
        %v2191 = vlaneseq
        %v2192 = vshrl.u32 %v2191, 7
        %v2193 = vsub.s32 %v2190, %v2192
        %v2194 = vrot.slane %v2180, %v2193
        %v2195 = vcombine.low %v2187, %v2194
        %v2196 = vcombine.low %v1297, %v1301
        %v2197 = vcombine.low %v1305, %v1309
        %v2198 = vcombine.low %v1313, %v1317
        %v2199 = vcombine.low %v1321, %v1325
        %v2201 = vunpack.c.l.s4 1966171168
        %v2202 = vunpack.c.0.s8 %v2201
        %v2203 = vlaneseq
        %v2204 = vshrl.u32 %v2203, 7
        %v2205 = vsub.s32 %v2202, %v2204
        %v2206 = vrot.slane %v2196, %v2205
        %v2208 = vunpack.c.l.s4 1966171168
        %v2209 = vunpack.c.0.s8 %v2208
        %v2210 = vlaneseq
        %v2211 = vshrl.u32 %v2210, 7
        %v2212 = vsub.s32 %v2209, %v2211
        %v2213 = vrot.slane %v2197, %v2212
        %v2215 = vunpack.c.l.s4 1966171168
        %v2216 = vunpack.c.0.s8 %v2215
        %v2217 = vlaneseq
        %v2218 = vshrl.u32 %v2217, 7
        %v2219 = vsub.s32 %v2216, %v2218
        %v2220 = vrot.slane %v2198, %v2219
        %v2222 = vunpack.c.l.s4 1966171168
        %v2223 = vunpack.c.0.s8 %v2222
        %v2224 = vlaneseq
        %v2225 = vshrl.u32 %v2224, 7
        %v2226 = vsub.s32 %v2223, %v2225
        %v2227 = vrot.slane %v2199, %v2226
        %v2228 = vcombine.low %v2206, %v2213
        %v2229 = vcombine.low %v2220, %v2227
        %v2231 = vunpack.c.l.s4 1966171168
        %v2232 = vunpack.c.0.s8 %v2231
        %v2233 = vlaneseq
        %v2234 = vshrl.u32 %v2233, 7
        %v2235 = vsub.s32 %v2232, %v2234
        %v2236 = vrot.slane %v2228, %v2235
        %v2238 = vunpack.c.l.s4 1966171168
        %v2239 = vunpack.c.0.s8 %v2238
        %v2240 = vlaneseq
        %v2241 = vshrl.u32 %v2240, 7
        %v2242 = vsub.s32 %v2239, %v2241
        %v2243 = vrot.slane %v2229, %v2242
        %v2244 = vcombine.low %v2236, %v2243
        %v2245 = vcombine.low %v1329, %v1333
        %v2246 = vcombine.low %v1337, %v1341
        %v2247 = vcombine.low %v1345, %v1349
        %v2248 = vcombine.low %v1353, %v1357
        %v2250 = vunpack.c.l.s4 1966171168
        %v2251 = vunpack.c.0.s8 %v2250
        %v2252 = vlaneseq
        %v2253 = vshrl.u32 %v2252, 7
        %v2254 = vsub.s32 %v2251, %v2253
        %v2255 = vrot.slane %v2245, %v2254
        %v2257 = vunpack.c.l.s4 1966171168
        %v2258 = vunpack.c.0.s8 %v2257
        %v2259 = vlaneseq
        %v2260 = vshrl.u32 %v2259, 7
        %v2261 = vsub.s32 %v2258, %v2260
        %v2262 = vrot.slane %v2246, %v2261
        %v2264 = vunpack.c.l.s4 1966171168
        %v2265 = vunpack.c.0.s8 %v2264
        %v2266 = vlaneseq
        %v2267 = vshrl.u32 %v2266, 7
        %v2268 = vsub.s32 %v2265, %v2267
        %v2269 = vrot.slane %v2247, %v2268
        %v2271 = vunpack.c.l.s4 1966171168
        %v2272 = vunpack.c.0.s8 %v2271
        %v2273 = vlaneseq
        %v2274 = vshrl.u32 %v2273, 7
        %v2275 = vsub.s32 %v2272, %v2274
        %v2276 = vrot.slane %v2248, %v2275
        %v2277 = vcombine.low %v2255, %v2262
        %v2278 = vcombine.low %v2269, %v2276
        %v2280 = vunpack.c.l.s4 1966171168
        %v2281 = vunpack.c.0.s8 %v2280
        %v2282 = vlaneseq
        %v2283 = vshrl.u32 %v2282, 7
        %v2284 = vsub.s32 %v2281, %v2283
        %v2285 = vrot.slane %v2277, %v2284
        %v2287 = vunpack.c.l.s4 1966171168
        %v2288 = vunpack.c.0.s8 %v2287
        %v2289 = vlaneseq
        %v2290 = vshrl.u32 %v2289, 7
        %v2291 = vsub.s32 %v2288, %v2290
        %v2292 = vrot.slane %v2278, %v2291
        %v2293 = vcombine.low %v2285, %v2292
        %v2294 = vcombine.low %v1361, %v1365
        %v2295 = vcombine.low %v1369, %v1373
        %v2296 = vcombine.low %v1377, %v1381
        %v2297 = vcombine.low %v1385, %v1389
        %v2299 = vunpack.c.l.s4 1966171168
        %v2300 = vunpack.c.0.s8 %v2299
        %v2301 = vlaneseq
        %v2302 = vshrl.u32 %v2301, 7
        %v2303 = vsub.s32 %v2300, %v2302
        %v2304 = vrot.slane %v2294, %v2303
        %v2306 = vunpack.c.l.s4 1966171168
        %v2307 = vunpack.c.0.s8 %v2306
        %v2308 = vlaneseq
        %v2309 = vshrl.u32 %v2308, 7
        %v2310 = vsub.s32 %v2307, %v2309
        %v2311 = vrot.slane %v2295, %v2310
        %v2313 = vunpack.c.l.s4 1966171168
        %v2314 = vunpack.c.0.s8 %v2313
        %v2315 = vlaneseq
        %v2316 = vshrl.u32 %v2315, 7
        %v2317 = vsub.s32 %v2314, %v2316
        %v2318 = vrot.slane %v2296, %v2317
        %v2320 = vunpack.c.l.s4 1966171168
        %v2321 = vunpack.c.0.s8 %v2320
        %v2322 = vlaneseq
        %v2323 = vshrl.u32 %v2322, 7
        %v2324 = vsub.s32 %v2321, %v2323
        %v2325 = vrot.slane %v2297, %v2324
        %v2326 = vcombine.low %v2304, %v2311
        %v2327 = vcombine.low %v2318, %v2325
        %v2329 = vunpack.c.l.s4 1966171168
        %v2330 = vunpack.c.0.s8 %v2329
        %v2331 = vlaneseq
        %v2332 = vshrl.u32 %v2331, 7
        %v2333 = vsub.s32 %v2330, %v2332
        %v2334 = vrot.slane %v2326, %v2333
        %v2336 = vunpack.c.l.s4 1966171168
        %v2337 = vunpack.c.0.s8 %v2336
        %v2338 = vlaneseq
        %v2339 = vshrl.u32 %v2338, 7
        %v2340 = vsub.s32 %v2337, %v2339
        %v2341 = vrot.slane %v2327, %v2340
        %v2342 = vcombine.low %v2334, %v2341
        %v2343 = vcombine.low %v1393, %v1397
        %v2344 = vcombine.low %v1401, %v1405
        %v2345 = vcombine.low %v1409, %v1413
        %v2346 = vcombine.low %v1417, %v1421
        %v2348 = vunpack.c.l.s4 1966171168
        %v2349 = vunpack.c.0.s8 %v2348
        %v2350 = vlaneseq
        %v2351 = vshrl.u32 %v2350, 7
        %v2352 = vsub.s32 %v2349, %v2351
        %v2353 = vrot.slane %v2343, %v2352
        %v2355 = vunpack.c.l.s4 1966171168
        %v2356 = vunpack.c.0.s8 %v2355
        %v2357 = vlaneseq
        %v2358 = vshrl.u32 %v2357, 7
        %v2359 = vsub.s32 %v2356, %v2358
        %v2360 = vrot.slane %v2344, %v2359
        %v2362 = vunpack.c.l.s4 1966171168
        %v2363 = vunpack.c.0.s8 %v2362
        %v2364 = vlaneseq
        %v2365 = vshrl.u32 %v2364, 7
        %v2366 = vsub.s32 %v2363, %v2365
        %v2367 = vrot.slane %v2345, %v2366
        %v2369 = vunpack.c.l.s4 1966171168
        %v2370 = vunpack.c.0.s8 %v2369
        %v2371 = vlaneseq
        %v2372 = vshrl.u32 %v2371, 7
        %v2373 = vsub.s32 %v2370, %v2372
        %v2374 = vrot.slane %v2346, %v2373
        %v2375 = vcombine.low %v2353, %v2360
        %v2376 = vcombine.low %v2367, %v2374
        %v2378 = vunpack.c.l.s4 1966171168
        %v2379 = vunpack.c.0.s8 %v2378
        %v2380 = vlaneseq
        %v2381 = vshrl.u32 %v2380, 7
        %v2382 = vsub.s32 %v2379, %v2381
        %v2383 = vrot.slane %v2375, %v2382
        %v2385 = vunpack.c.l.s4 1966171168
        %v2386 = vunpack.c.0.s8 %v2385
        %v2387 = vlaneseq
        %v2388 = vshrl.u32 %v2387, 7
        %v2389 = vsub.s32 %v2386, %v2388
        %v2390 = vrot.slane %v2376, %v2389
        %v2391 = vcombine.low %v2383, %v2390
        %v2392 = vcombine.low %v1425, %v1429
        %v2393 = vcombine.low %v1433, %v1437
        %v2394 = vcombine.low %v1441, %v1445
        %v2395 = vcombine.low %v1449, %v1453
        %v2397 = vunpack.c.l.s4 1966171168
        %v2398 = vunpack.c.0.s8 %v2397
        %v2399 = vlaneseq
        %v2400 = vshrl.u32 %v2399, 7
        %v2401 = vsub.s32 %v2398, %v2400
        %v2402 = vrot.slane %v2392, %v2401
        %v2404 = vunpack.c.l.s4 1966171168
        %v2405 = vunpack.c.0.s8 %v2404
        %v2406 = vlaneseq
        %v2407 = vshrl.u32 %v2406, 7
        %v2408 = vsub.s32 %v2405, %v2407
        %v2409 = vrot.slane %v2393, %v2408
        %v2411 = vunpack.c.l.s4 1966171168
        %v2412 = vunpack.c.0.s8 %v2411
        %v2413 = vlaneseq
        %v2414 = vshrl.u32 %v2413, 7
        %v2415 = vsub.s32 %v2412, %v2414
        %v2416 = vrot.slane %v2394, %v2415
        %v2418 = vunpack.c.l.s4 1966171168
        %v2419 = vunpack.c.0.s8 %v2418
        %v2420 = vlaneseq
        %v2421 = vshrl.u32 %v2420, 7
        %v2422 = vsub.s32 %v2419, %v2421
        %v2423 = vrot.slane %v2395, %v2422
        %v2424 = vcombine.low %v2402, %v2409
        %v2425 = vcombine.low %v2416, %v2423
        %v2427 = vunpack.c.l.s4 1966171168
        %v2428 = vunpack.c.0.s8 %v2427
        %v2429 = vlaneseq
        %v2430 = vshrl.u32 %v2429, 7
        %v2431 = vsub.s32 %v2428, %v2430
        %v2432 = vrot.slane %v2424, %v2431
        %v2434 = vunpack.c.l.s4 1966171168
        %v2435 = vunpack.c.0.s8 %v2434
        %v2436 = vlaneseq
        %v2437 = vshrl.u32 %v2436, 7
        %v2438 = vsub.s32 %v2435, %v2437
        %v2439 = vrot.slane %v2425, %v2438
        %v2440 = vcombine.low %v2432, %v2439
        %v2441 = vcombine.low %v1457, %v1461
        %v2442 = vcombine.low %v1465, %v1469
        %v2443 = vcombine.low %v1473, %v1477
        %v2444 = vcombine.low %v1481, %v1485
        %v2446 = vunpack.c.l.s4 1966171168
        %v2447 = vunpack.c.0.s8 %v2446
        %v2448 = vlaneseq
        %v2449 = vshrl.u32 %v2448, 7
        %v2450 = vsub.s32 %v2447, %v2449
        %v2451 = vrot.slane %v2441, %v2450
        %v2453 = vunpack.c.l.s4 1966171168
        %v2454 = vunpack.c.0.s8 %v2453
        %v2455 = vlaneseq
        %v2456 = vshrl.u32 %v2455, 7
        %v2457 = vsub.s32 %v2454, %v2456
        %v2458 = vrot.slane %v2442, %v2457
        %v2460 = vunpack.c.l.s4 1966171168
        %v2461 = vunpack.c.0.s8 %v2460
        %v2462 = vlaneseq
        %v2463 = vshrl.u32 %v2462, 7
        %v2464 = vsub.s32 %v2461, %v2463
        %v2465 = vrot.slane %v2443, %v2464
        %v2467 = vunpack.c.l.s4 1966171168
        %v2468 = vunpack.c.0.s8 %v2467
        %v2469 = vlaneseq
        %v2470 = vshrl.u32 %v2469, 7
        %v2471 = vsub.s32 %v2468, %v2470
        %v2472 = vrot.slane %v2444, %v2471
        %v2473 = vcombine.low %v2451, %v2458
        %v2474 = vcombine.low %v2465, %v2472
        %v2476 = vunpack.c.l.s4 1966171168
        %v2477 = vunpack.c.0.s8 %v2476
        %v2478 = vlaneseq
        %v2479 = vshrl.u32 %v2478, 7
        %v2480 = vsub.s32 %v2477, %v2479
        %v2481 = vrot.slane %v2473, %v2480
        %v2483 = vunpack.c.l.s4 1966171168
        %v2484 = vunpack.c.0.s8 %v2483
        %v2485 = vlaneseq
        %v2486 = vshrl.u32 %v2485, 7
        %v2487 = vsub.s32 %v2484, %v2486
        %v2488 = vrot.slane %v2474, %v2487
        %v2489 = vcombine.low %v2481, %v2488
        %v2490 = vcombine.low %v1489, %v1493
        %v2491 = vcombine.low %v1497, %v1501
        %v2492 = vcombine.low %v1505, %v1509
        %v2493 = vcombine.low %v1513, %v1517
        %v2495 = vunpack.c.l.s4 1966171168
        %v2496 = vunpack.c.0.s8 %v2495
        %v2497 = vlaneseq
        %v2498 = vshrl.u32 %v2497, 7
        %v2499 = vsub.s32 %v2496, %v2498
        %v2500 = vrot.slane %v2490, %v2499
        %v2502 = vunpack.c.l.s4 1966171168
        %v2503 = vunpack.c.0.s8 %v2502
        %v2504 = vlaneseq
        %v2505 = vshrl.u32 %v2504, 7
        %v2506 = vsub.s32 %v2503, %v2505
        %v2507 = vrot.slane %v2491, %v2506
        %v2509 = vunpack.c.l.s4 1966171168
        %v2510 = vunpack.c.0.s8 %v2509
        %v2511 = vlaneseq
        %v2512 = vshrl.u32 %v2511, 7
        %v2513 = vsub.s32 %v2510, %v2512
        %v2514 = vrot.slane %v2492, %v2513
        %v2516 = vunpack.c.l.s4 1966171168
        %v2517 = vunpack.c.0.s8 %v2516
        %v2518 = vlaneseq
        %v2519 = vshrl.u32 %v2518, 7
        %v2520 = vsub.s32 %v2517, %v2519
        %v2521 = vrot.slane %v2493, %v2520
        %v2522 = vcombine.low %v2500, %v2507
        %v2523 = vcombine.low %v2514, %v2521
        %v2525 = vunpack.c.l.s4 1966171168
        %v2526 = vunpack.c.0.s8 %v2525
        %v2527 = vlaneseq
        %v2528 = vshrl.u32 %v2527, 7
        %v2529 = vsub.s32 %v2526, %v2528
        %v2530 = vrot.slane %v2522, %v2529
        %v2532 = vunpack.c.l.s4 1966171168
        %v2533 = vunpack.c.0.s8 %v2532
        %v2534 = vlaneseq
        %v2535 = vshrl.u32 %v2534, 7
        %v2536 = vsub.s32 %v2533, %v2535
        %v2537 = vrot.slane %v2523, %v2536
        %v2538 = vcombine.low %v2530, %v2537
        %v2539 = vcombine.low %v1521, %v1525
        %v2540 = vcombine.low %v1529, %v1533
        %v2541 = vcombine.low %v1537, %v1541
        %v2542 = vcombine.low %v1545, %v1549
        %v2544 = vunpack.c.l.s4 1966171168
        %v2545 = vunpack.c.0.s8 %v2544
        %v2546 = vlaneseq
        %v2547 = vshrl.u32 %v2546, 7
        %v2548 = vsub.s32 %v2545, %v2547
        %v2549 = vrot.slane %v2539, %v2548
        %v2551 = vunpack.c.l.s4 1966171168
        %v2552 = vunpack.c.0.s8 %v2551
        %v2553 = vlaneseq
        %v2554 = vshrl.u32 %v2553, 7
        %v2555 = vsub.s32 %v2552, %v2554
        %v2556 = vrot.slane %v2540, %v2555
        %v2558 = vunpack.c.l.s4 1966171168
        %v2559 = vunpack.c.0.s8 %v2558
        %v2560 = vlaneseq
        %v2561 = vshrl.u32 %v2560, 7
        %v2562 = vsub.s32 %v2559, %v2561
        %v2563 = vrot.slane %v2541, %v2562
        %v2565 = vunpack.c.l.s4 1966171168
        %v2566 = vunpack.c.0.s8 %v2565
        %v2567 = vlaneseq
        %v2568 = vshrl.u32 %v2567, 7
        %v2569 = vsub.s32 %v2566, %v2568
        %v2570 = vrot.slane %v2542, %v2569
        %v2571 = vcombine.low %v2549, %v2556
        %v2572 = vcombine.low %v2563, %v2570
        %v2574 = vunpack.c.l.s4 1966171168
        %v2575 = vunpack.c.0.s8 %v2574
        %v2576 = vlaneseq
        %v2577 = vshrl.u32 %v2576, 7
        %v2578 = vsub.s32 %v2575, %v2577
        %v2579 = vrot.slane %v2571, %v2578
        %v2581 = vunpack.c.l.s4 1966171168
        %v2582 = vunpack.c.0.s8 %v2581
        %v2583 = vlaneseq
        %v2584 = vshrl.u32 %v2583, 7
        %v2585 = vsub.s32 %v2582, %v2584
        %v2586 = vrot.slane %v2572, %v2585
        %v2587 = vcombine.low %v2579, %v2586
        %v2588 = vcombine.low %v1553, %v1557
        %v2589 = vcombine.low %v1561, %v1565
        %v2590 = vcombine.low %v1569, %v1573
        %v2591 = vcombine.low %v1577, %v1581
        %v2593 = vunpack.c.l.s4 1966171168
        %v2594 = vunpack.c.0.s8 %v2593
        %v2595 = vlaneseq
        %v2596 = vshrl.u32 %v2595, 7
        %v2597 = vsub.s32 %v2594, %v2596
        %v2598 = vrot.slane %v2588, %v2597
        %v2600 = vunpack.c.l.s4 1966171168
        %v2601 = vunpack.c.0.s8 %v2600
        %v2602 = vlaneseq
        %v2603 = vshrl.u32 %v2602, 7
        %v2604 = vsub.s32 %v2601, %v2603
        %v2605 = vrot.slane %v2589, %v2604
        %v2607 = vunpack.c.l.s4 1966171168
        %v2608 = vunpack.c.0.s8 %v2607
        %v2609 = vlaneseq
        %v2610 = vshrl.u32 %v2609, 7
        %v2611 = vsub.s32 %v2608, %v2610
        %v2612 = vrot.slane %v2590, %v2611
        %v2614 = vunpack.c.l.s4 1966171168
        %v2615 = vunpack.c.0.s8 %v2614
        %v2616 = vlaneseq
        %v2617 = vshrl.u32 %v2616, 7
        %v2618 = vsub.s32 %v2615, %v2617
        %v2619 = vrot.slane %v2591, %v2618
        %v2620 = vcombine.low %v2598, %v2605
        %v2621 = vcombine.low %v2612, %v2619
        %v2623 = vunpack.c.l.s4 1966171168
        %v2624 = vunpack.c.0.s8 %v2623
        %v2625 = vlaneseq
        %v2626 = vshrl.u32 %v2625, 7
        %v2627 = vsub.s32 %v2624, %v2626
        %v2628 = vrot.slane %v2620, %v2627
        %v2630 = vunpack.c.l.s4 1966171168
        %v2631 = vunpack.c.0.s8 %v2630
        %v2632 = vlaneseq
        %v2633 = vshrl.u32 %v2632, 7
        %v2634 = vsub.s32 %v2631, %v2633
        %v2635 = vrot.slane %v2621, %v2634
        %v2636 = vcombine.low %v2628, %v2635
        %v2637 = vcombine.low %v1585, %v1589
        %v2638 = vcombine.low %v1593, %v1597
        %v2639 = vcombine.low %v1601, %v1605
        %v2640 = vcombine.low %v1609, %v1613
        %v2642 = vunpack.c.l.s4 1966171168
        %v2643 = vunpack.c.0.s8 %v2642
        %v2644 = vlaneseq
        %v2645 = vshrl.u32 %v2644, 7
        %v2646 = vsub.s32 %v2643, %v2645
        %v2647 = vrot.slane %v2637, %v2646
        %v2649 = vunpack.c.l.s4 1966171168
        %v2650 = vunpack.c.0.s8 %v2649
        %v2651 = vlaneseq
        %v2652 = vshrl.u32 %v2651, 7
        %v2653 = vsub.s32 %v2650, %v2652
        %v2654 = vrot.slane %v2638, %v2653
        %v2656 = vunpack.c.l.s4 1966171168
        %v2657 = vunpack.c.0.s8 %v2656
        %v2658 = vlaneseq
        %v2659 = vshrl.u32 %v2658, 7
        %v2660 = vsub.s32 %v2657, %v2659
        %v2661 = vrot.slane %v2639, %v2660
        %v2663 = vunpack.c.l.s4 1966171168
        %v2664 = vunpack.c.0.s8 %v2663
        %v2665 = vlaneseq
        %v2666 = vshrl.u32 %v2665, 7
        %v2667 = vsub.s32 %v2664, %v2666
        %v2668 = vrot.slane %v2640, %v2667
        %v2669 = vcombine.low %v2647, %v2654
        %v2670 = vcombine.low %v2661, %v2668
        %v2672 = vunpack.c.l.s4 1966171168
        %v2673 = vunpack.c.0.s8 %v2672
        %v2674 = vlaneseq
        %v2675 = vshrl.u32 %v2674, 7
        %v2676 = vsub.s32 %v2673, %v2675
        %v2677 = vrot.slane %v2669, %v2676
        %v2679 = vunpack.c.l.s4 1966171168
        %v2680 = vunpack.c.0.s8 %v2679
        %v2681 = vlaneseq
        %v2682 = vshrl.u32 %v2681, 7
        %v2683 = vsub.s32 %v2680, %v2682
        %v2684 = vrot.slane %v2670, %v2683
        %v2685 = vcombine.low %v2677, %v2684
        %v2686 = vcombine.low %v1617, %v1621
        %v2687 = vcombine.low %v1625, %v1629
        %v2688 = vcombine.low %v1633, %v1637
        %v2689 = vcombine.low %v1641, %v1645
        %v2691 = vunpack.c.l.s4 1966171168
        %v2692 = vunpack.c.0.s8 %v2691
        %v2693 = vlaneseq
        %v2694 = vshrl.u32 %v2693, 7
        %v2695 = vsub.s32 %v2692, %v2694
        %v2696 = vrot.slane %v2686, %v2695
        %v2698 = vunpack.c.l.s4 1966171168
        %v2699 = vunpack.c.0.s8 %v2698
        %v2700 = vlaneseq
        %v2701 = vshrl.u32 %v2700, 7
        %v2702 = vsub.s32 %v2699, %v2701
        %v2703 = vrot.slane %v2687, %v2702
        %v2705 = vunpack.c.l.s4 1966171168
        %v2706 = vunpack.c.0.s8 %v2705
        %v2707 = vlaneseq
        %v2708 = vshrl.u32 %v2707, 7
        %v2709 = vsub.s32 %v2706, %v2708
        %v2710 = vrot.slane %v2688, %v2709
        %v2712 = vunpack.c.l.s4 1966171168
        %v2713 = vunpack.c.0.s8 %v2712
        %v2714 = vlaneseq
        %v2715 = vshrl.u32 %v2714, 7
        %v2716 = vsub.s32 %v2713, %v2715
        %v2717 = vrot.slane %v2689, %v2716
        %v2718 = vcombine.low %v2696, %v2703
        %v2719 = vcombine.low %v2710, %v2717
        %v2721 = vunpack.c.l.s4 1966171168
        %v2722 = vunpack.c.0.s8 %v2721
        %v2723 = vlaneseq
        %v2724 = vshrl.u32 %v2723, 7
        %v2725 = vsub.s32 %v2722, %v2724
        %v2726 = vrot.slane %v2718, %v2725
        %v2728 = vunpack.c.l.s4 1966171168
        %v2729 = vunpack.c.0.s8 %v2728
        %v2730 = vlaneseq
        %v2731 = vshrl.u32 %v2730, 7
        %v2732 = vsub.s32 %v2729, %v2731
        %v2733 = vrot.slane %v2719, %v2732
        %v2734 = vcombine.low %v2726, %v2733
        %v2735 = vcombine.low %v1649, %v1653
        %v2736 = vcombine.low %v1657, %v1661
        %v2737 = vcombine.low %v1665, %v1669
        %v2738 = vcombine.low %v1673, %v1677
        %v2740 = vunpack.c.l.s4 1966171168
        %v2741 = vunpack.c.0.s8 %v2740
        %v2742 = vlaneseq
        %v2743 = vshrl.u32 %v2742, 7
        %v2744 = vsub.s32 %v2741, %v2743
        %v2745 = vrot.slane %v2735, %v2744
        %v2747 = vunpack.c.l.s4 1966171168
        %v2748 = vunpack.c.0.s8 %v2747
        %v2749 = vlaneseq
        %v2750 = vshrl.u32 %v2749, 7
        %v2751 = vsub.s32 %v2748, %v2750
        %v2752 = vrot.slane %v2736, %v2751
        %v2754 = vunpack.c.l.s4 1966171168
        %v2755 = vunpack.c.0.s8 %v2754
        %v2756 = vlaneseq
        %v2757 = vshrl.u32 %v2756, 7
        %v2758 = vsub.s32 %v2755, %v2757
        %v2759 = vrot.slane %v2737, %v2758
        %v2761 = vunpack.c.l.s4 1966171168
        %v2762 = vunpack.c.0.s8 %v2761
        %v2763 = vlaneseq
        %v2764 = vshrl.u32 %v2763, 7
        %v2765 = vsub.s32 %v2762, %v2764
        %v2766 = vrot.slane %v2738, %v2765
        %v2767 = vcombine.low %v2745, %v2752
        %v2768 = vcombine.low %v2759, %v2766
        %v2770 = vunpack.c.l.s4 1966171168
        %v2771 = vunpack.c.0.s8 %v2770
        %v2772 = vlaneseq
        %v2773 = vshrl.u32 %v2772, 7
        %v2774 = vsub.s32 %v2771, %v2773
        %v2775 = vrot.slane %v2767, %v2774
        %v2777 = vunpack.c.l.s4 1966171168
        %v2778 = vunpack.c.0.s8 %v2777
        %v2779 = vlaneseq
        %v2780 = vshrl.u32 %v2779, 7
        %v2781 = vsub.s32 %v2778, %v2780
        %v2782 = vrot.slane %v2768, %v2781
        %v2783 = vcombine.low %v2775, %v2782
        %v2784 = vcombine.low %v1681, %v1685
        %v2785 = vcombine.low %v1689, %v1693
        %v2786 = vcombine.low %v1697, %v1701
        %v2787 = vcombine.low %v1705, %v1709
        %v2789 = vunpack.c.l.s4 1966171168
        %v2790 = vunpack.c.0.s8 %v2789
        %v2791 = vlaneseq
        %v2792 = vshrl.u32 %v2791, 7
        %v2793 = vsub.s32 %v2790, %v2792
        %v2794 = vrot.slane %v2784, %v2793
        %v2796 = vunpack.c.l.s4 1966171168
        %v2797 = vunpack.c.0.s8 %v2796
        %v2798 = vlaneseq
        %v2799 = vshrl.u32 %v2798, 7
        %v2800 = vsub.s32 %v2797, %v2799
        %v2801 = vrot.slane %v2785, %v2800
        %v2803 = vunpack.c.l.s4 1966171168
        %v2804 = vunpack.c.0.s8 %v2803
        %v2805 = vlaneseq
        %v2806 = vshrl.u32 %v2805, 7
        %v2807 = vsub.s32 %v2804, %v2806
        %v2808 = vrot.slane %v2786, %v2807
        %v2810 = vunpack.c.l.s4 1966171168
        %v2811 = vunpack.c.0.s8 %v2810
        %v2812 = vlaneseq
        %v2813 = vshrl.u32 %v2812, 7
        %v2814 = vsub.s32 %v2811, %v2813
        %v2815 = vrot.slane %v2787, %v2814
        %v2816 = vcombine.low %v2794, %v2801
        %v2817 = vcombine.low %v2808, %v2815
        %v2819 = vunpack.c.l.s4 1966171168
        %v2820 = vunpack.c.0.s8 %v2819
        %v2821 = vlaneseq
        %v2822 = vshrl.u32 %v2821, 7
        %v2823 = vsub.s32 %v2820, %v2822
        %v2824 = vrot.slane %v2816, %v2823
        %v2826 = vunpack.c.l.s4 1966171168
        %v2827 = vunpack.c.0.s8 %v2826
        %v2828 = vlaneseq
        %v2829 = vshrl.u32 %v2828, 7
        %v2830 = vsub.s32 %v2827, %v2829
        %v2831 = vrot.slane %v2817, %v2830
        %v2832 = vcombine.low %v2824, %v2831
        %v2833 = vcombine.low %v1713, %v1717
        %v2834 = vcombine.low %v1721, %v1725
        %v2835 = vcombine.low %v1729, %v1733
        %v2836 = vcombine.low %v1737, %v1741
        %v2838 = vunpack.c.l.s4 1966171168
        %v2839 = vunpack.c.0.s8 %v2838
        %v2840 = vlaneseq
        %v2841 = vshrl.u32 %v2840, 7
        %v2842 = vsub.s32 %v2839, %v2841
        %v2843 = vrot.slane %v2833, %v2842
        %v2845 = vunpack.c.l.s4 1966171168
        %v2846 = vunpack.c.0.s8 %v2845
        %v2847 = vlaneseq
        %v2848 = vshrl.u32 %v2847, 7
        %v2849 = vsub.s32 %v2846, %v2848
        %v2850 = vrot.slane %v2834, %v2849
        %v2852 = vunpack.c.l.s4 1966171168
        %v2853 = vunpack.c.0.s8 %v2852
        %v2854 = vlaneseq
        %v2855 = vshrl.u32 %v2854, 7
        %v2856 = vsub.s32 %v2853, %v2855
        %v2857 = vrot.slane %v2835, %v2856
        %v2859 = vunpack.c.l.s4 1966171168
        %v2860 = vunpack.c.0.s8 %v2859
        %v2861 = vlaneseq
        %v2862 = vshrl.u32 %v2861, 7
        %v2863 = vsub.s32 %v2860, %v2862
        %v2864 = vrot.slane %v2836, %v2863
        %v2865 = vcombine.low %v2843, %v2850
        %v2866 = vcombine.low %v2857, %v2864
        %v2868 = vunpack.c.l.s4 1966171168
        %v2869 = vunpack.c.0.s8 %v2868
        %v2870 = vlaneseq
        %v2871 = vshrl.u32 %v2870, 7
        %v2872 = vsub.s32 %v2869, %v2871
        %v2873 = vrot.slane %v2865, %v2872
        %v2875 = vunpack.c.l.s4 1966171168
        %v2876 = vunpack.c.0.s8 %v2875
        %v2877 = vlaneseq
        %v2878 = vshrl.u32 %v2877, 7
        %v2879 = vsub.s32 %v2876, %v2878
        %v2880 = vrot.slane %v2866, %v2879
        %v2881 = vcombine.low %v2873, %v2880
        %v2882 = vcombine.low %v1745, %v1749
        %v2883 = vcombine.low %v1753, %v1757
        %v2884 = vcombine.low %v1761, %v1765
        %v2885 = vcombine.low %v1769, %v1773
        %v2887 = vunpack.c.l.s4 1966171168
        %v2888 = vunpack.c.0.s8 %v2887
        %v2889 = vlaneseq
        %v2890 = vshrl.u32 %v2889, 7
        %v2891 = vsub.s32 %v2888, %v2890
        %v2892 = vrot.slane %v2882, %v2891
        %v2894 = vunpack.c.l.s4 1966171168
        %v2895 = vunpack.c.0.s8 %v2894
        %v2896 = vlaneseq
        %v2897 = vshrl.u32 %v2896, 7
        %v2898 = vsub.s32 %v2895, %v2897
        %v2899 = vrot.slane %v2883, %v2898
        %v2901 = vunpack.c.l.s4 1966171168
        %v2902 = vunpack.c.0.s8 %v2901
        %v2903 = vlaneseq
        %v2904 = vshrl.u32 %v2903, 7
        %v2905 = vsub.s32 %v2902, %v2904
        %v2906 = vrot.slane %v2884, %v2905
        %v2908 = vunpack.c.l.s4 1966171168
        %v2909 = vunpack.c.0.s8 %v2908
        %v2910 = vlaneseq
        %v2911 = vshrl.u32 %v2910, 7
        %v2912 = vsub.s32 %v2909, %v2911
        %v2913 = vrot.slane %v2885, %v2912
        %v2914 = vcombine.low %v2892, %v2899
        %v2915 = vcombine.low %v2906, %v2913
        %v2917 = vunpack.c.l.s4 1966171168
        %v2918 = vunpack.c.0.s8 %v2917
        %v2919 = vlaneseq
        %v2920 = vshrl.u32 %v2919, 7
        %v2921 = vsub.s32 %v2918, %v2920
        %v2922 = vrot.slane %v2914, %v2921
        %v2924 = vunpack.c.l.s4 1966171168
        %v2925 = vunpack.c.0.s8 %v2924
        %v2926 = vlaneseq
        %v2927 = vshrl.u32 %v2926, 7
        %v2928 = vsub.s32 %v2925, %v2927
        %v2929 = vrot.slane %v2915, %v2928
        %v2930 = vcombine.low %v2922, %v2929
        %v2931 = vcombine.low %v1777, %v1781
        %v2932 = vcombine.low %v1785, %v1789
        %v2933 = vcombine.low %v1793, %v1797
        %v2934 = vcombine.low %v1801, %v1805
        %v2936 = vunpack.c.l.s4 1966171168
        %v2937 = vunpack.c.0.s8 %v2936
        %v2938 = vlaneseq
        %v2939 = vshrl.u32 %v2938, 7
        %v2940 = vsub.s32 %v2937, %v2939
        %v2941 = vrot.slane %v2931, %v2940
        %v2943 = vunpack.c.l.s4 1966171168
        %v2944 = vunpack.c.0.s8 %v2943
        %v2945 = vlaneseq
        %v2946 = vshrl.u32 %v2945, 7
        %v2947 = vsub.s32 %v2944, %v2946
        %v2948 = vrot.slane %v2932, %v2947
        %v2950 = vunpack.c.l.s4 1966171168
        %v2951 = vunpack.c.0.s8 %v2950
        %v2952 = vlaneseq
        %v2953 = vshrl.u32 %v2952, 7
        %v2954 = vsub.s32 %v2951, %v2953
        %v2955 = vrot.slane %v2933, %v2954
        %v2957 = vunpack.c.l.s4 1966171168
        %v2958 = vunpack.c.0.s8 %v2957
        %v2959 = vlaneseq
        %v2960 = vshrl.u32 %v2959, 7
        %v2961 = vsub.s32 %v2958, %v2960
        %v2962 = vrot.slane %v2934, %v2961
        %v2963 = vcombine.low %v2941, %v2948
        %v2964 = vcombine.low %v2955, %v2962
        %v2966 = vunpack.c.l.s4 1966171168
        %v2967 = vunpack.c.0.s8 %v2966
        %v2968 = vlaneseq
        %v2969 = vshrl.u32 %v2968, 7
        %v2970 = vsub.s32 %v2967, %v2969
        %v2971 = vrot.slane %v2963, %v2970
        %v2973 = vunpack.c.l.s4 1966171168
        %v2974 = vunpack.c.0.s8 %v2973
        %v2975 = vlaneseq
        %v2976 = vshrl.u32 %v2975, 7
        %v2977 = vsub.s32 %v2974, %v2976
        %v2978 = vrot.slane %v2964, %v2977
        %v2979 = vcombine.low %v2971, %v2978
        %v2980 = vcombine.low %v1809, %v1813
        %v2981 = vcombine.low %v1817, %v1821
        %v2982 = vcombine.low %v1825, %v1829
        %v2983 = vcombine.low %v1833, %v1837
        %v2985 = vunpack.c.l.s4 1966171168
        %v2986 = vunpack.c.0.s8 %v2985
        %v2987 = vlaneseq
        %v2988 = vshrl.u32 %v2987, 7
        %v2989 = vsub.s32 %v2986, %v2988
        %v2990 = vrot.slane %v2980, %v2989
        %v2992 = vunpack.c.l.s4 1966171168
        %v2993 = vunpack.c.0.s8 %v2992
        %v2994 = vlaneseq
        %v2995 = vshrl.u32 %v2994, 7
        %v2996 = vsub.s32 %v2993, %v2995
        %v2997 = vrot.slane %v2981, %v2996
        %v2999 = vunpack.c.l.s4 1966171168
        %v3000 = vunpack.c.0.s8 %v2999
        %v3001 = vlaneseq
        %v3002 = vshrl.u32 %v3001, 7
        %v3003 = vsub.s32 %v3000, %v3002
        %v3004 = vrot.slane %v2982, %v3003
        %v3006 = vunpack.c.l.s4 1966171168
        %v3007 = vunpack.c.0.s8 %v3006
        %v3008 = vlaneseq
        %v3009 = vshrl.u32 %v3008, 7
        %v3010 = vsub.s32 %v3007, %v3009
        %v3011 = vrot.slane %v2983, %v3010
        %v3012 = vcombine.low %v2990, %v2997
        %v3013 = vcombine.low %v3004, %v3011
        %v3015 = vunpack.c.l.s4 1966171168
        %v3016 = vunpack.c.0.s8 %v3015
        %v3017 = vlaneseq
        %v3018 = vshrl.u32 %v3017, 7
        %v3019 = vsub.s32 %v3016, %v3018
        %v3020 = vrot.slane %v3012, %v3019
        %v3022 = vunpack.c.l.s4 1966171168
        %v3023 = vunpack.c.0.s8 %v3022
        %v3024 = vlaneseq
        %v3025 = vshrl.u32 %v3024, 7
        %v3026 = vsub.s32 %v3023, %v3025
        %v3027 = vrot.slane %v3013, %v3026
        %v3028 = vcombine.low %v3020, %v3027
        %v3029 = vcombine.low %v1841, %v1845
        %v3030 = vcombine.low %v1849, %v1853
        %v3031 = vcombine.low %v1857, %v1861
        %v3032 = vcombine.low %v1865, %v1869
        %v3034 = vunpack.c.l.s4 1966171168
        %v3035 = vunpack.c.0.s8 %v3034
        %v3036 = vlaneseq
        %v3037 = vshrl.u32 %v3036, 7
        %v3038 = vsub.s32 %v3035, %v3037
        %v3039 = vrot.slane %v3029, %v3038
        %v3041 = vunpack.c.l.s4 1966171168
        %v3042 = vunpack.c.0.s8 %v3041
        %v3043 = vlaneseq
        %v3044 = vshrl.u32 %v3043, 7
        %v3045 = vsub.s32 %v3042, %v3044
        %v3046 = vrot.slane %v3030, %v3045
        %v3048 = vunpack.c.l.s4 1966171168
        %v3049 = vunpack.c.0.s8 %v3048
        %v3050 = vlaneseq
        %v3051 = vshrl.u32 %v3050, 7
        %v3052 = vsub.s32 %v3049, %v3051
        %v3053 = vrot.slane %v3031, %v3052
        %v3055 = vunpack.c.l.s4 1966171168
        %v3056 = vunpack.c.0.s8 %v3055
        %v3057 = vlaneseq
        %v3058 = vshrl.u32 %v3057, 7
        %v3059 = vsub.s32 %v3056, %v3058
        %v3060 = vrot.slane %v3032, %v3059
        %v3061 = vcombine.low %v3039, %v3046
        %v3062 = vcombine.low %v3053, %v3060
        %v3064 = vunpack.c.l.s4 1966171168
        %v3065 = vunpack.c.0.s8 %v3064
        %v3066 = vlaneseq
        %v3067 = vshrl.u32 %v3066, 7
        %v3068 = vsub.s32 %v3065, %v3067
        %v3069 = vrot.slane %v3061, %v3068
        %v3071 = vunpack.c.l.s4 1966171168
        %v3072 = vunpack.c.0.s8 %v3071
        %v3073 = vlaneseq
        %v3074 = vshrl.u32 %v3073, 7
        %v3075 = vsub.s32 %v3072, %v3074
        %v3076 = vrot.slane %v3062, %v3075
        %v3077 = vcombine.low %v3069, %v3076
        %v3078 = vcombine.low %v1873, %v1877
        %v3079 = vcombine.low %v1881, %v1885
        %v3080 = vcombine.low %v1889, %v1893
        %v3081 = vcombine.low %v1897, %v1901
        %v3083 = vunpack.c.l.s4 1966171168
        %v3084 = vunpack.c.0.s8 %v3083
        %v3085 = vlaneseq
        %v3086 = vshrl.u32 %v3085, 7
        %v3087 = vsub.s32 %v3084, %v3086
        %v3088 = vrot.slane %v3078, %v3087
        %v3090 = vunpack.c.l.s4 1966171168
        %v3091 = vunpack.c.0.s8 %v3090
        %v3092 = vlaneseq
        %v3093 = vshrl.u32 %v3092, 7
        %v3094 = vsub.s32 %v3091, %v3093
        %v3095 = vrot.slane %v3079, %v3094
        %v3097 = vunpack.c.l.s4 1966171168
        %v3098 = vunpack.c.0.s8 %v3097
        %v3099 = vlaneseq
        %v3100 = vshrl.u32 %v3099, 7
        %v3101 = vsub.s32 %v3098, %v3100
        %v3102 = vrot.slane %v3080, %v3101
        %v3104 = vunpack.c.l.s4 1966171168
        %v3105 = vunpack.c.0.s8 %v3104
        %v3106 = vlaneseq
        %v3107 = vshrl.u32 %v3106, 7
        %v3108 = vsub.s32 %v3105, %v3107
        %v3109 = vrot.slane %v3081, %v3108
        %v3110 = vcombine.low %v3088, %v3095
        %v3111 = vcombine.low %v3102, %v3109
        %v3113 = vunpack.c.l.s4 1966171168
        %v3114 = vunpack.c.0.s8 %v3113
        %v3115 = vlaneseq
        %v3116 = vshrl.u32 %v3115, 7
        %v3117 = vsub.s32 %v3114, %v3116
        %v3118 = vrot.slane %v3110, %v3117
        %v3120 = vunpack.c.l.s4 1966171168
        %v3121 = vunpack.c.0.s8 %v3120
        %v3122 = vlaneseq
        %v3123 = vshrl.u32 %v3122, 7
        %v3124 = vsub.s32 %v3121, %v3123
        %v3125 = vrot.slane %v3111, %v3124
        %v3126 = vcombine.low %v3118, %v3125
        %3127 = vset.pattern.permute.xlu0 0
        %3128 = vperm.xlu0 %3127, %v1950
        %v3129 = vpop.permute.xlu0 %3128
        %3130 = vset.pattern.permute.xlu0 0
        %3131 = vperm.xlu0 %3130, %v1999
        %v3132 = vpop.permute.xlu0 %3131
        %3133 = vset.pattern.permute.xlu0 0
        %3134 = vperm.xlu0 %3133, %v2048
        %v3135 = vpop.permute.xlu0 %3134
        %3136 = vset.pattern.permute.xlu0 0
        %3137 = vperm.xlu0 %3136, %v2097
        %v3138 = vpop.permute.xlu0 %3137
        %3139 = vset.pattern.permute.xlu0 0
        %3140 = vperm.xlu0 %3139, %v2146
        %v3141 = vpop.permute.xlu0 %3140
        %3142 = vset.pattern.permute.xlu0 0
        %3143 = vperm.xlu0 %3142, %v2195
        %v3144 = vpop.permute.xlu0 %3143
        %3145 = vset.pattern.permute.xlu0 0
        %3146 = vperm.xlu0 %3145, %v2244
        %v3147 = vpop.permute.xlu0 %3146
        %3148 = vset.pattern.permute.xlu0 0
        %3149 = vperm.xlu0 %3148, %v2293
        %v3150 = vpop.permute.xlu0 %3149
        %3151 = vset.pattern.permute.xlu0 0
        %3152 = vperm.xlu0 %3151, %v2342
        %v3153 = vpop.permute.xlu0 %3152
        %3154 = vset.pattern.permute.xlu0 0
        %3155 = vperm.xlu0 %3154, %v2391
        %v3156 = vpop.permute.xlu0 %3155
        %3157 = vset.pattern.permute.xlu0 0
        %3158 = vperm.xlu0 %3157, %v2440
        %v3159 = vpop.permute.xlu0 %3158
        %3160 = vset.pattern.permute.xlu0 0
        %3161 = vperm.xlu0 %3160, %v2489
        %v3162 = vpop.permute.xlu0 %3161
        %3163 = vset.pattern.permute.xlu0 0
        %3164 = vperm.xlu0 %3163, %v2538
        %v3165 = vpop.permute.xlu0 %3164
        %3166 = vset.pattern.permute.xlu0 0
        %3167 = vperm.xlu0 %3166, %v2587
        %v3168 = vpop.permute.xlu0 %3167
        %3169 = vset.pattern.permute.xlu0 0
        %3170 = vperm.xlu0 %3169, %v2636
        %v3171 = vpop.permute.xlu0 %3170
        %3172 = vset.pattern.permute.xlu0 0
        %3173 = vperm.xlu0 %3172, %v2685
        %v3174 = vpop.permute.xlu0 %3173
        %3175 = vset.pattern.permute.xlu0 0
        %3176 = vperm.xlu0 %3175, %v2734
        %v3177 = vpop.permute.xlu0 %3176
        %3178 = vset.pattern.permute.xlu0 0
        %3179 = vperm.xlu0 %3178, %v2783
        %v3180 = vpop.permute.xlu0 %3179
        %3181 = vset.pattern.permute.xlu0 0
        %3182 = vperm.xlu0 %3181, %v2832
        %v3183 = vpop.permute.xlu0 %3182
        %3184 = vset.pattern.permute.xlu0 0
        %3185 = vperm.xlu0 %3184, %v2881
        %v3186 = vpop.permute.xlu0 %3185
        %3187 = vset.pattern.permute.xlu0 0
        %3188 = vperm.xlu0 %3187, %v2930
        %v3189 = vpop.permute.xlu0 %3188
        %3190 = vset.pattern.permute.xlu0 0
        %3191 = vperm.xlu0 %3190, %v2979
        %v3192 = vpop.permute.xlu0 %3191
        %3193 = vset.pattern.permute.xlu0 0
        %3194 = vperm.xlu0 %3193, %v3028
        %v3195 = vpop.permute.xlu0 %3194
        %3196 = vset.pattern.permute.xlu0 0
        %3197 = vperm.xlu0 %3196, %v3077
        %v3198 = vpop.permute.xlu0 %3197
        %3199 = vset.pattern.permute.xlu0 0
        %3200 = vperm.xlu0 %3199, %v3126
        %v3201 = vpop.permute.xlu0 %3200
        %v3202 = vlaneseq
        %v3203 = vshrl.u32 %v3202, 7
        %v3204 = vsub.s32 %v651, %v3203
        %v3205 = vrot.slane %v3129, %v3204
        %v3206 = vadd.s32 %v651, 4294967288
        %v3207 = vlaneseq
        %v3208 = vshrl.u32 %v3207, 7
        %v3209 = vsub.s32 %v3206, %v3208
        %v3210 = vrot.slane %v3132, %v3209
        %vm3211 = vcmask 130112
        %v3212 = vsel %vm3211, %v3210, %v3205
        %v3213 = vadd.s32 %v651, 4294967280
        %v3214 = vlaneseq
        %v3215 = vshrl.u32 %v3214, 7
        %v3216 = vsub.s32 %v3213, %v3215
        %v3217 = vrot.slane %v3135, %v3216
        %vm3218 = vcmask 195712
        %v3219 = vsel %vm3218, %v3217, %v3212
        %v3220 = vadd.s32 %v651, 4294967272
        %v3221 = vlaneseq
        %v3222 = vshrl.u32 %v3221, 7
        %v3223 = vsub.s32 %v3220, %v3222
        %v3224 = vrot.slane %v3138, %v3223
        %vm3225 = vcmask 261312
        %v3226 = vsel %vm3225, %v3224, %v3219
        %v3227 = vadd.s32 %v651, 4294967264
        %v3228 = vlaneseq
        %v3229 = vshrl.u32 %v3228, 7
        %v3230 = vsub.s32 %v3227, %v3229
        %v3231 = vrot.slane %v3141, %v3230
        %vm3232 = vcmask 326912
        %v3233 = vsel %vm3232, %v3231, %v3226
        %v3234 = vadd.s32 %v651, 4294967256
        %v3235 = vlaneseq
        %v3236 = vshrl.u32 %v3235, 7
        %v3237 = vsub.s32 %v3234, %v3236
        %v3238 = vrot.slane %v3144, %v3237
        %vm3239 = vcmask 392512
        %v3240 = vsel %vm3239, %v3238, %v3233
        %v3241 = vadd.s32 %v651, 4294967248
        %v3242 = vlaneseq
        %v3243 = vshrl.u32 %v3242, 7
        %v3244 = vsub.s32 %v3241, %v3243
        %v3245 = vrot.slane %v3147, %v3244
        %vm3246 = vcmask 458112
        %v3247 = vsel %vm3246, %v3245, %v3240
        %v3248 = vadd.s32 %v651, 4294967240
        %v3249 = vlaneseq
        %v3250 = vshrl.u32 %v3249, 7
        %v3251 = vsub.s32 %v3248, %v3250
        %v3252 = vrot.slane %v3150, %v3251
        %vm3253 = vcmask 523712
        %v3254 = vsel %vm3253, %v3252, %v3247
        %v3255 = vadd.s32 %v651, 4294967232
        %v3256 = vlaneseq
        %v3257 = vshrl.u32 %v3256, 7
        %v3258 = vsub.s32 %v3255, %v3257
        %v3259 = vrot.slane %v3153, %v3258
        %vm3260 = vcmask 589312
        %v3261 = vsel %vm3260, %v3259, %v3254
        %v3262 = vadd.s32 %v651, 4294967224
        %v3263 = vlaneseq
        %v3264 = vshrl.u32 %v3263, 7
        %v3265 = vsub.s32 %v3262, %v3264
        %v3266 = vrot.slane %v3156, %v3265
        %vm3267 = vcmask 654912
        %v3268 = vsel %vm3267, %v3266, %v3261
        %v3269 = vadd.s32 %v651, 4294967216
        %v3270 = vlaneseq
        %v3271 = vshrl.u32 %v3270, 7
        %v3272 = vsub.s32 %v3269, %v3271
        %v3273 = vrot.slane %v3159, %v3272
        %vm3274 = vcmask 720512
        %v3275 = vsel %vm3274, %v3273, %v3268
        %v3276 = vadd.s32 %v651, 4294967208
        %v3277 = vlaneseq
        %v3278 = vshrl.u32 %v3277, 7
        %v3279 = vsub.s32 %v3276, %v3278
        %v3280 = vrot.slane %v3162, %v3279
        %vm3281 = vcmask 786112
        %v3282 = vsel %vm3281, %v3280, %v3275
        %v3283 = vadd.s32 %v651, 4294967200
        %v3284 = vlaneseq
        %v3285 = vshrl.u32 %v3284, 7
        %v3286 = vsub.s32 %v3283, %v3285
        %v3287 = vrot.slane %v3165, %v3286
        %vm3288 = vcmask 851712
        %v3289 = vsel %vm3288, %v3287, %v3282
        %v3290 = vadd.s32 %v651, 4294967192
        %v3291 = vlaneseq
        %v3292 = vshrl.u32 %v3291, 7
        %v3293 = vsub.s32 %v3290, %v3292
        %v3294 = vrot.slane %v3168, %v3293
        %vm3295 = vcmask 917312
        %v3296 = vsel %vm3295, %v3294, %v3289
        %v3297 = vadd.s32 %v651, 4294967184
        %v3298 = vlaneseq
        %v3299 = vshrl.u32 %v3298, 7
        %v3300 = vsub.s32 %v3297, %v3299
        %v3301 = vrot.slane %v3171, %v3300
        %vm3302 = vcmask 982912
        %v3303 = vsel %vm3302, %v3301, %v3296
        %v3304 = vadd.s32 %v651, 4294967176
        %v3305 = vlaneseq
        %v3306 = vshrl.u32 %v3305, 7
        %v3307 = vsub.s32 %v3304, %v3306
        %v3308 = vrot.slane %v3174, %v3307
        %vm3309 = vcmask 1048512
        %v3310 = vsel %vm3309, %v3308, %v3303
        %v3311 = vlaneseq
        %v3312 = vshrl.u32 %v3311, 7
        %v3313 = vsub.s32 %v651, %v3312
        %v3314 = vrot.slane %v3177, %v3313
        %v3315 = vlaneseq
        %v3316 = vshrl.u32 %v3315, 7
        %v3317 = vsub.s32 %v3206, %v3316
        %v3318 = vrot.slane %v3180, %v3317
        %v3319 = vsel %vm3211, %v3318, %v3314
        %v3320 = vlaneseq
        %v3321 = vshrl.u32 %v3320, 7
        %v3322 = vsub.s32 %v3213, %v3321
        %v3323 = vrot.slane %v3183, %v3322
        %v3324 = vsel %vm3218, %v3323, %v3319
        %v3325 = vlaneseq
        %v3326 = vshrl.u32 %v3325, 7
        %v3327 = vsub.s32 %v3220, %v3326
        %v3328 = vrot.slane %v3186, %v3327
        %v3329 = vsel %vm3225, %v3328, %v3324
        %v3330 = vlaneseq
        %v3331 = vshrl.u32 %v3330, 7
        %v3332 = vsub.s32 %v3227, %v3331
        %v3333 = vrot.slane %v3189, %v3332
        %v3334 = vsel %vm3232, %v3333, %v3329
        %v3335 = vlaneseq
        %v3336 = vshrl.u32 %v3335, 7
        %v3337 = vsub.s32 %v3234, %v3336
        %v3338 = vrot.slane %v3192, %v3337
        %v3339 = vsel %vm3239, %v3338, %v3334
        %v3340 = vlaneseq
        %v3341 = vshrl.u32 %v3340, 7
        %v3342 = vsub.s32 %v3241, %v3341
        %v3343 = vrot.slane %v3195, %v3342
        %v3344 = vsel %vm3246, %v3343, %v3339
        %v3345 = vlaneseq
        %v3346 = vshrl.u32 %v3345, 7
        %v3347 = vsub.s32 %v3248, %v3346
        %v3348 = vrot.slane %v3198, %v3347
        %v3349 = vsel %vm3253, %v3348, %v3344
        %v3350 = vlaneseq
        %v3351 = vshrl.u32 %v3350, 7
        %v3352 = vsub.s32 %v3255, %v3351
        %v3353 = vrot.slane %v3201, %v3352
        %v3354 = vsel %vm3260, %v3353, %v3349
        %v3355 = vcombine.low %v3310, %v3354
        %v3357 = vunpack.c.l.s4 1966171168
        %v3358 = vunpack.c.0.s8 %v3357
        %v3359 = vlaneseq
        %v3360 = vshrl.u32 %v3359, 7
        %v3361 = vsub.s32 %v3358, %v3360
        %v3362 = vrot.slane %v3355, %v3361
        %v3364 = vunpack.c.l.s4 1966171168
        %v3365 = vunpack.c.0.s8 %v3364
        %v3366 = vlaneseq
        %v3367 = vshrl.u32 %v3366, 7
        %v3368 = vsub.s32 %v3365, %v3367
        %v3369 = vrot.slane %v3362, %v3368
        %v3370 = vlaneseq
        %vm3371 = vcmp.ge.s32.totalorder %v3370, 0
        %vm3372 = vcmp.lt.s32.totalorder %v3370, 200
        %vm3373 = vmand %vm3371, %vm3372
        %3374 = vst.msk [vmem:[%s311] sm:$0x3] %vm3373, %v3369
        %vm3375 = vcmp.eq.s32.totalorder %v651, %v765
        %vm3376 = vcmp.eq.s32.totalorder %v651, %v779
        %vm3377 = vcmp.eq.s32.totalorder %v651, %v793
        %vm3378 = vcmp.eq.s32.totalorder %v651, %v807
        %vm3379 = vcmp.eq.s32.totalorder %v651, %v821
        %vm3380 = vcmp.eq.s32.totalorder %v651, %v835
        %vm3381 = vcmp.eq.s32.totalorder %v651, %v849
        %vm3382 = vcmp.eq.s32.totalorder %v651, %v863
        %vm3383 = vcmp.eq.s32.totalorder %v651, %v877
        %vm3384 = vcmp.eq.s32.totalorder %v651, %v891
        %vm3385 = vcmp.eq.s32.totalorder %v651, %v905
        %vm3386 = vcmp.eq.s32.totalorder %v651, %v919
        %vm3387 = vcmp.eq.s32.totalorder %v651, %v933
        %vm3388 = vcmp.eq.s32.totalorder %v651, %v947
        %vm3389 = vcmp.eq.s32.totalorder %v651, %v961
        %vm3390 = vcmp.eq.s32.totalorder %v651, %v975
        %vm3391 = vcmp.eq.s32.totalorder %v651, %v989
        %vm3392 = vcmp.eq.s32.totalorder %v651, %v1003
        %vm3393 = vcmp.eq.s32.totalorder %v651, %v1017
        %vm3394 = vcmp.eq.s32.totalorder %v651, %v1031
        %vm3395 = vcmp.eq.s32.totalorder %v651, %v1045
        %vm3396 = vcmp.eq.s32.totalorder %v651, %v1059
        %vm3397 = vcmp.eq.s32.totalorder %v651, %v1073
        %vm3398 = vcmp.eq.s32.totalorder %v651, %v1087
        %vm3399 = vcmp.eq.s32.totalorder %v651, %v1101
        %v3400 = vsel %vm3375, 1, 0
        %v3401 = vsel %vm3376, 1, 0
        %v3402 = vsel %vm3377, 1, 0
        %v3403 = vsel %vm3378, 1, 0
        %v3404 = vsel %vm3379, 1, 0
        %v3405 = vsel %vm3380, 1, 0
        %v3406 = vsel %vm3381, 1, 0
        %v3407 = vsel %vm3382, 1, 0
        %v3408 = vsel %vm3383, 1, 0
        %v3409 = vsel %vm3384, 1, 0
        %v3410 = vsel %vm3385, 1, 0
        %v3411 = vsel %vm3386, 1, 0
        %v3412 = vsel %vm3387, 1, 0
        %v3413 = vsel %vm3388, 1, 0
        %v3414 = vsel %vm3389, 1, 0
        %v3415 = vsel %vm3390, 1, 0
        %v3416 = vsel %vm3391, 1, 0
        %v3417 = vsel %vm3392, 1, 0
        %v3418 = vsel %vm3393, 1, 0
        %v3419 = vsel %vm3394, 1, 0
        %v3420 = vsel %vm3395, 1, 0
        %v3421 = vsel %vm3396, 1, 0
        %v3422 = vsel %vm3397, 1, 0
        %v3423 = vsel %vm3398, 1, 0
        %v3424 = vsel %vm3399, 1, 0
        %v3425 = vcvt.s32.f32 %v3400
        %v3426 = vcvt.s32.f32 %v3401
        %v3427 = vcvt.s32.f32 %v3402
        %v3428 = vcvt.s32.f32 %v3403
        %v3429 = vcvt.s32.f32 %v3404
        %v3430 = vcvt.s32.f32 %v3405
        %v3431 = vcvt.s32.f32 %v3406
        %v3432 = vcvt.s32.f32 %v3407
        %v3433 = vcvt.s32.f32 %v3408
        %v3434 = vcvt.s32.f32 %v3409
        %v3435 = vcvt.s32.f32 %v3410
        %v3436 = vcvt.s32.f32 %v3411
        %v3437 = vcvt.s32.f32 %v3412
        %v3438 = vcvt.s32.f32 %v3413
        %v3439 = vcvt.s32.f32 %v3414
        %v3440 = vcvt.s32.f32 %v3415
        %v3441 = vcvt.s32.f32 %v3416
        %v3442 = vcvt.s32.f32 %v3417
        %v3443 = vcvt.s32.f32 %v3418
        %v3444 = vcvt.s32.f32 %v3419
        %v3445 = vcvt.s32.f32 %v3420
        %v3446 = vcvt.s32.f32 %v3421
        %v3447 = vcvt.s32.f32 %v3422
        %v3448 = vcvt.s32.f32 %v3423
        %v3449 = vcvt.s32.f32 %v3424
        %3450 = vmatprep.subr.mxu0 0.0
        %3451 = vmatpush1.xpose.msra.mxu0 %v3425
        %3452 = vmatprep.subr.mxu0 0.0
        %3453 = vmatpush1.xpose.msra.mxu0 %v3426
        %3454 = vmatprep.subr.mxu0 0.0
        %3455 = vmatpush1.xpose.msra.mxu0 %v3427
        %3456 = vmatprep.subr.mxu0 0.0
        %3457 = vmatpush1.xpose.msra.mxu0 %v3428
        %3458 = vmatprep.subr.mxu0 0.0
        %3459 = vmatpush1.xpose.msra.mxu0 %v3429
        %3460 = vmatprep.subr.mxu0 0.0
        %3461 = vmatpush1.xpose.msra.mxu0 %v3430
        %3462 = vmatprep.subr.mxu0 0.0
        %3463 = vmatpush1.xpose.msra.mxu0 %v3431
        %3464 = vmatprep.subr.mxu0 0.0
        %3465 = vmatpush1.xpose.msra.mxu0 %v3432
        %3466 = vmatprep.subr.mxu0 0.0
        %3467 = vmatpush1.xpose.msra.mxu0 %v3433
        %3468 = vmatprep.subr.mxu0 0.0
        %3469 = vmatpush1.xpose.msra.mxu0 %v3434
        %3470 = vmatprep.subr.mxu0 0.0
        %3471 = vmatpush1.xpose.msra.mxu0 %v3435
        %3472 = vmatprep.subr.mxu0 0.0
        %3473 = vmatpush1.xpose.msra.mxu0 %v3436
        %3474 = vmatprep.subr.mxu0 0.0
        %3475 = vmatpush1.xpose.msra.mxu0 %v3437
        %3476 = vmatprep.subr.mxu0 0.0
        %3477 = vmatpush1.xpose.msra.mxu0 %v3438
        %3478 = vmatprep.subr.mxu0 0.0
        %3479 = vmatpush1.xpose.msra.mxu0 %v3439
        %3480 = vmatprep.subr.mxu0 0.0
        %3481 = vmatpush1.xpose.msra.mxu0 %v3440
        %3482 = vmatprep.subr.mxu0 0.0
        %3483 = vmatpush1.xpose.msra.mxu0 %v3441
        %3484 = vmatprep.subr.mxu0 0.0
        %3485 = vmatpush1.xpose.msra.mxu0 %v3442
        %3486 = vmatprep.subr.mxu0 0.0
        %3487 = vmatpush1.xpose.msra.mxu0 %v3443
        %3488 = vmatprep.subr.mxu0 0.0
        %3489 = vmatpush1.xpose.msra.mxu0 %v3444
        %3490 = vmatprep.subr.mxu0 0.0
        %3491 = vmatpush1.xpose.msra.mxu0 %v3445
        %3492 = vmatprep.subr.mxu0 0.0
        %3493 = vmatpush1.xpose.msra.mxu0 %v3446
        %3494 = vmatprep.subr.mxu0 0.0
        %3495 = vmatpush1.xpose.msra.mxu0 %v3447
        %3496 = vmatprep.subr.mxu0 0.0
        %3497 = vmatpush1.xpose.msra.mxu0 %v3448
        %3498 = vmatprep.subr.mxu0 0.0
        %3499 = vmatpush1.xpose.msra.mxu0 %v3449
        %3500 = vmatprep.subr.mxu0 0.0
        %3501 = vmatpush1.xpose.msra.mxu0 0.0
        %3502 = vmatprep.subr.mxu0 0.0
        %3503 = vmatpush1.xpose.msra.mxu0 0.0
        %3504 = vmatprep.subr.mxu0 0.0
        %3505 = vmatpush1.xpose.msra.mxu0 0.0
        %3506 = vmatprep.subr.mxu0 0.0
        %3507 = vmatpush1.xpose.msra.mxu0 0.0
        %3508 = vmatprep.subr.mxu0 0.0
        %3509 = vmatpush1.xpose.msra.mxu0 0.0
        %3510 = vmatprep.subr.mxu0 0.0
        %3511 = vmatpush1.xpose.msra.mxu0 0.0
        %3512 = vmatprep.subr.mxu0 0.0
        %3513 = vmatpush1.xpose.msra.mxu0 0.0
        %3514 = vmatprep.mubr.f32.mxu0 0.0
        %3515 = vmatmul.mubr.f32.gmra.mrb[0].mxu0 %v348
        %v3516 = vpop.f32.mrb[0].mxu0
        %v3517 = vadd.f32 0.0, %v3516
        %v3518 = vpop.f32.mrb[0].mxu0
        %v3519 = vadd.f32 0.0, %v3518
        %3520 = vmatprep.mubr.f32.mxu0 0.0
        %3521 = vmatmul.mubr.f32.gmra.mrb[0].mxu0 %v349
        %v3522 = vpop.f32.mrb[0].mxu0
        %v3523 = vadd.f32 0.0, %v3522
        %v3524 = vpop.f32.mrb[0].mxu0
        %v3525 = vadd.f32 0.0, %v3524
        %3526 = vmatprep.mubr.f32.mxu0 0.0
        %3527 = vmatmul.mubr.f32.gmra.mrb[0].mxu0 %v350
        %v3528 = vpop.f32.mrb[0].mxu0
        %v3529 = vadd.f32 0.0, %v3528
        %v3530 = vpop.f32.mrb[0].mxu0
        %v3531 = vadd.f32 0.0, %v3530
        %3532 = vmatprep.mubr.f32.mxu0 0.0
        %3533 = vmatmul.mubr.f32.gmra.mrb[0].mxu0 %v351
        %v3534 = vpop.f32.mrb[0].mxu0
        %v3535 = vadd.f32 0.0, %v3534
        %v3536 = vpop.f32.mrb[0].mxu0
        %v3537 = vadd.f32 0.0, %v3536
        %3538 = vdwg.mxu0
        %3539 = vst [vmem:[%s274] sm:$0xff] %v3517
        %vm3540 = vcmask 588800
        %3541 = vst.msk [vmem:[%s274 + $0x8] sm:$0xff] %vm3540, %v3519
        %3542 = vst [vmem:[%s274 + $0x10] sm:$0xff] %v3523
        %3543 = vst.msk [vmem:[%s274 + $0x18] sm:$0xff] %vm3540, %v3525
        %3544 = vst [vmem:[%s274 + $0x20] sm:$0xff] %v3529
        %3545 = vst.msk [vmem:[%s274 + $0x28] sm:$0xff] %vm3540, %v3531
        %3546 = vst [vmem:[%s274 + $0x30] sm:$0xff] %v3535
        %3547 = vst.msk [vmem:[%s274 + $0x38] sm:$0xff] %vm3540, %v3537
        %s3548 = smul.u32 %s26, 200
        %v3549 = vadd.s32 %v651, 128
        %v3550 = vstv %s3548
        %v3551 = vadd.s32 %v3550, %v651
        %v3552 = vadd.s32 %v3550, %v3549
        %3553 = vxpose.xlu0.b32.start [1/16] %v319, 128
        %3554 = vxpose.xlu0.b32.cont [2/16] %v320, 128
        %3555 = vxpose.xlu0.b32.cont [3/16] %v321, 128
        %3556 = vxpose.xlu0.b32.cont [4/16] %v322, 128
        %3557 = vxpose.xlu0.b32.cont [5/16] %v323, 128
        %3558 = vxpose.xlu0.b32.cont [6/16] %v324, 128
        %3559 = vxpose.xlu0.b32.cont [7/16] %v325, 128
        %3560 = vxpose.xlu0.b32.cont [8/16] %v326, 128
        %3561 = vxpose.xlu0.b32.cont [9/16] %v327, 128
        %3562 = vxpose.xlu0.b32.cont [10/16] %v328, 128
        %3563 = vxpose.xlu0.b32.cont [11/16] %v329, 128
        %3564 = vxpose.xlu0.b32.cont [12/16] %v330, 128
        %3565 = vxpose.xlu0.b32.cont [13/16] %v331, 128
        %3566 = vxpose.xlu0.b32.cont [14/16] %v332, 128
        %3567 = vxpose.xlu0.b32.cont [15/16] %v333, 128
        %3568 = vxpose.xlu0.b32.end [16/16] %v334, 128
        %v3569 = vpop.trf.xlu0
        %v3570 = vpop.trf.xlu0
        %v3571 = vpop.trf.xlu0
        %v3572 = vpop.trf.xlu0
        %v3573 = vpop.trf.xlu0
        %v3574 = vpop.trf.xlu0
        %v3575 = vpop.trf.xlu0
        %v3576 = vpop.trf.xlu0
        %v3577 = vpop.trf.xlu0
        %v3578 = vpop.trf.xlu0
        %v3579 = vpop.trf.xlu0
        %v3580 = vpop.trf.xlu0
        %v3581 = vpop.trf.xlu0
        %v3582 = vpop.trf.xlu0
        %v3583 = vpop.trf.xlu0
        %v3584 = vpop.trf.xlu0
        %3585 = vxpose.xlu0.b32.start [1/16] %v335, 128
        %3586 = vxpose.xlu0.b32.cont [2/16] %v336, 128
        %3587 = vxpose.xlu0.b32.cont [3/16] %v337, 128
        %3588 = vxpose.xlu0.b32.cont [4/16] %v338, 128
        %3589 = vxpose.xlu0.b32.cont [5/16] %v339, 128
        %3590 = vxpose.xlu0.b32.cont [6/16] %v340, 128
        %3591 = vxpose.xlu0.b32.cont [7/16] %v341, 128
        %3592 = vxpose.xlu0.b32.cont [8/16] %v342, 128
        %3593 = vxpose.xlu0.b32.cont [9/16] %v343, 128
        %3594 = vxpose.xlu0.b32.cont [10/16] 0.0, 128
        %3595 = vxpose.xlu0.b32.cont [11/16] 0.0, 128
        %3596 = vxpose.xlu0.b32.cont [12/16] 0.0, 128
        %3597 = vxpose.xlu0.b32.cont [13/16] 0.0, 128
        %3598 = vxpose.xlu0.b32.cont [14/16] 0.0, 128
        %3599 = vxpose.xlu0.b32.cont [15/16] 0.0, 128
        %3600 = vxpose.xlu0.b32.end [16/16] 0.0, 128
        %v3601 = vpop.trf.xlu0
        %v3602 = vpop.trf.xlu0
        %v3603 = vpop.trf.xlu0
        %v3604 = vpop.trf.xlu0
        %v3605 = vpop.trf.xlu0
        %v3606 = vpop.trf.xlu0
        %v3607 = vpop.trf.xlu0
        %v3608 = vpop.trf.xlu0
        %v3609 = vpop.trf.xlu0
        %v3610 = vpop.trf.xlu0
        %v3611 = vpop.trf.xlu0
        %v3612 = vpop.trf.xlu0
        %v3613 = vpop.trf.xlu0
        %v3614 = vpop.trf.xlu0
        %v3615 = vpop.trf.xlu0
        %v3616 = vpop.trf.xlu0
        %v3617 = vsub.f32 %v3517, %v3569
        %v3618 = vsub.f32 %v3519, %v3601
        %v3619 = vsub.f32 %v3523, %v3570
        %v3620 = vsub.f32 %v3525, %v3602
        %v3621 = vsub.f32 %v3529, %v3571
        %v3622 = vsub.f32 %v3531, %v3603
        %v3623 = vsub.f32 %v3535, %v3572
        %v3624 = vsub.f32 %v3537, %v3604
        %vm3625 = vcmp.lt.s32.totalorder %v3551, 200
        %vm3626 = vcmp.lt.s32.totalorder %v3552, 200
        %v3627 = vmul.f32 %v3617, %v3617
        %v3628 = vmul.f32 %v3618, %v3618
        %v3629 = vmul.f32 %v3619, %v3619
        %v3630 = vmul.f32 %v3620, %v3620
        %v3631 = vmul.f32 %v3621, %v3621
        %v3632 = vmul.f32 %v3622, %v3622
        %v3633 = vmul.f32 %v3623, %v3623
        %v3634 = vmul.f32 %v3624, %v3624
        %v3635 = vsel %vm3625, 1, 0
        %v3636 = vsel %vm3626, 1, 0
        %vm3637 = vcmp.eq.s32.totalorder %v3635, 1
        %vm3638 = vcmp.eq.s32.totalorder %v3636, 1
        %v3639 = vsel %vm3637, %v3627, 0.0
        %v3640 = vsel %vm3638, %v3628, 0.0
        %v3641 = vsel %vm3637, %v3629, 0.0
        %v3642 = vsel %vm3638, %v3630, 0.0
        %v3643 = vsel %vm3637, %v3631, 0.0
        %v3644 = vsel %vm3638, %v3632, 0.0
        %v3645 = vsel %vm3637, %v3633, 0.0
        %v3646 = vsel %vm3638, %v3634, 0.0
        %v3647 = vsel %vm3540, %v3640, 0.0
        %v3648 = vadd.f32 %v3639, %v3647
        %v3649 = vadd.f32 %v3648, %v3641
        %v3650 = vsel %vm3540, %v3642, 0.0
        %v3651 = vadd.f32 %v3649, %v3650
        %v3652 = vadd.f32 %v3651, %v3643
        %v3653 = vsel %vm3540, %v3644, 0.0
        %v3654 = vadd.f32 %v3652, %v3653
        %v3655 = vadd.f32 %v3654, %v3645
        %v3656 = vsel %vm3540, %v3646, 0.0
        %v3657 = vadd.f32 %v3655, %v3656
        %3658 = vadd.xlane.f32.xlu0 %v3657
        %v3659 = vpop.xlane.xlu0 %3658
        %v3660 = vrot.slane %v3659, 4
        %v3661 = vadd.f32 %v3659, %v3660
        %v3662 = vrot.slane %v3661, 2
        %v3663 = vadd.f32 %v3661, %v3662
        %v3664 = vrot.slane %v3663, 1
        %v3665 = vadd.f32 %v3663, %v3664
        %s3666 = vtos %v3665
        %v3667 = vstv %s3666
        %vm3668 = vcmask 0
        %3669 = vst.msk [vmem:[%s318] sm:$0x1] %vm3668, %v3667
        %s3670 = sand.u32 %s134, 1
        %s3671 = scalar_lea.sflag [#allocation3], %s3670
        %s3672 = sand.u32 %s134, 1
        %s3673 = smul.addr %s3672, 64
        %s3674 = scalar_lea.vmem [#allocation2], %s3673
        %s3675 = smul.u32 2, %s26
        %p3676 = scmp.lt.s32.totalorder %s25, 1
        %s3677 = scalar_select %p3676, %s25, 1
        %p3678 = scmp.lt.s32.totalorder %s3675, 1
        %s3679 = scalar_select %p3678, %s3675, 1
        %s3680 = smul.addr %s3677, 2
        %s3681 = sadd.s32 %s3679, %s3680
        %s3682 = scalar_lea.vmem %s5, %s3681
        %p3683 = scmp.lt.s32.totalorder %s25, 1
        %s3684 = scalar_select %p3683, %s25, 1
        %p3685 = scmp.lt.s32.totalorder %s26, 0
        %s3686 = scalar_select %p3685, %s26, 0
        %s3687 = sadd.s32 %s3686, %s3684
        %s3688 = scalar_lea.vmem %s6, %s3687
        // Predicated region
        $region37: #{vector_quantizer_forward.1} parent=35 // pred_check
          %p3689 = pneg %p144
        $region38: #{vector_quantizer_forward.1} parent=35 // pred_check_branch
          %3691 = sbr.rel (%p3689) target = $region40
        $region39: #{vector_quantizer_forward.1} parent=35 // pred_region
          %s3692 = smul.u32 2, %s26
          %s3694 = ssub.s32 1024, 1024
          %3695 = vsyncadd %s3671, %s3694
          %s3696 = smul.addr %s25, 8
          %s3697 = sadd.s32 %s3692, %s3696
          %s3698 = smul.addr %s3697, 128
          %s3699 = scalar_lea.hbm %s4, %s3698
          %s3700 = sshll.u32 %s3674, 4
          %s3701 = int_to_ptr.vmem [resolvable:$true] %s3700
          %3706 = dma.vmem_to_hbm [thread:$0]  %s3701, 1024, %s3699, %s3671, 256, 256, 16
        $region40: #{vector_quantizer_forward.1} parent=35 // pred_fallthru
          _
        // Predicated region
        $region41: #{vector_quantizer_forward.1} parent=35 // pred_check
          %p3707 = pneg %p172
        $region42: #{vector_quantizer_forward.1} parent=35 // pred_check_branch
          %3709 = sbr.rel (%p3707) target = $region44
        $region43: #{vector_quantizer_forward.1} parent=35 // pred_region
          %s3710 = smul.u32 2, %s26
        $region44: #{vector_quantizer_forward.1} parent=35 // pred_fallthru
          _
        // Predicated region
        $region45: #{vector_quantizer_forward.1} parent=35 // pred_check
          %p3711 = pneg %p200
        $region46: #{vector_quantizer_forward.1} parent=35 // pred_check_branch
          %3713 = sbr.rel (%p3711) target = $region48
        $region47: #{vector_quantizer_forward.1} parent=35 // pred_region
          _
        $region48: #{vector_quantizer_forward.1} parent=35 // pred_fallthru
          _
      $region36: #{vector_quantizer_forward.1} parent=5 // pred_fallthru
        _
      %p3714 = scmp.le.s32.totalorder 2, %s16
      // Predicated region
      $region49: #{vector_quantizer_forward.1} parent=5 // pred_check
        %p3715 = pneg %p3714
      $region50: #{vector_quantizer_forward.1} parent=5 // pred_check_branch
        %3717 = sbr.rel (%p3715) target = $region52
      $region51: #{vector_quantizer_forward.1} parent=5 // pred_region
        %s3718 = ssub.s32 %s16, 2
        // Predicated region
        $region53: #{vector_quantizer_forward.1} parent=51 // pred_check
          %p3719 = pneg %p150
        $region54: #{vector_quantizer_forward.1} parent=51 // pred_check_branch
          %3721 = sbr.rel (%p3719) target = $region56
        $region55: #{vector_quantizer_forward.1} parent=51 // pred_region
          %s3722 = sand.u32 %s135, 1
          %s3723 = scalar_lea.sflag [#allocation3], %s3722
          %s3724 = sand.u32 %s135, 1
          %s3725 = smul.addr %s3724, 64
          %s3726 = scalar_lea.vmem [#allocation2], %s3725
          %3727 = dma.done %s3723, 1024
        $region56: #{vector_quantizer_forward.1} parent=51 // pred_fallthru
          _
        // Predicated region
        $region57: #{vector_quantizer_forward.1} parent=51 // pred_check
          %p3728 = pneg %p178
        $region58: #{vector_quantizer_forward.1} parent=51 // pred_check_branch
          %3730 = sbr.rel (%p3728) target = $region60
        $region59: #{vector_quantizer_forward.1} parent=51 // pred_region
          %s3731 = smul.u32 2, %s28
          %p3732 = scmp.lt.s32.totalorder %s27, 1
          %s3733 = scalar_select %p3732, %s27, 1
          %p3734 = scmp.lt.s32.totalorder %s3731, 1
          %s3735 = scalar_select %p3734, %s3731, 1
          %s3736 = smul.addr %s3733, 2
          %s3737 = sadd.s32 %s3735, %s3736
          %s3738 = scalar_lea.vmem %s5, %s3737
        $region60: #{vector_quantizer_forward.1} parent=51 // pred_fallthru
          _
        // Predicated region
        $region61: #{vector_quantizer_forward.1} parent=51 // pred_check
          %p3739 = pneg %p206
        $region62: #{vector_quantizer_forward.1} parent=51 // pred_check_branch
          %3741 = sbr.rel (%p3739) target = $region64
        $region63: #{vector_quantizer_forward.1} parent=51 // pred_region
          %p3742 = scmp.lt.s32.totalorder %s27, 1
          %s3743 = scalar_select %p3742, %s27, 1
          %p3744 = scmp.lt.s32.totalorder %s28, 0
          %s3745 = scalar_select %p3744, %s28, 0
          %s3746 = sadd.s32 %s3745, %s3743
          %s3747 = scalar_lea.vmem %s6, %s3746
        $region64: #{vector_quantizer_forward.1} parent=51 // pred_fallthru
          _
      $region52: #{vector_quantizer_forward.1} parent=5 // pred_fallthru
        _
    $region6: #{vector_quantizer_forward.1} parent=1 // loop_footer
      %s20 = sadd.s32 1, %s16
    $region7: #{vector_quantizer_forward.1} parent=1 // loop_footer_branch
      %15 = sbr.rel target = $region3
    $region8: #{vector_quantizer_forward.1} parent=1 // loop_exit
      _
    %3748 = vsyncpa [#allocation3], 1
    %s3749 = scalar_lea.sflag [#allocation3], 1
    %3750 = vsyncpa %s3749, 1

</llo_original>
